<compile_context>
chip_gen: v7x
topology: tpu7x:2x2x1
jax: 0.10.0
libtpu: 0.0.40
codegen_flags: <defaults>
</compile_context>

<pallas_src>
import functools
import math

import jax
import jax.numpy as jnp
from jax.experimental import pallas as pl
from jax.experimental.pallas import tpu as pltpu

VMEM = pl.BlockSpec(memory_space=pltpu.MemorySpace.VMEM)

LANE = 128
BN_EPS = 1e-5

NODE_DIM = 37          # n_atom_features(): 11+11+7+2+5+1
CONV_BASE = 64
CONV_RATIO = 1.25
CONV_N_LAYERS = 5
EMB_DIM = 100
MLP_LAYERS = 2
MLP_RATIO = 0.5
NUM_CLASSES = 4


def net_pattern(n_layers, base_size, ratio, maxv=1024):
    return [int(min(max(math.ceil(base_size * ratio ** i), 0), maxv))
            for i in range(n_layers)]


CONV_DIMS = net_pattern(CONV_N_LAYERS, CONV_BASE, CONV_RATIO) + [EMB_DIM]
# -> [64, 80, 100, 125, 157, 100]
MLP_DIMS = net_pattern(MLP_LAYERS + 1, EMB_DIM, MLP_RATIO)  # [100, 50, 25]


def round_up(n, m):
    return ((n + m - 1) // m) * m


def pad_lanes(d):
    return round_up(d, LANE)


# Whole forward pass as a flat layer sequence: (d_in, d_out)
LAYER_DIMS = (
    [(NODE_DIM, CONV_DIMS[0])]                                          # 0 linatoms
    + [(CONV_DIMS[i], CONV_DIMS[i + 1]) for i in range(CONV_N_LAYERS)]  # 1..5 conv
    + [(EMB_DIM, EMB_DIM)]                                              # 6 graph_emb
    + [(MLP_DIMS[i], MLP_DIMS[i + 1]) for i in range(MLP_LAYERS)]       # 7..8 mlp
    + [(MLP_DIMS[-1], NUM_CLASSES)]                                     # 9 pred
)


def _build_layer_offsets():
    offs, r, c = [], 0, 0
    for d_in, d_out in LAYER_DIMS:
        dinp, doutp = pad_lanes(d_in), pad_lanes(d_out)
        offs.append((r, dinp, doutp, c))
        r += dinp
        c += doutp
    return offs, r, c


LAYER_OFFS, W_SLAB_ROWS, META_COLS = _build_layer_offsets()   # 1408 rows / cols
W_SLAB_COLS = max(o[2] for o in LAYER_OFFS)                   # 256


# ---------------------------------------------------------------------------
# Fused Pallas kernel: whole forward pass, everything VMEM-resident.
#   refs = [a_hat(bf16), x0(bf16), seg(f32), w_slab(bf16), meta(f32), out(f32)]
#   meta rows: [0]=bias, [1]=folded-BN scale (or 1), [2]=folded-BN shift (or 0)
# ---------------------------------------------------------------------------
def fused_forward_kernel(a_ref, x_ref, seg_ref, w_ref, meta_ref, out_ref, *,
                         emb_real_dim):
    def layer(i):
        r0, dinp, doutp, c0 = LAYER_OFFS[i]          # static python ints
        w = w_ref[pl.ds(r0, dinp), pl.ds(0, doutp)]  # bf16 weight view
        b = meta_ref[pl.ds(0, 1), pl.ds(c0, doutp)]  # bias row (f32)
        s = meta_ref[pl.ds(1, 1), pl.ds(c0, doutp)]  # folded-BN scale
        t = meta_ref[pl.ds(2, 1), pl.ds(c0, doutp)]  # folded-BN shift
        return w, b, s, t, dinp, doutp

    def mm(x_bf16, w_bf16):
        # bf16 operands on the MXU, f32 accumulation.
        return jnp.dot(x_bf16, w_bf16, preferred_element_type=jnp.float32)

    li = 0

    # --- linatoms: Linear only (no activation) -----------------------------
    w, b, _, _, _, _ = layer(li); li += 1
    x = (mm(x_ref[...], w) + b).astype(jnp.bfloat16)

    # --- GCNConv stack: A_hat X W + b -> ReLU -> folded eval-mode BN --------
    a = a_ref[...]                       # bf16 (n_pad, n_pad); loaded once
    for _ in range(CONV_N_LAYERS):
        w, b, s, t, dinp, doutp = layer(li); li += 1
        if dinp <= doutp:
            # aggregate-first: the N^2 matmul runs at width dinp (cheaper/equal)
            ax = mm(a, x).astype(jnp.bfloat16)
            h = mm(ax, w)
        else:
            # transform-first: the N^2 matmul runs at width doutp
            xw = mm(x, w).astype(jnp.bfloat16)
            h = mm(a, xw)
        h = jnp.maximum(h + b, 0.0)                  # bias + ReLU (f32)
        x = (h * s + t).astype(jnp.bfloat16)         # eval BN folded, cast once

    # --- graph embedding: Linear + softmax over the real 100 lanes ----------
    w, b, _, _, _, _ = layer(li); li += 1
    z = mm(x, w) + b
    lane = jax.lax.broadcasted_iota(jnp.int32, z.shape, 1)
    z = jnp.where(lane < emb_real_dim, z, -1e30)     # padded lanes masked out
    z = z - jnp.max(z, axis=-1, keepdims=True)
    e = jnp.exp(z)                                   # masked lanes underflow to 0
    p = e * pl.reciprocal(jnp.sum(e, axis=-1, keepdims=True), approx=True)

    # --- global_add_pool (f32): pooled = S @ P ------------------------------
    # NOTE: correctness of the padding scheme relies on seg's padded columns
    # and A_hat's padded rows/cols being exactly zero (pad nodes never leak).
    g = jnp.dot(seg_ref[...], p, preferred_element_type=jnp.float32)

    # --- MLP: (Linear -> ReLU -> BN) x2, dropout = identity in eval ---------
    for _ in range(MLP_LAYERS):
        w, b, s, t, _, _ = layer(li); li += 1
        h = jnp.maximum(mm(g.astype(jnp.bfloat16), w) + b, 0.0)
        g = h * s + t

    # --- prediction head (logits) -------------------------------------------
    w, b, _, _, _, _ = layer(li); li += 1
    out_ref[...] = mm(g.astype(jnp.bfloat16), w) + b


def molan_gcn_forward(a_hat_p, x_p, seg_p, w_slab, meta_slab):
    g_pad = seg_p.shape[0]
    kernel = functools.partial(fused_forward_kernel, emb_real_dim=EMB_DIM)
    return pl.pallas_call(
        kernel,
        out_shape=jax.ShapeDtypeStruct((g_pad, pad_lanes(NUM_CLASSES)),
                                       jnp.float32),
        in_specs=[VMEM] * 5,
        out_specs=VMEM,
        compiler_params=pltpu.CompilerParams(
            vmem_limit_bytes=32 * 1024 * 1024),
    )(a_hat_p, x_p, seg_p, w_slab, meta_slab)


# ---------------------------------------------------------------------------
# Parameter construction, padding / BN-folding / slab packing (plain JAX glue)
# ---------------------------------------------------------------------------
def init_params(key):
    params = {}

    def nxt():
        nonlocal key
        key, sub = jax.random.split(key)
        return sub

    def linear(d_in, d_out):
        s = 1.0 / math.sqrt(d_in)
        w = jax.random.uniform(nxt(), (d_in, d_out), jnp.float32, -s, s)
        b = jax.random.uniform(nxt(), (d_out,), jnp.float32, -s, s)
        return w, b

    def bn(d):
        gamma = 1.0 + 0.1 * jax.random.normal(nxt(), (d,), jnp.float32)
        beta = 0.1 * jax.random.normal(nxt(), (d,), jnp.float32)
        mean = 0.1 * jax.random.normal(nxt(), (d,), jnp.float32)
        var = jax.random.uniform(nxt(), (d,), jnp.float32, 0.5, 1.5)
        return gamma, beta, mean, var

    params["linatoms"] = linear(NODE_DIM, CONV_BASE)
    params["conv"] = []
    params["conv_bn"] = []
    for i in range(CONV_N_LAYERS):
        params["conv"].append(linear(CONV_DIMS[i], CONV_DIMS[i + 1]))
        params["conv_bn"].append(bn(CONV_DIMS[i + 1]))
    params["graph_emb"] = linear(EMB_DIM, EMB_DIM)
    params["mlp"] = []
    params["mlp_bn"] = []
    for i in range(MLP_LAYERS):
        params["mlp"].append(linear(MLP_DIMS[i], MLP_DIMS[i + 1]))
        params["mlp_bn"].append(bn(MLP_DIMS[i + 1]))
    params["pred"] = linear(MLP_DIMS[-1], NUM_CLASSES)
    return params


def fold_bn(bn_params, eps=BN_EPS):
    gamma, beta, mean, var = bn_params
    scale = gamma * jax.lax.rsqrt(var + eps)
    shift = beta - mean * scale
    return scale, shift


def pack_params(params):
    """Pack all layer weights / epilogue params into two VMEM slabs."""
    layers = []
    layers.append((*params["linatoms"], None))
    for i in range(CONV_N_LAYERS):
        w, b = params["conv"][i]
        layers.append((w, b, params["conv_bn"][i]))
    layers.append((*params["graph_emb"], None))
    for i in range(MLP_LAYERS):
        w, b = params["mlp"][i]
        layers.append((w, b, params["mlp_bn"][i]))
    layers.append((*params["pred"], None))

    w_slab = jnp.zeros((W_SLAB_ROWS, W_SLAB_COLS), jnp.float32)
    meta = jnp.zeros((8, META_COLS), jnp.float32)
    for (r0, _, _, c0), (w, b, bnp) in zip(LAYER_OFFS, layers):
        d_in, d_out = w.shape
        w_slab = w_slab.at[r0:r0 + d_in, 0:d_out].set(w)
        meta = meta.at[0, c0:c0 + d_out].set(b)
        if bnp is not None:
            scale, shift = fold_bn(bnp)
        else:
            scale = jnp.ones((d_out,), jnp.float32)
            shift = jnp.zeros((d_out,), jnp.float32)
        meta = meta.at[1, c0:c0 + d_out].set(scale)
        meta = meta.at[2, c0:c0 + d_out].set(shift)
    return w_slab.astype(jnp.bfloat16), meta


def normalized_adjacency(edge_index, n_nodes):
    """A_hat = D^{-1/2} (A + I) D^{-1/2}  (GCNConv default normalization)."""
    src, dst = edge_index
    a = jnp.zeros((n_nodes, n_nodes), jnp.float32)
    a = a.at[src, dst].set(1.0)
    a = a + jnp.eye(n_nodes, dtype=jnp.float32)        # add_self_loops=True
    deg = jnp.sum(a, axis=1)
    dinv = jax.lax.rsqrt(deg)
    return dinv[:, None] * a * dinv[None, :]


def segment_matrix(batch, num_graphs):
    return (batch[None, :] == jnp.arange(num_graphs)[:, None]).astype(
        jnp.float32)


def pad2d(a, rows, cols):
    out = jnp.zeros((rows, cols), a.dtype)
    return out.at[:a.shape[0], :a.shape[1]].set(a)


# ---------------------------------------------------------------------------
# Pure-JAX f32 reference (sanity check against the fused kernel)
# ---------------------------------------------------------------------------
def reference_forward(params, x, a_hat, seg):
    w, b = params["linatoms"]
    x = x @ w + b
    for i in range(CONV_N_LAYERS):
        w, b = params["conv"][i]
        h = jnp.maximum(a_hat @ (x @ w) + b, 0.0)
        gamma, beta, mean, var = params["conv_bn"][i]
        x = (h - mean) * jax.lax.rsqrt(var + BN_EPS) * gamma + beta
    w, b = params["graph_emb"]
    x = jax.nn.softmax(x @ w + b, axis=-1)
    x = seg @ x
    for i in range(MLP_LAYERS):
        w, b = params["mlp"][i]
        h = jnp.maximum(x @ w + b, 0.0)
        gamma, beta, mean, var = params["mlp_bn"][i]
        x = (h - mean) * jax.lax.rsqrt(var + BN_EPS) * gamma + beta
    w, b = params["pred"]
    return x @ w + b


# ---------------------------------------------------------------------------
if __name__ == "__main__":
    key = jax.random.PRNGKey(0)
    k_param, k_x = jax.random.split(key)

    params = init_params(k_param)

    # Small synthetic batched graph: 2 graphs, 12 nodes total.
    n_nodes = 12
    batch = jnp.array([0] * 7 + [1] * 5, jnp.int32)
    num_graphs = 2
    # Undirected edges (both directions listed, as in get_bond_pair).
    undirected = [(0, 1), (1, 2), (2, 3), (3, 4), (4, 5), (5, 6), (6, 0),
                  (1, 4),
                  (7, 8), (8, 9), (9, 10), (10, 11), (11, 7)]
    src = [u for u, v in undirected] + [v for u, v in undirected]
    dst = [v for u, v in undirected] + [u for u, v in undirected]
    edge_index = (jnp.array(src, jnp.int32), jnp.array(dst, jnp.int32))

    x = jax.random.normal(k_x, (n_nodes, NODE_DIM), jnp.float32)

    a_hat = normalized_adjacency(edge_index, n_nodes)
    seg = segment_matrix(batch, num_graphs)

    # Node dim padded to a multiple of 128 (bf16 sublane-16 AND lane-128 clean
    # since the same logical N is both X's row dim and A_hat's K/lane dim).
    n_pad = round_up(n_nodes, 128)
    g_pad = round_up(num_graphs, 16)
    a_hat_p = pad2d(a_hat, n_pad, n_pad).astype(jnp.bfloat16)
    seg_p = pad2d(seg, g_pad, n_pad)                       # f32 pool operand
    x_p = pad2d(x, n_pad, pad_lanes(NODE_DIM)).astype(jnp.bfloat16)

    # Guard: the padding scheme is only correct if A_hat / seg padded
    # rows/cols are exactly zero (pad-node garbage never reaches real rows or
    # the pooled sums).
    assert float(jnp.sum(jnp.abs(a_hat_p[n_nodes:, :].astype(jnp.float32)))) == 0.0
    assert float(jnp.sum(jnp.abs(a_hat_p[:, n_nodes:].astype(jnp.float32)))) == 0.0
    assert float(jnp.sum(jnp.abs(seg_p[:, n_nodes:]))) == 0.0
    assert float(jnp.sum(jnp.abs(seg_p[num_graphs:, :]))) == 0.0

    w_slab, meta_slab = pack_params(params)

    fwd = jax.jit(molan_gcn_forward)
    out_padded = fwd(a_hat_p, x_p, seg_p, w_slab, meta_slab)
    jax.block_until_ready(out_padded)

    logits = out_padded[:num_graphs, :NUM_CLASSES]
    ref = reference_forward(params, x, a_hat, seg)

    assert logits.shape == (num_graphs, NUM_CLASSES)
    assert bool(jnp.all(jnp.isfinite(logits)))
    # bf16 matmul operands / activations -> loose tolerance vs. f32 reference.
    assert float(jnp.max(jnp.abs(logits - ref))) < 0.5
    print("KERNEL_OK")
</pallas_src>

<mosaic_0001>
module attributes {stable_mosaic.version = 11 : i64} {
  func.func @fused_forward_kernel(%arg0: memref<128x128xbf16, #tpu.memory_space<vmem>>, %arg1: memref<128x128xbf16, #tpu.memory_space<vmem>>, %arg2: memref<16x128xf32, #tpu.memory_space<vmem>>, %arg3: memref<1408x256xbf16, #tpu.memory_space<vmem>>, %arg4: memref<8x1408xf32, #tpu.memory_space<vmem>>, %arg5: memref<16x128xf32, #tpu.memory_space<vmem>>) attributes {dimension_semantics = [], scalar_prefetch = 0 : i64, scratch_operands = 0 : i64, tpu.core_type = #tpu.core_type<tc>} {
    %c0 = arith.constant 0 : index
    %c0_0 = arith.constant 0 : index
    %0 = vector.load %arg3[%c0, %c0_0] : memref<1408x256xbf16, #tpu.memory_space<vmem>>, vector<128x128xbf16>
    %c0_1 = arith.constant 0 : index
    %c0_2 = arith.constant 0 : index
    %1 = vector.load %arg4[%c0_1, %c0_2] : memref<8x1408xf32, #tpu.memory_space<vmem>>, vector<1x128xf32>
    %c0_3 = arith.constant 0 : index
    %c0_4 = arith.constant 0 : index
    %2 = vector.load %arg1[%c0_3, %c0_4] : memref<128x128xbf16, #tpu.memory_space<vmem>>, vector<128x128xbf16>
    %cst = arith.constant dense<0.000000e+00> : vector<128x128xf32>
    %3 = tpu.matmul %2, %0, %cst {dimension_numbers = #tpu.dot_dimension_numbers<[1], [0], [0], [1], [0, 0, 1, 1], [], []>} : vector<128x128xbf16>, vector<128x128xbf16>, vector<128x128xf32> -> vector<128x128xf32>
    %4 = vector.broadcast %1 : vector<1x128xf32> to vector<128x128xf32>
    %5 = arith.addf %3, %4 : vector<128x128xf32>
    %6 = arith.truncf %5 : vector<128x128xf32> to vector<128x128xbf16>
    %c0_5 = arith.constant 0 : index
    %c0_6 = arith.constant 0 : index
    %7 = vector.load %arg0[%c0_5, %c0_6] : memref<128x128xbf16, #tpu.memory_space<vmem>>, vector<128x128xbf16>
    %c128 = arith.constant 128 : index
    %c0_7 = arith.constant 0 : index
    %8 = vector.load %arg3[%c128, %c0_7] : memref<1408x256xbf16, #tpu.memory_space<vmem>>, vector<128x128xbf16>
    %c0_8 = arith.constant 0 : index
    %c128_9 = arith.constant 128 : index
    %9 = vector.load %arg4[%c0_8, %c128_9] : memref<8x1408xf32, #tpu.memory_space<vmem>>, vector<1x128xf32>
    %c1 = arith.constant 1 : index
    %c128_10 = arith.constant 128 : index
    %10 = vector.load %arg4[%c1, %c128_10] : memref<8x1408xf32, #tpu.memory_space<vmem>>, vector<1x128xf32>
    %c2 = arith.constant 2 : index
    %c128_11 = arith.constant 128 : index
    %11 = vector.load %arg4[%c2, %c128_11] : memref<8x1408xf32, #tpu.memory_space<vmem>>, vector<1x128xf32>
    %cst_12 = arith.constant dense<0.000000e+00> : vector<128x128xf32>
    %12 = tpu.matmul %7, %6, %cst_12 {dimension_numbers = #tpu.dot_dimension_numbers<[1], [0], [0], [1], [0, 0, 1, 1], [], []>} : vector<128x128xbf16>, vector<128x128xbf16>, vector<128x128xf32> -> vector<128x128xf32>
    %13 = arith.truncf %12 : vector<128x128xf32> to vector<128x128xbf16>
    %cst_13 = arith.constant dense<0.000000e+00> : vector<128x128xf32>
    %14 = tpu.matmul %13, %8, %cst_13 {dimension_numbers = #tpu.dot_dimension_numbers<[1], [0], [0], [1], [0, 0, 1, 1], [], []>} : vector<128x128xbf16>, vector<128x128xbf16>, vector<128x128xf32> -> vector<128x128xf32>
    %15 = vector.broadcast %9 : vector<1x128xf32> to vector<128x128xf32>
    %16 = arith.addf %14, %15 : vector<128x128xf32>
    %cst_14 = arith.constant 0.000000e+00 : f32
    %17 = vector.broadcast %cst_14 : f32 to vector<128x128xf32>
    %18 = arith.maximumf %16, %17 : vector<128x128xf32>
    %19 = vector.broadcast %10 : vector<1x128xf32> to vector<128x128xf32>
    %20 = arith.mulf %18, %19 : vector<128x128xf32>
    %21 = vector.broadcast %11 : vector<1x128xf32> to vector<128x128xf32>
    %22 = arith.addf %20, %21 : vector<128x128xf32>
    %23 = arith.truncf %22 : vector<128x128xf32> to vector<128x128xbf16>
    %c256 = arith.constant 256 : index
    %c0_15 = arith.constant 0 : index
    %24 = vector.load %arg3[%c256, %c0_15] : memref<1408x256xbf16, #tpu.memory_space<vmem>>, vector<128x128xbf16>
    %c0_16 = arith.constant 0 : index
    %c256_17 = arith.constant 256 : index
    %25 = vector.load %arg4[%c0_16, %c256_17] : memref<8x1408xf32, #tpu.memory_space<vmem>>, vector<1x128xf32>
    %c1_18 = arith.constant 1 : index
    %c256_19 = arith.constant 256 : index
    %26 = vector.load %arg4[%c1_18, %c256_19] : memref<8x1408xf32, #tpu.memory_space<vmem>>, vector<1x128xf32>
    %c2_20 = arith.constant 2 : index
    %c256_21 = arith.constant 256 : index
    %27 = vector.load %arg4[%c2_20, %c256_21] : memref<8x1408xf32, #tpu.memory_space<vmem>>, vector<1x128xf32>
    %cst_22 = arith.constant dense<0.000000e+00> : vector<128x128xf32>
    %28 = tpu.matmul %7, %23, %cst_22 {dimension_numbers = #tpu.dot_dimension_numbers<[1], [0], [0], [1], [0, 0, 1, 1], [], []>} : vector<128x128xbf16>, vector<128x128xbf16>, vector<128x128xf32> -> vector<128x128xf32>
    %29 = arith.truncf %28 : vector<128x128xf32> to vector<128x128xbf16>
    %cst_23 = arith.constant dense<0.000000e+00> : vector<128x128xf32>
    %30 = tpu.matmul %29, %24, %cst_23 {dimension_numbers = #tpu.dot_dimension_numbers<[1], [0], [0], [1], [0, 0, 1, 1], [], []>} : vector<128x128xbf16>, vector<128x128xbf16>, vector<128x128xf32> -> vector<128x128xf32>
    %31 = vector.broadcast %25 : vector<1x128xf32> to vector<128x128xf32>
    %32 = arith.addf %30, %31 : vector<128x128xf32>
    %cst_24 = arith.constant 0.000000e+00 : f32
    %33 = vector.broadcast %cst_24 : f32 to vector<128x128xf32>
    %34 = arith.maximumf %32, %33 : vector<128x128xf32>
    %35 = vector.broadcast %26 : vector<1x128xf32> to vector<128x128xf32>
    %36 = arith.mulf %34, %35 : vector<128x128xf32>
    %37 = vector.broadcast %27 : vector<1x128xf32> to vector<128x128xf32>
    %38 = arith.addf %36, %37 : vector<128x128xf32>
    %39 = arith.truncf %38 : vector<128x128xf32> to vector<128x128xbf16>
    %c384 = arith.constant 384 : index
    %c0_25 = arith.constant 0 : index
    %40 = vector.load %arg3[%c384, %c0_25] : memref<1408x256xbf16, #tpu.memory_space<vmem>>, vector<128x128xbf16>
    %c0_26 = arith.constant 0 : index
    %c384_27 = arith.constant 384 : index
    %41 = vector.load %arg4[%c0_26, %c384_27] : memref<8x1408xf32, #tpu.memory_space<vmem>>, vector<1x128xf32>
    %c1_28 = arith.constant 1 : index
    %c384_29 = arith.constant 384 : index
    %42 = vector.load %arg4[%c1_28, %c384_29] : memref<8x1408xf32, #tpu.memory_space<vmem>>, vector<1x128xf32>
    %c2_30 = arith.constant 2 : index
    %c384_31 = arith.constant 384 : index
    %43 = vector.load %arg4[%c2_30, %c384_31] : memref<8x1408xf32, #tpu.memory_space<vmem>>, vector<1x128xf32>
    %cst_32 = arith.constant dense<0.000000e+00> : vector<128x128xf32>
    %44 = tpu.matmul %7, %39, %cst_32 {dimension_numbers = #tpu.dot_dimension_numbers<[1], [0], [0], [1], [0, 0, 1, 1], [], []>} : vector<128x128xbf16>, vector<128x128xbf16>, vector<128x128xf32> -> vector<128x128xf32>
    %45 = arith.truncf %44 : vector<128x128xf32> to vector<128x128xbf16>
    %cst_33 = arith.constant dense<0.000000e+00> : vector<128x128xf32>
    %46 = tpu.matmul %45, %40, %cst_33 {dimension_numbers = #tpu.dot_dimension_numbers<[1], [0], [0], [1], [0, 0, 1, 1], [], []>} : vector<128x128xbf16>, vector<128x128xbf16>, vector<128x128xf32> -> vector<128x128xf32>
    %47 = vector.broadcast %41 : vector<1x128xf32> to vector<128x128xf32>
    %48 = arith.addf %46, %47 : vector<128x128xf32>
    %cst_34 = arith.constant 0.000000e+00 : f32
    %49 = vector.broadcast %cst_34 : f32 to vector<128x128xf32>
    %50 = arith.maximumf %48, %49 : vector<128x128xf32>
    %51 = vector.broadcast %42 : vector<1x128xf32> to vector<128x128xf32>
    %52 = arith.mulf %50, %51 : vector<128x128xf32>
    %53 = vector.broadcast %43 : vector<1x128xf32> to vector<128x128xf32>
    %54 = arith.addf %52, %53 : vector<128x128xf32>
    %55 = arith.truncf %54 : vector<128x128xf32> to vector<128x128xbf16>
    %c512 = arith.constant 512 : index
    %c0_35 = arith.constant 0 : index
    %56 = vector.load %arg3[%c512, %c0_35] : memref<1408x256xbf16, #tpu.memory_space<vmem>>, vector<128x256xbf16>
    %c0_36 = arith.constant 0 : index
    %c512_37 = arith.constant 512 : index
    %57 = vector.load %arg4[%c0_36, %c512_37] : memref<8x1408xf32, #tpu.memory_space<vmem>>, vector<1x256xf32>
    %c1_38 = arith.constant 1 : index
    %c512_39 = arith.constant 512 : index
    %58 = vector.load %arg4[%c1_38, %c512_39] : memref<8x1408xf32, #tpu.memory_space<vmem>>, vector<1x256xf32>
    %c2_40 = arith.constant 2 : index
    %c512_41 = arith.constant 512 : index
    %59 = vector.load %arg4[%c2_40, %c512_41] : memref<8x1408xf32, #tpu.memory_space<vmem>>, vector<1x256xf32>
    %cst_42 = arith.constant dense<0.000000e+00> : vector<128x128xf32>
    %60 = tpu.matmul %7, %55, %cst_42 {dimension_numbers = #tpu.dot_dimension_numbers<[1], [0], [0], [1], [0, 0, 1, 1], [], []>} : vector<128x128xbf16>, vector<128x128xbf16>, vector<128x128xf32> -> vector<128x128xf32>
    %61 = arith.truncf %60 : vector<128x128xf32> to vector<128x128xbf16>
    %cst_43 = arith.constant dense<0.000000e+00> : vector<128x256xf32>
    %62 = tpu.matmul %61, %56, %cst_43 {dimension_numbers = #tpu.dot_dimension_numbers<[1], [0], [0], [1], [0, 0, 1, 1], [], []>} : vector<128x128xbf16>, vector<128x256xbf16>, vector<128x256xf32> -> vector<128x256xf32>
    %63 = vector.broadcast %57 : vector<1x256xf32> to vector<128x256xf32>
    %64 = arith.addf %62, %63 : vector<128x256xf32>
    %cst_44 = arith.constant 0.000000e+00 : f32
    %65 = vector.broadcast %cst_44 : f32 to vector<128x256xf32>
    %66 = arith.maximumf %64, %65 : vector<128x256xf32>
    %67 = vector.broadcast %58 : vector<1x256xf32> to vector<128x256xf32>
    %68 = arith.mulf %66, %67 : vector<128x256xf32>
    %69 = vector.broadcast %59 : vector<1x256xf32> to vector<128x256xf32>
    %70 = arith.addf %68, %69 : vector<128x256xf32>
    %71 = arith.truncf %70 : vector<128x256xf32> to vector<128x256xbf16>
    %c640 = arith.constant 640 : index
    %c0_45 = arith.constant 0 : index
    %72 = vector.load %arg3[%c640, %c0_45] : memref<1408x256xbf16, #tpu.memory_space<vmem>>, vector<256x128xbf16>
    %c0_46 = arith.constant 0 : index
    %c768 = arith.constant 768 : index
    %73 = vector.load %arg4[%c0_46, %c768] : memref<8x1408xf32, #tpu.memory_space<vmem>>, vector<1x128xf32>
    %c1_47 = arith.constant 1 : index
    %c768_48 = arith.constant 768 : index
    %74 = vector.load %arg4[%c1_47, %c768_48] : memref<8x1408xf32, #tpu.memory_space<vmem>>, vector<1x128xf32>
    %c2_49 = arith.constant 2 : index
    %c768_50 = arith.constant 768 : index
    %75 = vector.load %arg4[%c2_49, %c768_50] : memref<8x1408xf32, #tpu.memory_space<vmem>>, vector<1x128xf32>
    %cst_51 = arith.constant dense<0.000000e+00> : vector<128x128xf32>
    %76 = tpu.matmul %71, %72, %cst_51 {dimension_numbers = #tpu.dot_dimension_numbers<[1], [0], [0], [1], [0, 0, 1, 1], [], []>} : vector<128x256xbf16>, vector<256x128xbf16>, vector<128x128xf32> -> vector<128x128xf32>
    %77 = arith.truncf %76 : vector<128x128xf32> to vector<128x128xbf16>
    %cst_52 = arith.constant dense<0.000000e+00> : vector<128x128xf32>
    %78 = tpu.matmul %7, %77, %cst_52 {dimension_numbers = #tpu.dot_dimension_numbers<[1], [0], [0], [1], [0, 0, 1, 1], [], []>} : vector<128x128xbf16>, vector<128x128xbf16>, vector<128x128xf32> -> vector<128x128xf32>
    %79 = vector.broadcast %73 : vector<1x128xf32> to vector<128x128xf32>
    %80 = arith.addf %78, %79 : vector<128x128xf32>
    %cst_53 = arith.constant 0.000000e+00 : f32
    %81 = vector.broadcast %cst_53 : f32 to vector<128x128xf32>
    %82 = arith.maximumf %80, %81 : vector<128x128xf32>
    %83 = vector.broadcast %74 : vector<1x128xf32> to vector<128x128xf32>
    %84 = arith.mulf %82, %83 : vector<128x128xf32>
    %85 = vector.broadcast %75 : vector<1x128xf32> to vector<128x128xf32>
    %86 = arith.addf %84, %85 : vector<128x128xf32>
    %87 = arith.truncf %86 : vector<128x128xf32> to vector<128x128xbf16>
    %c896 = arith.constant 896 : index
    %c0_54 = arith.constant 0 : index
    %88 = vector.load %arg3[%c896, %c0_54] : memref<1408x256xbf16, #tpu.memory_space<vmem>>, vector<128x128xbf16>
    %c0_55 = arith.constant 0 : index
    %c896_56 = arith.constant 896 : index
    %89 = vector.load %arg4[%c0_55, %c896_56] : memref<8x1408xf32, #tpu.memory_space<vmem>>, vector<1x128xf32>
    %cst_57 = arith.constant dense<0.000000e+00> : vector<128x128xf32>
    %90 = tpu.matmul %87, %88, %cst_57 {dimension_numbers = #tpu.dot_dimension_numbers<[1], [0], [0], [1], [0, 0, 1, 1], [], []>} : vector<128x128xbf16>, vector<128x128xbf16>, vector<128x128xf32> -> vector<128x128xf32>
    %91 = vector.broadcast %89 : vector<1x128xf32> to vector<128x128xf32>
    %92 = arith.addf %90, %91 : vector<128x128xf32>
    %93 = tpu.iota {dimensions = array<i32: 1>} : vector<128x128xi32>
    %c100_i32 = arith.constant 100 : i32
    %94 = vector.broadcast %c100_i32 : i32 to vector<128x128xi32>
    %95 = arith.cmpi slt, %93, %94 : vector<128x128xi32>
    %cst_58 = arith.constant -1.000000e+30 : f32
    %96 = vector.broadcast %cst_58 : f32 to vector<128x128xf32>
    %97 = arith.select %95, %92, %96 : vector<128x128xi1>, vector<128x128xf32>
    %cst_59 = arith.constant dense<0xFF800000> : vector<128xf32>
    %98 = vector.multi_reduction <maximumf>, %97, %cst_59 [1] : vector<128x128xf32> to vector<128xf32>
    %99 = vector.shape_cast %98 : vector<128xf32> to vector<128x1xf32>
    %100 = vector.broadcast %99 : vector<128x1xf32> to vector<128x128xf32>
    %101 = arith.subf %97, %100 : vector<128x128xf32>
    %102 = math.exp %101 : vector<128x128xf32>
    %cst_60 = arith.constant dense<0.000000e+00> : vector<128xf32>
    %103 = vector.multi_reduction <add>, %102, %cst_60 [1] : vector<128x128xf32> to vector<128xf32>
    %104 = vector.shape_cast %103 : vector<128xf32> to vector<128x1xf32>
    %105 = tpu.reciprocal %104 {approx = true} : vector<128x1xf32> -> vector<128x1xf32>
    %106 = vector.broadcast %105 : vector<128x1xf32> to vector<128x128xf32>
    %107 = arith.mulf %102, %106 : vector<128x128xf32>
    %c0_61 = arith.constant 0 : index
    %c0_62 = arith.constant 0 : index
    %108 = vector.load %arg2[%c0_61, %c0_62] : memref<16x128xf32, #tpu.memory_space<vmem>>, vector<16x128xf32>
    %cst_63 = arith.constant dense<0.000000e+00> : vector<16x128xf32>
    %109 = tpu.matmul %108, %107, %cst_63 {dimension_numbers = #tpu.dot_dimension_numbers<[1], [0], [0], [1], [0, 0, 1, 1], [], []>} : vector<16x128xf32>, vector<128x128xf32>, vector<16x128xf32> -> vector<16x128xf32>
    %c1024 = arith.constant 1024 : index
    %c0_64 = arith.constant 0 : index
    %110 = vector.load %arg3[%c1024, %c0_64] : memref<1408x256xbf16, #tpu.memory_space<vmem>>, vector<128x128xbf16>
    %c0_65 = arith.constant 0 : index
    %c1024_66 = arith.constant 1024 : index
    %111 = vector.load %arg4[%c0_65, %c1024_66] : memref<8x1408xf32, #tpu.memory_space<vmem>>, vector<1x128xf32>
    %c1_67 = arith.constant 1 : index
    %c1024_68 = arith.constant 1024 : index
    %112 = vector.load %arg4[%c1_67, %c1024_68] : memref<8x1408xf32, #tpu.memory_space<vmem>>, vector<1x128xf32>
    %c2_69 = arith.constant 2 : index
    %c1024_70 = arith.constant 1024 : index
    %113 = vector.load %arg4[%c2_69, %c1024_70] : memref<8x1408xf32, #tpu.memory_space<vmem>>, vector<1x128xf32>
    %114 = arith.truncf %109 : vector<16x128xf32> to vector<16x128xbf16>
    %cst_71 = arith.constant dense<0.000000e+00> : vector<16x128xf32>
    %115 = tpu.matmul %114, %110, %cst_71 {dimension_numbers = #tpu.dot_dimension_numbers<[1], [0], [0], [1], [0, 0, 1, 1], [], []>} : vector<16x128xbf16>, vector<128x128xbf16>, vector<16x128xf32> -> vector<16x128xf32>
    %116 = vector.broadcast %111 : vector<1x128xf32> to vector<16x128xf32>
    %117 = arith.addf %115, %116 : vector<16x128xf32>
    %cst_72 = arith.constant 0.000000e+00 : f32
    %118 = vector.broadcast %cst_72 : f32 to vector<16x128xf32>
    %119 = arith.maximumf %117, %118 : vector<16x128xf32>
    %120 = vector.broadcast %112 : vector<1x128xf32> to vector<16x128xf32>
    %121 = arith.mulf %119, %120 : vector<16x128xf32>
    %122 = vector.broadcast %113 : vector<1x128xf32> to vector<16x128xf32>
    %123 = arith.addf %121, %122 : vector<16x128xf32>
    %c1152 = arith.constant 1152 : index
    %c0_73 = arith.constant 0 : index
    %124 = vector.load %arg3[%c1152, %c0_73] : memref<1408x256xbf16, #tpu.memory_space<vmem>>, vector<128x128xbf16>
    %c0_74 = arith.constant 0 : index
    %c1152_75 = arith.constant 1152 : index
    %125 = vector.load %arg4[%c0_74, %c1152_75] : memref<8x1408xf32, #tpu.memory_space<vmem>>, vector<1x128xf32>
    %c1_76 = arith.constant 1 : index
    %c1152_77 = arith.constant 1152 : index
    %126 = vector.load %arg4[%c1_76, %c1152_77] : memref<8x1408xf32, #tpu.memory_space<vmem>>, vector<1x128xf32>
    %c2_78 = arith.constant 2 : index
    %c1152_79 = arith.constant 1152 : index
    %127 = vector.load %arg4[%c2_78, %c1152_79] : memref<8x1408xf32, #tpu.memory_space<vmem>>, vector<1x128xf32>
    %128 = arith.truncf %123 : vector<16x128xf32> to vector<16x128xbf16>
    %cst_80 = arith.constant dense<0.000000e+00> : vector<16x128xf32>
    %129 = tpu.matmul %128, %124, %cst_80 {dimension_numbers = #tpu.dot_dimension_numbers<[1], [0], [0], [1], [0, 0, 1, 1], [], []>} : vector<16x128xbf16>, vector<128x128xbf16>, vector<16x128xf32> -> vector<16x128xf32>
    %130 = vector.broadcast %125 : vector<1x128xf32> to vector<16x128xf32>
    %131 = arith.addf %129, %130 : vector<16x128xf32>
    %cst_81 = arith.constant 0.000000e+00 : f32
    %132 = vector.broadcast %cst_81 : f32 to vector<16x128xf32>
    %133 = arith.maximumf %131, %132 : vector<16x128xf32>
    %134 = vector.broadcast %126 : vector<1x128xf32> to vector<16x128xf32>
    %135 = arith.mulf %133, %134 : vector<16x128xf32>
    %136 = vector.broadcast %127 : vector<1x128xf32> to vector<16x128xf32>
    %137 = arith.addf %135, %136 : vector<16x128xf32>
    %c1280 = arith.constant 1280 : index
    %c0_82 = arith.constant 0 : index
    %138 = vector.load %arg3[%c1280, %c0_82] : memref<1408x256xbf16, #tpu.memory_space<vmem>>, vector<128x128xbf16>
    %c0_83 = arith.constant 0 : index
    %c1280_84 = arith.constant 1280 : index
    %139 = vector.load %arg4[%c0_83, %c1280_84] : memref<8x1408xf32, #tpu.memory_space<vmem>>, vector<1x128xf32>
    %140 = arith.truncf %137 : vector<16x128xf32> to vector<16x128xbf16>
    %cst_85 = arith.constant dense<0.000000e+00> : vector<16x128xf32>
    %141 = tpu.matmul %140, %138, %cst_85 {dimension_numbers = #tpu.dot_dimension_numbers<[1], [0], [0], [1], [0, 0, 1, 1], [], []>} : vector<16x128xbf16>, vector<128x128xbf16>, vector<16x128xf32> -> vector<16x128xf32>
    %142 = vector.broadcast %139 : vector<1x128xf32> to vector<16x128xf32>
    %143 = arith.addf %141, %142 : vector<16x128xf32>
    %c0_86 = arith.constant 0 : index
    %c0_87 = arith.constant 0 : index
    %144 = vector.load %arg5[%c0_86, %c0_87] : memref<16x128xf32, #tpu.memory_space<vmem>>, vector<16x128xf32>
    tpu.vector_store %arg5[%c0_86, %c0_87], %143 {strides = array<i32>} : memref<16x128xf32, #tpu.memory_space<vmem>>, vector<16x128xf32>,
    return
  }
}

</mosaic_0001>

<llo_original>
// kernel: molan_gcn_forward.1
$region0: #{molan_gcn_forward.1}
  #allocation0 [shape = 'u32[]', space=smem, size = 0x4, offset = 0x4, fixed_abs, tag = 'smem constant byte address 0x4 - core index']
  #allocation1 [shape = 'u32[144,128]{1,0:T(1,128)}', space=vmem, size = 0x12000, scoped, tag = 'internal scratch']
  %s0 = inlined_call_operand.hbm [shape: bf16[128,128], index: 0, kind: input, shape index: {}]
  %s1 = inlined_call_operand.hbm [shape: bf16[128,128], index: 1, kind: input, shape index: {}]
  %s2 = inlined_call_operand.hbm [shape: f32[16,128], index: 2, kind: input, shape index: {}]
  %s3 = inlined_call_operand.hbm [shape: bf16[1408,256], index: 3, kind: input, shape index: {}]
  %s4 = inlined_call_operand.hbm [shape: f32[8,1408], index: 4, kind: input, shape index: {}]
  %s5 = inlined_call_operand.hbm [shape: f32[16,128], index: 5, kind: output, shape index: {}]
  %s6 = sld [smem:[#allocation0]]
  $region50: #{molan_gcn_forward.1} parent=0
    _
  %s8 = ssub.s32 1, %s6
  %s9 = scalar_select 0, %s8, %s6
  $region1: #{molan_gcn_forward.1} parent=0
    #allocation2 [shape = 'u8[32768]{0}', space=vmem, size = 0x8000, scoped, tag = 'input window, operand 0, single buffered']
    #allocation3 [shape = 's32[1]{0}', space=sflag, size = 0x4, scoped, tag = 'scoped memory for molan_gcn_forward.1']
    #allocation4 [shape = 's32[1]{0}', space=sflag, size = 0x4, scoped, tag = 'scoped memory for molan_gcn_forward.1']
    #allocation5 [shape = 'u8[32768]{0}', space=vmem, size = 0x8000, scoped, tag = 'input window, operand 1, single buffered']
    #allocation6 [shape = 's32[1]{0}', space=sflag, size = 0x4, scoped, tag = 'scoped memory for molan_gcn_forward.1']
    #allocation7 [shape = 'u8[8192]{0}', space=vmem, size = 0x2000, scoped, tag = 'input window, operand 2, single buffered']
    #allocation8 [shape = 'u8[720896]{0}', space=vmem, size = 0xb0000, scoped, tag = 'input window, operand 3, single buffered']
    #allocation9 [shape = 's32[1]{0}', space=sflag, size = 0x4, scoped, tag = 'scoped memory for molan_gcn_forward.1']
    #allocation10 [shape = 'u8[45056]{0}', space=vmem, size = 0xb000, scoped, tag = 'input window, operand 4, single buffered']
    #allocation11 [shape = 'u8[8192]{0}', space=vmem, size = 0x2000, scoped, tag = 'output window, operand 0, single buffered']
    %10 = vsyncpa [#allocation3], 0
    %11 = vsyncpa [#allocation6], 0
    %12 = vsyncpa [#allocation9], 0
    %13 = vsyncpa [#allocation4], 0
    // Predicated region
    $region2: #{molan_gcn_forward.1} parent=1 // pred_check
      _
    $region3: #{molan_gcn_forward.1} parent=1 // pred_check_branch
      %15 = sbr.rel (0) target = $region5
    $region4: #{molan_gcn_forward.1} parent=1 // pred_region
      %s17 = ssub.s32 1024, 1024
      %18 = vsyncadd [#allocation3], %s17
      %s19 = sshll.u32 [#allocation2], 4
      %s20 = int_to_ptr.vmem [resolvable:$true] %s19
      %25 = dma.hbm_to_vmem [thread:$0]  %s0, 1024, %s20, [#allocation3], 64, 64, 4
    $region5: #{molan_gcn_forward.1} parent=1 // pred_fallthru
      _
    // Predicated region
    $region6: #{molan_gcn_forward.1} parent=1 // pred_check
      _
    $region7: #{molan_gcn_forward.1} parent=1 // pred_check_branch
      %27 = sbr.rel (0) target = $region9
    $region8: #{molan_gcn_forward.1} parent=1 // pred_region
      %s29 = ssub.s32 1024, 1024
      %30 = vsyncadd [#allocation6], %s29
      %s31 = sshll.u32 [#allocation5], 4
      %s32 = int_to_ptr.vmem [resolvable:$true] %s31
      %37 = dma.hbm_to_vmem [thread:$0]  %s1, 1024, %s32, [#allocation6], 64, 64, 4
    $region9: #{molan_gcn_forward.1} parent=1 // pred_fallthru
      _
    // Predicated region
    $region10: #{molan_gcn_forward.1} parent=1 // pred_check
      _
    $region11: #{molan_gcn_forward.1} parent=1 // pred_check_branch
      %39 = sbr.rel (0) target = $region13
    $region12: #{molan_gcn_forward.1} parent=1 // pred_region
      %s41 = ssub.s32 256, 256
      %42 = vsyncadd [#allocation6], %s41
      %s43 = sshll.u32 [#allocation7], 4
      %s44 = int_to_ptr.vmem [resolvable:$true] %s43
      %49 = dma.hbm_to_vmem [thread:$0]  %s2, 256, %s44, [#allocation6], 128, 128, 8
    $region13: #{molan_gcn_forward.1} parent=1 // pred_fallthru
      _
    // Predicated region
    $region14: #{molan_gcn_forward.1} parent=1 // pred_check
      _
    $region15: #{molan_gcn_forward.1} parent=1 // pred_check_branch
      %51 = sbr.rel (0) target = $region17
    $region16: #{molan_gcn_forward.1} parent=1 // pred_region
      %s53 = ssub.s32 22528, 22528
      %54 = vsyncadd [#allocation9], %s53
      %s55 = sshll.u32 [#allocation8], 4
      %s56 = int_to_ptr.vmem [resolvable:$true] %s55
      %61 = dma.hbm_to_vmem [thread:$0]  %s3, 22528, %s56, [#allocation9], 128, 128, 8
    $region17: #{molan_gcn_forward.1} parent=1 // pred_fallthru
      _
    // Predicated region
    $region18: #{molan_gcn_forward.1} parent=1 // pred_check
      _
    $region19: #{molan_gcn_forward.1} parent=1 // pred_check_branch
      %63 = sbr.rel (0) target = $region21
    $region20: #{molan_gcn_forward.1} parent=1 // pred_region
      %s65 = ssub.s32 1408, 1408
      %66 = vsyncadd [#allocation9], %s65
      %s68 = sshll.u32 [#allocation10], 4
      %s69 = int_to_ptr.vmem [resolvable:$true] %s68
      %71 = dma.hbm_to_vmem [thread:$0]  %s4, 1408, %s69, [#allocation9]
    $region21: #{molan_gcn_forward.1} parent=1 // pred_fallthru
      _
    // Predicated region
    $region22: #{molan_gcn_forward.1} parent=1 // pred_check
      _
    $region23: #{molan_gcn_forward.1} parent=1 // pred_check_branch
      %73 = sbr.rel (0) target = $region25
    $region24: #{molan_gcn_forward.1} parent=1 // pred_region
      %74 = dma.done [#allocation3], 1024
    $region25: #{molan_gcn_forward.1} parent=1 // pred_fallthru
      _
    // Predicated region
    $region26: #{molan_gcn_forward.1} parent=1 // pred_check
      _
    $region27: #{molan_gcn_forward.1} parent=1 // pred_check_branch
      %76 = sbr.rel (0) target = $region29
    $region28: #{molan_gcn_forward.1} parent=1 // pred_region
      %77 = dma.done [#allocation6], 1024
    $region29: #{molan_gcn_forward.1} parent=1 // pred_fallthru
      _
    // Predicated region
    $region30: #{molan_gcn_forward.1} parent=1 // pred_check
      _
    $region31: #{molan_gcn_forward.1} parent=1 // pred_check_branch
      %79 = sbr.rel (0) target = $region33
    $region32: #{molan_gcn_forward.1} parent=1 // pred_region
      %80 = dma.done [#allocation6], 256
    $region33: #{molan_gcn_forward.1} parent=1 // pred_fallthru
      _
    // Predicated region
    $region34: #{molan_gcn_forward.1} parent=1 // pred_check
      _
    $region35: #{molan_gcn_forward.1} parent=1 // pred_check_branch
      %82 = sbr.rel (0) target = $region37
    $region36: #{molan_gcn_forward.1} parent=1 // pred_region
      %83 = dma.done [#allocation9], 22528
    $region37: #{molan_gcn_forward.1} parent=1 // pred_fallthru
      _
    // Predicated region
    $region38: #{molan_gcn_forward.1} parent=1 // pred_check
      _
    $region39: #{molan_gcn_forward.1} parent=1 // pred_check_branch
      %85 = sbr.rel (0) target = $region41
    $region40: #{molan_gcn_forward.1} parent=1 // pred_region
      %86 = dma.done [#allocation9], 1408
    $region41: #{molan_gcn_forward.1} parent=1 // pred_fallthru
      _
    %v88 = vld [vmem:[#allocation8] sm:$0xf]
    %v89 = vld [vmem:[#allocation8 + $0x8] sm:$0xf]
    %v90 = vld [vmem:[#allocation8 + $0x10] sm:$0xf]
    %v91 = vld [vmem:[#allocation8 + $0x18] sm:$0xf]
    %v92 = vld [vmem:[#allocation8 + $0x20] sm:$0xf]
    %v93 = vld [vmem:[#allocation8 + $0x28] sm:$0xf]
    %v94 = vld [vmem:[#allocation8 + $0x30] sm:$0xf]
    %v95 = vld [vmem:[#allocation8 + $0x38] sm:$0xf]
    %v96 = vld [vmem:[#allocation8 + $0x40] sm:$0xf]
    %v97 = vld [vmem:[#allocation8 + $0x48] sm:$0xf]
    %v98 = vld [vmem:[#allocation8 + $0x50] sm:$0xf]
    %v99 = vld [vmem:[#allocation8 + $0x58] sm:$0xf]
    %v100 = vld [vmem:[#allocation8 + $0x60] sm:$0xf]
    %v101 = vld [vmem:[#allocation8 + $0x68] sm:$0xf]
    %v102 = vld [vmem:[#allocation8 + $0x70] sm:$0xf]
    %v103 = vld [vmem:[#allocation8 + $0x78] sm:$0xf]
    %v104 = vld [vmem:[#allocation10] ss:$0 sm:$0xff]
    %v105 = vld [vmem:[#allocation5] sm:$0xf]
    %v106 = vld [vmem:[#allocation5 + $0x4] sm:$0xf]
    %v107 = vld [vmem:[#allocation5 + $0x8] sm:$0xf]
    %v108 = vld [vmem:[#allocation5 + $0xc] sm:$0xf]
    %v109 = vld [vmem:[#allocation5 + $0x10] sm:$0xf]
    %v110 = vld [vmem:[#allocation5 + $0x14] sm:$0xf]
    %v111 = vld [vmem:[#allocation5 + $0x18] sm:$0xf]
    %v112 = vld [vmem:[#allocation5 + $0x1c] sm:$0xf]
    %v113 = vld [vmem:[#allocation5 + $0x20] sm:$0xf]
    %v114 = vld [vmem:[#allocation5 + $0x24] sm:$0xf]
    %v115 = vld [vmem:[#allocation5 + $0x28] sm:$0xf]
    %v116 = vld [vmem:[#allocation5 + $0x2c] sm:$0xf]
    %v117 = vld [vmem:[#allocation5 + $0x30] sm:$0xf]
    %v118 = vld [vmem:[#allocation5 + $0x34] sm:$0xf]
    %v119 = vld [vmem:[#allocation5 + $0x38] sm:$0xf]
    %v120 = vld [vmem:[#allocation5 + $0x3c] sm:$0xf]
    %v137 = vunpack.c.l.b16 %v105
    %v138 = vunpack.c.l.b16 %v106
    %v139 = vunpack.c.l.b16 %v107
    %v140 = vunpack.c.l.b16 %v108
    %v141 = vunpack.c.l.b16 %v109
    %v142 = vunpack.c.l.b16 %v110
    %v143 = vunpack.c.l.b16 %v111
    %v144 = vunpack.c.l.b16 %v112
    %v145 = vunpack.c.l.b16 %v113
    %v146 = vunpack.c.l.b16 %v114
    %v147 = vunpack.c.l.b16 %v115
    %v148 = vunpack.c.l.b16 %v116
    %v149 = vunpack.c.l.b16 %v117
    %v150 = vunpack.c.l.b16 %v118
    %v151 = vunpack.c.l.b16 %v119
    %v152 = vunpack.c.l.b16 %v120
    %v153 = vpack.c.b16 %v138, %v137
    %v154 = vpack.c.b16 %v140, %v139
    %v155 = vpack.c.b16 %v142, %v141
    %v156 = vpack.c.b16 %v144, %v143
    %v157 = vpack.c.b16 %v146, %v145
    %v158 = vpack.c.b16 %v148, %v147
    %v159 = vpack.c.b16 %v150, %v149
    %v160 = vpack.c.b16 %v152, %v151
    %v185 = vunpack.c.l.b16 %v88
    %v186 = vunpack.c.l.b16 %v89
    %v187 = vunpack.c.l.b16 %v90
    %v188 = vunpack.c.l.b16 %v91
    %v189 = vunpack.c.l.b16 %v92
    %v190 = vunpack.c.l.b16 %v93
    %v191 = vunpack.c.l.b16 %v94
    %v192 = vunpack.c.l.b16 %v95
    %v193 = vunpack.c.l.b16 %v96
    %v194 = vunpack.c.l.b16 %v97
    %v195 = vunpack.c.l.b16 %v98
    %v196 = vunpack.c.l.b16 %v99
    %v197 = vunpack.c.l.b16 %v100
    %v198 = vunpack.c.l.b16 %v101
    %v199 = vunpack.c.l.b16 %v102
    %v200 = vunpack.c.l.b16 %v103
    %v201 = vpack.c.b16 %v186, %v185
    %v202 = vpack.c.b16 %v188, %v187
    %v203 = vpack.c.b16 %v190, %v189
    %v204 = vpack.c.b16 %v192, %v191
    %v205 = vpack.c.b16 %v194, %v193
    %v206 = vpack.c.b16 %v196, %v195
    %v207 = vpack.c.b16 %v198, %v197
    %v208 = vpack.c.b16 %v200, %v199
    %217 = vmatprep.subr.bf16.mxu0 0
    %218 = vmatpush1.bf16.msra.mxu0 %v201
    %219 = vmatprep.subr.bf16.mxu0 0
    %220 = vmatpush1.bf16.msra.mxu0 %v202
    %221 = vmatprep.subr.bf16.mxu0 0
    %222 = vmatpush1.bf16.msra.mxu0 %v203
    %223 = vmatprep.subr.bf16.mxu0 0
    %224 = vmatpush1.bf16.msra.mxu0 %v204
    %225 = vmatprep.subr.bf16.mxu0 0
    %226 = vmatpush1.bf16.msra.mxu0 %v205
    %227 = vmatprep.subr.bf16.mxu0 0
    %228 = vmatpush1.bf16.msra.mxu0 %v206
    %229 = vmatprep.subr.bf16.mxu0 0
    %230 = vmatpush1.bf16.msra.mxu0 %v207
    %231 = vmatprep.subr.bf16.mxu0 0
    %232 = vmatpush1.bf16.msra.mxu0 %v208
    %233 = vmatprep.subr.bf16.mxu0 0
    %234 = vmatpush1.bf16.msra.mxu0 0
    %235 = vmatprep.subr.bf16.mxu0 0
    %236 = vmatpush1.bf16.msra.mxu0 0
    %237 = vmatprep.subr.bf16.mxu0 0
    %238 = vmatpush1.bf16.msra.mxu0 0
    %239 = vmatprep.subr.bf16.mxu0 0
    %240 = vmatpush1.bf16.msra.mxu0 0
    %241 = vmatprep.subr.bf16.mxu0 0
    %242 = vmatpush1.bf16.msra.mxu0 0
    %243 = vmatprep.subr.bf16.mxu0 0
    %244 = vmatpush1.bf16.msra.mxu0 0
    %245 = vmatprep.subr.bf16.mxu0 0
    %246 = vmatpush1.bf16.msra.mxu0 0
    %247 = vmatprep.subr.bf16.mxu0 0
    %248 = vmatpush1.bf16.msra.mxu0 0
    %249 = vmatprep.mubr.bf16.mxu0 0
    %250 = vmatmul.mubr.bf16.gmra.mrb[0].mxu0 %v153
    %v251 = vpop.f32.mrb[0].mxu0
    %v252 = vadd.f32 %v104, %v251
    %v253 = vpop.f32.mrb[0].mxu0
    %v254 = vpop.f32.mrb[0].mxu0
    %v255 = vadd.f32 %v104, %v254
    %v256 = vpop.f32.mrb[0].mxu0
    %257 = vmatprep.mubr.bf16.mxu0 0
    %258 = vmatmul.mubr.bf16.gmra.mrb[0].mxu0 %v154
    %v259 = vpop.f32.mrb[0].mxu0
    %v260 = vadd.f32 %v104, %v259
    %v261 = vpop.f32.mrb[0].mxu0
    %v262 = vpop.f32.mrb[0].mxu0
    %v263 = vadd.f32 %v104, %v262
    %v264 = vpop.f32.mrb[0].mxu0
    %265 = vmatprep.mubr.bf16.mxu0 0
    %266 = vmatmul.mubr.bf16.gmra.mrb[0].mxu0 %v155
    %v267 = vpop.f32.mrb[0].mxu0
    %v268 = vadd.f32 %v104, %v267
    %v269 = vpop.f32.mrb[0].mxu0
    %v270 = vpop.f32.mrb[0].mxu0
    %v271 = vadd.f32 %v104, %v270
    %v272 = vpop.f32.mrb[0].mxu0
    %273 = vmatprep.mubr.bf16.mxu0 0
    %274 = vmatmul.mubr.bf16.gmra.mrb[0].mxu0 %v156
    %v275 = vpop.f32.mrb[0].mxu0
    %v276 = vadd.f32 %v104, %v275
    %v277 = vpop.f32.mrb[0].mxu0
    %v278 = vpop.f32.mrb[0].mxu0
    %v279 = vadd.f32 %v104, %v278
    %v280 = vpop.f32.mrb[0].mxu0
    %281 = vmatprep.mubr.bf16.mxu0 0
    %282 = vmatmul.mubr.bf16.gmra.mrb[0].mxu0 %v157
    %v283 = vpop.f32.mrb[0].mxu0
    %v284 = vadd.f32 %v104, %v283
    %v285 = vpop.f32.mrb[0].mxu0
    %v286 = vpop.f32.mrb[0].mxu0
    %v287 = vadd.f32 %v104, %v286
    %v288 = vpop.f32.mrb[0].mxu0
    %289 = vmatprep.mubr.bf16.mxu0 0
    %290 = vmatmul.mubr.bf16.gmra.mrb[0].mxu0 %v158
    %v291 = vpop.f32.mrb[0].mxu0
    %v292 = vadd.f32 %v104, %v291
    %v293 = vpop.f32.mrb[0].mxu0
    %v294 = vpop.f32.mrb[0].mxu0
    %v295 = vadd.f32 %v104, %v294
    %v296 = vpop.f32.mrb[0].mxu0
    %297 = vmatprep.mubr.bf16.mxu0 0
    %298 = vmatmul.mubr.bf16.gmra.mrb[0].mxu0 %v159
    %v299 = vpop.f32.mrb[0].mxu0
    %v300 = vadd.f32 %v104, %v299
    %v301 = vpop.f32.mrb[0].mxu0
    %v302 = vpop.f32.mrb[0].mxu0
    %v303 = vadd.f32 %v104, %v302
    %v304 = vpop.f32.mrb[0].mxu0
    %305 = vmatprep.mubr.bf16.mxu0 0
    %306 = vmatmul.mubr.bf16.gmra.mrb[0].mxu0 %v160
    %v307 = vpop.f32.mrb[0].mxu0
    %v308 = vadd.f32 %v104, %v307
    %v309 = vpop.f32.mrb[0].mxu0
    %v310 = vpop.f32.mrb[0].mxu0
    %v311 = vadd.f32 %v104, %v310
    %v312 = vpop.f32.mrb[0].mxu0
    %313 = vdwg.mxu0
    %v314 = vpack.c.bf16 %v255, %v252
    %v315 = vpack.c.bf16 %v263, %v260
    %v316 = vpack.c.bf16 %v271, %v268
    %v317 = vpack.c.bf16 %v279, %v276
    %v318 = vpack.c.bf16 %v287, %v284
    %v319 = vpack.c.bf16 %v295, %v292
    %v320 = vpack.c.bf16 %v303, %v300
    %v321 = vpack.c.bf16 %v311, %v308
    %v322 = vld [vmem:[#allocation2] sm:$0xf]
    %v323 = vld [vmem:[#allocation2 + $0x4] sm:$0xf]
    %v324 = vld [vmem:[#allocation2 + $0x8] sm:$0xf]
    %v325 = vld [vmem:[#allocation2 + $0xc] sm:$0xf]
    %v326 = vld [vmem:[#allocation2 + $0x10] sm:$0xf]
    %v327 = vld [vmem:[#allocation2 + $0x14] sm:$0xf]
    %v328 = vld [vmem:[#allocation2 + $0x18] sm:$0xf]
    %v329 = vld [vmem:[#allocation2 + $0x1c] sm:$0xf]
    %v330 = vld [vmem:[#allocation2 + $0x20] sm:$0xf]
    %v331 = vld [vmem:[#allocation2 + $0x24] sm:$0xf]
    %v332 = vld [vmem:[#allocation2 + $0x28] sm:$0xf]
    %v333 = vld [vmem:[#allocation2 + $0x2c] sm:$0xf]
    %v334 = vld [vmem:[#allocation2 + $0x30] sm:$0xf]
    %v335 = vld [vmem:[#allocation2 + $0x34] sm:$0xf]
    %v336 = vld [vmem:[#allocation2 + $0x38] sm:$0xf]
    %v337 = vld [vmem:[#allocation2 + $0x3c] sm:$0xf]
    %v338 = vld [vmem:[#allocation8 + $0x80] sm:$0xf]
    %v339 = vld [vmem:[#allocation8 + $0x88] sm:$0xf]
    %v340 = vld [vmem:[#allocation8 + $0x90] sm:$0xf]
    %v341 = vld [vmem:[#allocation8 + $0x98] sm:$0xf]
    %v342 = vld [vmem:[#allocation8 + $0xa0] sm:$0xf]
    %v343 = vld [vmem:[#allocation8 + $0xa8] sm:$0xf]
    %v344 = vld [vmem:[#allocation8 + $0xb0] sm:$0xf]
    %v345 = vld [vmem:[#allocation8 + $0xb8] sm:$0xf]
    %v346 = vld [vmem:[#allocation8 + $0xc0] sm:$0xf]
    %v347 = vld [vmem:[#allocation8 + $0xc8] sm:$0xf]
    %v348 = vld [vmem:[#allocation8 + $0xd0] sm:$0xf]
    %v349 = vld [vmem:[#allocation8 + $0xd8] sm:$0xf]
    %v350 = vld [vmem:[#allocation8 + $0xe0] sm:$0xf]
    %v351 = vld [vmem:[#allocation8 + $0xe8] sm:$0xf]
    %v352 = vld [vmem:[#allocation8 + $0xf0] sm:$0xf]
    %v353 = vld [vmem:[#allocation8 + $0xf8] sm:$0xf]
    %v354 = vld [vmem:[#allocation10 + $0x8] ss:$0 sm:$0xff]
    %v355 = vld [vmem:[#allocation10 + $0x9] ss:$0 sm:$0xff]
    %v356 = vld [vmem:[#allocation10 + $0xa] ss:$0 sm:$0xff]
    %v373 = vunpack.c.l.b16 %v322
    %v374 = vunpack.c.l.b16 %v323
    %v375 = vunpack.c.l.b16 %v324
    %v376 = vunpack.c.l.b16 %v325
    %v377 = vunpack.c.l.b16 %v326
    %v378 = vunpack.c.l.b16 %v327
    %v379 = vunpack.c.l.b16 %v328
    %v380 = vunpack.c.l.b16 %v329
    %v381 = vunpack.c.l.b16 %v330
    %v382 = vunpack.c.l.b16 %v331
    %v383 = vunpack.c.l.b16 %v332
    %v384 = vunpack.c.l.b16 %v333
    %v385 = vunpack.c.l.b16 %v334
    %v386 = vunpack.c.l.b16 %v335
    %v387 = vunpack.c.l.b16 %v336
    %v388 = vunpack.c.l.b16 %v337
    %v389 = vpack.c.b16 %v374, %v373
    %v390 = vpack.c.b16 %v376, %v375
    %v391 = vpack.c.b16 %v378, %v377
    %v392 = vpack.c.b16 %v380, %v379
    %v393 = vpack.c.b16 %v382, %v381
    %v394 = vpack.c.b16 %v384, %v383
    %v395 = vpack.c.b16 %v386, %v385
    %v396 = vpack.c.b16 %v388, %v387
    %405 = vmatprep.subr.bf16.mxu0 0
    %406 = vmatpush1.bf16.msra.mxu0 %v314
    %407 = vmatprep.subr.bf16.mxu0 0
    %408 = vmatpush1.bf16.msra.mxu0 %v315
    %409 = vmatprep.subr.bf16.mxu0 0
    %410 = vmatpush1.bf16.msra.mxu0 %v316
    %411 = vmatprep.subr.bf16.mxu0 0
    %412 = vmatpush1.bf16.msra.mxu0 %v317
    %413 = vmatprep.subr.bf16.mxu0 0
    %414 = vmatpush1.bf16.msra.mxu0 %v318
    %415 = vmatprep.subr.bf16.mxu0 0
    %416 = vmatpush1.bf16.msra.mxu0 %v319
    %417 = vmatprep.subr.bf16.mxu0 0
    %418 = vmatpush1.bf16.msra.mxu0 %v320
    %419 = vmatprep.subr.bf16.mxu0 0
    %420 = vmatpush1.bf16.msra.mxu0 %v321
    %421 = vmatprep.subr.bf16.mxu0 0
    %422 = vmatpush1.bf16.msra.mxu0 0
    %423 = vmatprep.subr.bf16.mxu0 0
    %424 = vmatpush1.bf16.msra.mxu0 0
    %425 = vmatprep.subr.bf16.mxu0 0
    %426 = vmatpush1.bf16.msra.mxu0 0
    %427 = vmatprep.subr.bf16.mxu0 0
    %428 = vmatpush1.bf16.msra.mxu0 0
    %429 = vmatprep.subr.bf16.mxu0 0
    %430 = vmatpush1.bf16.msra.mxu0 0
    %431 = vmatprep.subr.bf16.mxu0 0
    %432 = vmatpush1.bf16.msra.mxu0 0
    %433 = vmatprep.subr.bf16.mxu0 0
    %434 = vmatpush1.bf16.msra.mxu0 0
    %435 = vmatprep.subr.bf16.mxu0 0
    %436 = vmatpush1.bf16.msra.mxu0 0
    %437 = vmatprep.mubr.bf16.mxu0 0
    %438 = vmatmul.mubr.bf16.gmra.mrb[0].mxu0 %v389
    %v439 = vpop.f32.mrb[0].mxu0
    %v440 = vadd.f32 0.0, %v439
    %v441 = vpop.f32.mrb[0].mxu0
    %v442 = vpop.f32.mrb[0].mxu0
    %v443 = vadd.f32 0.0, %v442
    %v444 = vpop.f32.mrb[0].mxu0
    %445 = vmatprep.mubr.bf16.mxu0 0
    %446 = vmatmul.mubr.bf16.gmra.mrb[0].mxu0 %v390
    %v447 = vpop.f32.mrb[0].mxu0
    %v448 = vadd.f32 0.0, %v447
    %v449 = vpop.f32.mrb[0].mxu0
    %v450 = vpop.f32.mrb[0].mxu0
    %v451 = vadd.f32 0.0, %v450
    %v452 = vpop.f32.mrb[0].mxu0
    %453 = vmatprep.mubr.bf16.mxu0 0
    %454 = vmatmul.mubr.bf16.gmra.mrb[0].mxu0 %v391
    %v455 = vpop.f32.mrb[0].mxu0
    %v456 = vadd.f32 0.0, %v455
    %v457 = vpop.f32.mrb[0].mxu0
    %v458 = vpop.f32.mrb[0].mxu0
    %v459 = vadd.f32 0.0, %v458
    %v460 = vpop.f32.mrb[0].mxu0
    %461 = vmatprep.mubr.bf16.mxu0 0
    %462 = vmatmul.mubr.bf16.gmra.mrb[0].mxu0 %v392
    %v463 = vpop.f32.mrb[0].mxu0
    %v464 = vadd.f32 0.0, %v463
    %v465 = vpop.f32.mrb[0].mxu0
    %v466 = vpop.f32.mrb[0].mxu0
    %v467 = vadd.f32 0.0, %v466
    %v468 = vpop.f32.mrb[0].mxu0
    %469 = vmatprep.mubr.bf16.mxu0 0
    %470 = vmatmul.mubr.bf16.gmra.mrb[0].mxu0 %v393
    %v471 = vpop.f32.mrb[0].mxu0
    %v472 = vadd.f32 0.0, %v471
    %v473 = vpop.f32.mrb[0].mxu0
    %v474 = vpop.f32.mrb[0].mxu0
    %v475 = vadd.f32 0.0, %v474
    %v476 = vpop.f32.mrb[0].mxu0
    %477 = vmatprep.mubr.bf16.mxu0 0
    %478 = vmatmul.mubr.bf16.gmra.mrb[0].mxu0 %v394
    %v479 = vpop.f32.mrb[0].mxu0
    %v480 = vadd.f32 0.0, %v479
    %v481 = vpop.f32.mrb[0].mxu0
    %v482 = vpop.f32.mrb[0].mxu0
    %v483 = vadd.f32 0.0, %v482
    %v484 = vpop.f32.mrb[0].mxu0
    %485 = vmatprep.mubr.bf16.mxu0 0
    %486 = vmatmul.mubr.bf16.gmra.mrb[0].mxu0 %v395
    %v487 = vpop.f32.mrb[0].mxu0
    %v488 = vadd.f32 0.0, %v487
    %v489 = vpop.f32.mrb[0].mxu0
    %v490 = vpop.f32.mrb[0].mxu0
    %v491 = vadd.f32 0.0, %v490
    %v492 = vpop.f32.mrb[0].mxu0
    %493 = vmatprep.mubr.bf16.mxu0 0
    %494 = vmatmul.mubr.bf16.gmra.mrb[0].mxu0 %v396
    %v495 = vpop.f32.mrb[0].mxu0
    %v496 = vadd.f32 0.0, %v495
    %v497 = vpop.f32.mrb[0].mxu0
    %v498 = vpop.f32.mrb[0].mxu0
    %v499 = vadd.f32 0.0, %v498
    %v500 = vpop.f32.mrb[0].mxu0
    %501 = vdwg.mxu0
    %v502 = vpack.c.bf16 %v443, %v440
    %v503 = vpack.c.bf16 %v451, %v448
    %v504 = vpack.c.bf16 %v459, %v456
    %v505 = vpack.c.bf16 %v467, %v464
    %v506 = vpack.c.bf16 %v475, %v472
    %v507 = vpack.c.bf16 %v483, %v480
    %v508 = vpack.c.bf16 %v491, %v488
    %v509 = vpack.c.bf16 %v499, %v496
    %v526 = vunpack.c.l.b16 %v338
    %v527 = vunpack.c.l.b16 %v339
    %v528 = vunpack.c.l.b16 %v340
    %v529 = vunpack.c.l.b16 %v341
    %v530 = vunpack.c.l.b16 %v342
    %v531 = vunpack.c.l.b16 %v343
    %v532 = vunpack.c.l.b16 %v344
    %v533 = vunpack.c.l.b16 %v345
    %v534 = vunpack.c.l.b16 %v346
    %v535 = vunpack.c.l.b16 %v347
    %v536 = vunpack.c.l.b16 %v348
    %v537 = vunpack.c.l.b16 %v349
    %v538 = vunpack.c.l.b16 %v350
    %v539 = vunpack.c.l.b16 %v351
    %v540 = vunpack.c.l.b16 %v352
    %v541 = vunpack.c.l.b16 %v353
    %v542 = vpack.c.b16 %v527, %v526
    %v543 = vpack.c.b16 %v529, %v528
    %v544 = vpack.c.b16 %v531, %v530
    %v545 = vpack.c.b16 %v533, %v532
    %v546 = vpack.c.b16 %v535, %v534
    %v547 = vpack.c.b16 %v537, %v536
    %v548 = vpack.c.b16 %v539, %v538
    %v549 = vpack.c.b16 %v541, %v540
    %558 = vmatprep.subr.bf16.mxu0 0
    %559 = vmatpush1.bf16.msra.mxu0 %v542
    %560 = vmatprep.subr.bf16.mxu0 0
    %561 = vmatpush1.bf16.msra.mxu0 %v543
    %562 = vmatprep.subr.bf16.mxu0 0
    %563 = vmatpush1.bf16.msra.mxu0 %v544
    %564 = vmatprep.subr.bf16.mxu0 0
    %565 = vmatpush1.bf16.msra.mxu0 %v545
    %566 = vmatprep.subr.bf16.mxu0 0
    %567 = vmatpush1.bf16.msra.mxu0 %v546
    %568 = vmatprep.subr.bf16.mxu0 0
    %569 = vmatpush1.bf16.msra.mxu0 %v547
    %570 = vmatprep.subr.bf16.mxu0 0
    %571 = vmatpush1.bf16.msra.mxu0 %v548
    %572 = vmatprep.subr.bf16.mxu0 0
    %573 = vmatpush1.bf16.msra.mxu0 %v549
    %574 = vmatprep.subr.bf16.mxu0 0
    %575 = vmatpush1.bf16.msra.mxu0 0
    %576 = vmatprep.subr.bf16.mxu0 0
    %577 = vmatpush1.bf16.msra.mxu0 0
    %578 = vmatprep.subr.bf16.mxu0 0
    %579 = vmatpush1.bf16.msra.mxu0 0
    %580 = vmatprep.subr.bf16.mxu0 0
    %581 = vmatpush1.bf16.msra.mxu0 0
    %582 = vmatprep.subr.bf16.mxu0 0
    %583 = vmatpush1.bf16.msra.mxu0 0
    %584 = vmatprep.subr.bf16.mxu0 0
    %585 = vmatpush1.bf16.msra.mxu0 0
    %586 = vmatprep.subr.bf16.mxu0 0
    %587 = vmatpush1.bf16.msra.mxu0 0
    %588 = vmatprep.subr.bf16.mxu0 0
    %589 = vmatpush1.bf16.msra.mxu0 0
    %590 = vmatprep.mubr.bf16.mxu0 0
    %591 = vmatmul.mubr.bf16.gmra.mrb[0].mxu0 %v502
    %v592 = vpop.f32.mrb[0].mxu0
    %v593 = vadd.f32 %v354, %v592
    %v594 = vpop.f32.mrb[0].mxu0
    %v595 = vpop.f32.mrb[0].mxu0
    %v596 = vadd.f32 %v354, %v595
    %v597 = vpop.f32.mrb[0].mxu0
    %598 = vmatprep.mubr.bf16.mxu0 0
    %599 = vmatmul.mubr.bf16.gmra.mrb[0].mxu0 %v503
    %v600 = vpop.f32.mrb[0].mxu0
    %v601 = vadd.f32 %v354, %v600
    %v602 = vpop.f32.mrb[0].mxu0
    %v603 = vpop.f32.mrb[0].mxu0
    %v604 = vadd.f32 %v354, %v603
    %v605 = vpop.f32.mrb[0].mxu0
    %606 = vmatprep.mubr.bf16.mxu0 0
    %607 = vmatmul.mubr.bf16.gmra.mrb[0].mxu0 %v504
    %v608 = vpop.f32.mrb[0].mxu0
    %v609 = vadd.f32 %v354, %v608
    %v610 = vpop.f32.mrb[0].mxu0
    %v611 = vpop.f32.mrb[0].mxu0
    %v612 = vadd.f32 %v354, %v611
    %v613 = vpop.f32.mrb[0].mxu0
    %614 = vmatprep.mubr.bf16.mxu0 0
    %615 = vmatmul.mubr.bf16.gmra.mrb[0].mxu0 %v505
    %v616 = vpop.f32.mrb[0].mxu0
    %v617 = vadd.f32 %v354, %v616
    %v618 = vpop.f32.mrb[0].mxu0
    %v619 = vpop.f32.mrb[0].mxu0
    %v620 = vadd.f32 %v354, %v619
    %v621 = vpop.f32.mrb[0].mxu0
    %622 = vmatprep.mubr.bf16.mxu0 0
    %623 = vmatmul.mubr.bf16.gmra.mrb[0].mxu0 %v506
    %v624 = vpop.f32.mrb[0].mxu0
    %v625 = vadd.f32 %v354, %v624
    %v626 = vpop.f32.mrb[0].mxu0
    %v627 = vpop.f32.mrb[0].mxu0
    %v628 = vadd.f32 %v354, %v627
    %v629 = vpop.f32.mrb[0].mxu0
    %630 = vmatprep.mubr.bf16.mxu0 0
    %631 = vmatmul.mubr.bf16.gmra.mrb[0].mxu0 %v507
    %v632 = vpop.f32.mrb[0].mxu0
    %v633 = vadd.f32 %v354, %v632
    %v634 = vpop.f32.mrb[0].mxu0
    %v635 = vpop.f32.mrb[0].mxu0
    %v636 = vadd.f32 %v354, %v635
    %v637 = vpop.f32.mrb[0].mxu0
    %638 = vmatprep.mubr.bf16.mxu0 0
    %639 = vmatmul.mubr.bf16.gmra.mrb[0].mxu0 %v508
    %v640 = vpop.f32.mrb[0].mxu0
    %v641 = vadd.f32 %v354, %v640
    %v642 = vpop.f32.mrb[0].mxu0
    %v643 = vpop.f32.mrb[0].mxu0
    %v644 = vadd.f32 %v354, %v643
    %v645 = vpop.f32.mrb[0].mxu0
    %646 = vmatprep.mubr.bf16.mxu0 0
    %647 = vmatmul.mubr.bf16.gmra.mrb[0].mxu0 %v509
    %v648 = vpop.f32.mrb[0].mxu0
    %v649 = vadd.f32 %v354, %v648
    %v650 = vpop.f32.mrb[0].mxu0
    %v651 = vpop.f32.mrb[0].mxu0
    %v652 = vadd.f32 %v354, %v651
    %v653 = vpop.f32.mrb[0].mxu0
    %654 = vdwg.mxu0
    %v655 = vmax.f32 %v593, 0.0
    %v656 = vmax.f32 %v596, 0.0
    %v657 = vmax.f32 %v601, 0.0
    %v658 = vmax.f32 %v604, 0.0
    %v659 = vmax.f32 %v609, 0.0
    %v660 = vmax.f32 %v612, 0.0
    %v661 = vmax.f32 %v617, 0.0
    %v662 = vmax.f32 %v620, 0.0
    %v663 = vmax.f32 %v625, 0.0
    %v664 = vmax.f32 %v628, 0.0
    %v665 = vmax.f32 %v633, 0.0
    %v666 = vmax.f32 %v636, 0.0
    %v667 = vmax.f32 %v641, 0.0
    %v668 = vmax.f32 %v644, 0.0
    %v669 = vmax.f32 %v649, 0.0
    %v670 = vmax.f32 %v652, 0.0
    %v671 = vmul.f32 %v655, %v355
    %v672 = vmul.f32 %v656, %v355
    %v673 = vmul.f32 %v657, %v355
    %v674 = vmul.f32 %v658, %v355
    %v675 = vmul.f32 %v659, %v355
    %v676 = vmul.f32 %v660, %v355
    %v677 = vmul.f32 %v661, %v355
    %v678 = vmul.f32 %v662, %v355
    %v679 = vmul.f32 %v663, %v355
    %v680 = vmul.f32 %v664, %v355
    %v681 = vmul.f32 %v665, %v355
    %v682 = vmul.f32 %v666, %v355
    %v683 = vmul.f32 %v667, %v355
    %v684 = vmul.f32 %v668, %v355
    %v685 = vmul.f32 %v669, %v355
    %v686 = vmul.f32 %v670, %v355
    %v687 = vadd.f32 %v671, %v356
    %v688 = vadd.f32 %v672, %v356
    %v689 = vadd.f32 %v673, %v356
    %v690 = vadd.f32 %v674, %v356
    %v691 = vadd.f32 %v675, %v356
    %v692 = vadd.f32 %v676, %v356
    %v693 = vadd.f32 %v677, %v356
    %v694 = vadd.f32 %v678, %v356
    %v695 = vadd.f32 %v679, %v356
    %v696 = vadd.f32 %v680, %v356
    %v697 = vadd.f32 %v681, %v356
    %v698 = vadd.f32 %v682, %v356
    %v699 = vadd.f32 %v683, %v356
    %v700 = vadd.f32 %v684, %v356
    %v701 = vadd.f32 %v685, %v356
    %v702 = vadd.f32 %v686, %v356
    %v703 = vpack.c.bf16 %v688, %v687
    %v704 = vpack.c.bf16 %v690, %v689
    %v705 = vpack.c.bf16 %v692, %v691
    %v706 = vpack.c.bf16 %v694, %v693
    %v707 = vpack.c.bf16 %v696, %v695
    %v708 = vpack.c.bf16 %v698, %v697
    %v709 = vpack.c.bf16 %v700, %v699
    %v710 = vpack.c.bf16 %v702, %v701
    %v711 = vld [vmem:[#allocation8 + $0x100] sm:$0xf]
    %v712 = vld [vmem:[#allocation8 + $0x108] sm:$0xf]
    %v713 = vld [vmem:[#allocation8 + $0x110] sm:$0xf]
    %v714 = vld [vmem:[#allocation8 + $0x118] sm:$0xf]
    %v715 = vld [vmem:[#allocation8 + $0x120] sm:$0xf]
    %v716 = vld [vmem:[#allocation8 + $0x128] sm:$0xf]
    %v717 = vld [vmem:[#allocation8 + $0x130] sm:$0xf]
    %v718 = vld [vmem:[#allocation8 + $0x138] sm:$0xf]
    %v719 = vld [vmem:[#allocation8 + $0x140] sm:$0xf]
    %v720 = vld [vmem:[#allocation8 + $0x148] sm:$0xf]
    %v721 = vld [vmem:[#allocation8 + $0x150] sm:$0xf]
    %v722 = vld [vmem:[#allocation8 + $0x158] sm:$0xf]
    %v723 = vld [vmem:[#allocation8 + $0x160] sm:$0xf]
    %v724 = vld [vmem:[#allocation8 + $0x168] sm:$0xf]
    %v725 = vld [vmem:[#allocation8 + $0x170] sm:$0xf]
    %v726 = vld [vmem:[#allocation8 + $0x178] sm:$0xf]
    %v727 = vld [vmem:[#allocation10 + $0x10] ss:$0 sm:$0xff]
    %v728 = vld [vmem:[#allocation10 + $0x11] ss:$0 sm:$0xff]
    %v729 = vld [vmem:[#allocation10 + $0x12] ss:$0 sm:$0xff]
    %730 = vmatprep.subr.bf16.mxu0 0
    %731 = vmatpush1.bf16.msra.mxu0 %v703
    %732 = vmatprep.subr.bf16.mxu0 0
    %733 = vmatpush1.bf16.msra.mxu0 %v704
    %734 = vmatprep.subr.bf16.mxu0 0
    %735 = vmatpush1.bf16.msra.mxu0 %v705
    %736 = vmatprep.subr.bf16.mxu0 0
    %737 = vmatpush1.bf16.msra.mxu0 %v706
    %738 = vmatprep.subr.bf16.mxu0 0
    %739 = vmatpush1.bf16.msra.mxu0 %v707
    %740 = vmatprep.subr.bf16.mxu0 0
    %741 = vmatpush1.bf16.msra.mxu0 %v708
    %742 = vmatprep.subr.bf16.mxu0 0
    %743 = vmatpush1.bf16.msra.mxu0 %v709
    %744 = vmatprep.subr.bf16.mxu0 0
    %745 = vmatpush1.bf16.msra.mxu0 %v710
    %746 = vmatprep.subr.bf16.mxu0 0
    %747 = vmatpush1.bf16.msra.mxu0 0
    %748 = vmatprep.subr.bf16.mxu0 0
    %749 = vmatpush1.bf16.msra.mxu0 0
    %750 = vmatprep.subr.bf16.mxu0 0
    %751 = vmatpush1.bf16.msra.mxu0 0
    %752 = vmatprep.subr.bf16.mxu0 0
    %753 = vmatpush1.bf16.msra.mxu0 0
    %754 = vmatprep.subr.bf16.mxu0 0
    %755 = vmatpush1.bf16.msra.mxu0 0
    %756 = vmatprep.subr.bf16.mxu0 0
    %757 = vmatpush1.bf16.msra.mxu0 0
    %758 = vmatprep.subr.bf16.mxu0 0
    %759 = vmatpush1.bf16.msra.mxu0 0
    %760 = vmatprep.subr.bf16.mxu0 0
    %761 = vmatpush1.bf16.msra.mxu0 0
    %762 = vmatprep.mubr.bf16.mxu0 0
    %763 = vmatmul.mubr.bf16.gmra.mrb[0].mxu0 %v389
    %v764 = vpop.f32.mrb[0].mxu0
    %v765 = vadd.f32 0.0, %v764
    %v766 = vpop.f32.mrb[0].mxu0
    %v767 = vpop.f32.mrb[0].mxu0
    %v768 = vadd.f32 0.0, %v767
    %v769 = vpop.f32.mrb[0].mxu0
    %770 = vmatprep.mubr.bf16.mxu0 0
    %771 = vmatmul.mubr.bf16.gmra.mrb[0].mxu0 %v390
    %v772 = vpop.f32.mrb[0].mxu0
    %v773 = vadd.f32 0.0, %v772
    %v774 = vpop.f32.mrb[0].mxu0
    %v775 = vpop.f32.mrb[0].mxu0
    %v776 = vadd.f32 0.0, %v775
    %v777 = vpop.f32.mrb[0].mxu0
    %778 = vmatprep.mubr.bf16.mxu0 0
    %779 = vmatmul.mubr.bf16.gmra.mrb[0].mxu0 %v391
    %v780 = vpop.f32.mrb[0].mxu0
    %v781 = vadd.f32 0.0, %v780
    %v782 = vpop.f32.mrb[0].mxu0
    %v783 = vpop.f32.mrb[0].mxu0
    %v784 = vadd.f32 0.0, %v783
    %v785 = vpop.f32.mrb[0].mxu0
    %786 = vmatprep.mubr.bf16.mxu0 0
    %787 = vmatmul.mubr.bf16.gmra.mrb[0].mxu0 %v392
    %v788 = vpop.f32.mrb[0].mxu0
    %v789 = vadd.f32 0.0, %v788
    %v790 = vpop.f32.mrb[0].mxu0
    %v791 = vpop.f32.mrb[0].mxu0
    %v792 = vadd.f32 0.0, %v791
    %v793 = vpop.f32.mrb[0].mxu0
    %794 = vmatprep.mubr.bf16.mxu0 0
    %795 = vmatmul.mubr.bf16.gmra.mrb[0].mxu0 %v393
    %v796 = vpop.f32.mrb[0].mxu0
    %v797 = vadd.f32 0.0, %v796
    %v798 = vpop.f32.mrb[0].mxu0
    %v799 = vpop.f32.mrb[0].mxu0
    %v800 = vadd.f32 0.0, %v799
    %v801 = vpop.f32.mrb[0].mxu0
    %802 = vmatprep.mubr.bf16.mxu0 0
    %803 = vmatmul.mubr.bf16.gmra.mrb[0].mxu0 %v394
    %v804 = vpop.f32.mrb[0].mxu0
    %v805 = vadd.f32 0.0, %v804
    %v806 = vpop.f32.mrb[0].mxu0
    %v807 = vpop.f32.mrb[0].mxu0
    %v808 = vadd.f32 0.0, %v807
    %v809 = vpop.f32.mrb[0].mxu0
    %810 = vmatprep.mubr.bf16.mxu0 0
    %811 = vmatmul.mubr.bf16.gmra.mrb[0].mxu0 %v395
    %v812 = vpop.f32.mrb[0].mxu0
    %v813 = vadd.f32 0.0, %v812
    %v814 = vpop.f32.mrb[0].mxu0
    %v815 = vpop.f32.mrb[0].mxu0
    %v816 = vadd.f32 0.0, %v815
    %v817 = vpop.f32.mrb[0].mxu0
    %818 = vmatprep.mubr.bf16.mxu0 0
    %819 = vmatmul.mubr.bf16.gmra.mrb[0].mxu0 %v396
    %v820 = vpop.f32.mrb[0].mxu0
    %v821 = vadd.f32 0.0, %v820
    %v822 = vpop.f32.mrb[0].mxu0
    %v823 = vpop.f32.mrb[0].mxu0
    %v824 = vadd.f32 0.0, %v823
    %v825 = vpop.f32.mrb[0].mxu0
    %826 = vdwg.mxu0
    %v827 = vpack.c.bf16 %v768, %v765
    %v828 = vpack.c.bf16 %v776, %v773
    %v829 = vpack.c.bf16 %v784, %v781
    %v830 = vpack.c.bf16 %v792, %v789
    %v831 = vpack.c.bf16 %v800, %v797
    %v832 = vpack.c.bf16 %v808, %v805
    %v833 = vpack.c.bf16 %v816, %v813
    %v834 = vpack.c.bf16 %v824, %v821
    %v851 = vunpack.c.l.b16 %v711
    %v852 = vunpack.c.l.b16 %v712
    %v853 = vunpack.c.l.b16 %v713
    %v854 = vunpack.c.l.b16 %v714
    %v855 = vunpack.c.l.b16 %v715
    %v856 = vunpack.c.l.b16 %v716
    %v857 = vunpack.c.l.b16 %v717
    %v858 = vunpack.c.l.b16 %v718
    %v859 = vunpack.c.l.b16 %v719
    %v860 = vunpack.c.l.b16 %v720
    %v861 = vunpack.c.l.b16 %v721
    %v862 = vunpack.c.l.b16 %v722
    %v863 = vunpack.c.l.b16 %v723
    %v864 = vunpack.c.l.b16 %v724
    %v865 = vunpack.c.l.b16 %v725
    %v866 = vunpack.c.l.b16 %v726
    %v867 = vpack.c.b16 %v852, %v851
    %v868 = vpack.c.b16 %v854, %v853
    %v869 = vpack.c.b16 %v856, %v855
    %v870 = vpack.c.b16 %v858, %v857
    %v871 = vpack.c.b16 %v860, %v859
    %v872 = vpack.c.b16 %v862, %v861
    %v873 = vpack.c.b16 %v864, %v863
    %v874 = vpack.c.b16 %v866, %v865
    %883 = vmatprep.subr.bf16.mxu0 0
    %884 = vmatpush1.bf16.msra.mxu0 %v867
    %885 = vmatprep.subr.bf16.mxu0 0
    %886 = vmatpush1.bf16.msra.mxu0 %v868
    %887 = vmatprep.subr.bf16.mxu0 0
    %888 = vmatpush1.bf16.msra.mxu0 %v869
    %889 = vmatprep.subr.bf16.mxu0 0
    %890 = vmatpush1.bf16.msra.mxu0 %v870
    %891 = vmatprep.subr.bf16.mxu0 0
    %892 = vmatpush1.bf16.msra.mxu0 %v871
    %893 = vmatprep.subr.bf16.mxu0 0
    %894 = vmatpush1.bf16.msra.mxu0 %v872
    %895 = vmatprep.subr.bf16.mxu0 0
    %896 = vmatpush1.bf16.msra.mxu0 %v873
    %897 = vmatprep.subr.bf16.mxu0 0
    %898 = vmatpush1.bf16.msra.mxu0 %v874
    %899 = vmatprep.subr.bf16.mxu0 0
    %900 = vmatpush1.bf16.msra.mxu0 0
    %901 = vmatprep.subr.bf16.mxu0 0
    %902 = vmatpush1.bf16.msra.mxu0 0
    %903 = vmatprep.subr.bf16.mxu0 0
    %904 = vmatpush1.bf16.msra.mxu0 0
    %905 = vmatprep.subr.bf16.mxu0 0
    %906 = vmatpush1.bf16.msra.mxu0 0
    %907 = vmatprep.subr.bf16.mxu0 0
    %908 = vmatpush1.bf16.msra.mxu0 0
    %909 = vmatprep.subr.bf16.mxu0 0
    %910 = vmatpush1.bf16.msra.mxu0 0
    %911 = vmatprep.subr.bf16.mxu0 0
    %912 = vmatpush1.bf16.msra.mxu0 0
    %913 = vmatprep.subr.bf16.mxu0 0
    %914 = vmatpush1.bf16.msra.mxu0 0
    %915 = vmatprep.mubr.bf16.mxu0 0
    %916 = vmatmul.mubr.bf16.gmra.mrb[0].mxu0 %v827
    %v917 = vpop.f32.mrb[0].mxu0
    %v918 = vadd.f32 %v727, %v917
    %v919 = vpop.f32.mrb[0].mxu0
    %v920 = vpop.f32.mrb[0].mxu0
    %v921 = vadd.f32 %v727, %v920
    %v922 = vpop.f32.mrb[0].mxu0
    %923 = vmatprep.mubr.bf16.mxu0 0
    %924 = vmatmul.mubr.bf16.gmra.mrb[0].mxu0 %v828
    %v925 = vpop.f32.mrb[0].mxu0
    %v926 = vadd.f32 %v727, %v925
    %v927 = vpop.f32.mrb[0].mxu0
    %v928 = vpop.f32.mrb[0].mxu0
    %v929 = vadd.f32 %v727, %v928
    %v930 = vpop.f32.mrb[0].mxu0
    %931 = vmatprep.mubr.bf16.mxu0 0
    %932 = vmatmul.mubr.bf16.gmra.mrb[0].mxu0 %v829
    %v933 = vpop.f32.mrb[0].mxu0
    %v934 = vadd.f32 %v727, %v933
    %v935 = vpop.f32.mrb[0].mxu0
    %v936 = vpop.f32.mrb[0].mxu0
    %v937 = vadd.f32 %v727, %v936
    %v938 = vpop.f32.mrb[0].mxu0
    %939 = vmatprep.mubr.bf16.mxu0 0
    %940 = vmatmul.mubr.bf16.gmra.mrb[0].mxu0 %v830
    %v941 = vpop.f32.mrb[0].mxu0
    %v942 = vadd.f32 %v727, %v941
    %v943 = vpop.f32.mrb[0].mxu0
    %v944 = vpop.f32.mrb[0].mxu0
    %v945 = vadd.f32 %v727, %v944
    %v946 = vpop.f32.mrb[0].mxu0
    %947 = vmatprep.mubr.bf16.mxu0 0
    %948 = vmatmul.mubr.bf16.gmra.mrb[0].mxu0 %v831
    %v949 = vpop.f32.mrb[0].mxu0
    %v950 = vadd.f32 %v727, %v949
    %v951 = vpop.f32.mrb[0].mxu0
    %v952 = vpop.f32.mrb[0].mxu0
    %v953 = vadd.f32 %v727, %v952
    %v954 = vpop.f32.mrb[0].mxu0
    %955 = vmatprep.mubr.bf16.mxu0 0
    %956 = vmatmul.mubr.bf16.gmra.mrb[0].mxu0 %v832
    %v957 = vpop.f32.mrb[0].mxu0
    %v958 = vadd.f32 %v727, %v957
    %v959 = vpop.f32.mrb[0].mxu0
    %v960 = vpop.f32.mrb[0].mxu0
    %v961 = vadd.f32 %v727, %v960
    %v962 = vpop.f32.mrb[0].mxu0
    %963 = vmatprep.mubr.bf16.mxu0 0
    %964 = vmatmul.mubr.bf16.gmra.mrb[0].mxu0 %v833
    %v965 = vpop.f32.mrb[0].mxu0
    %v966 = vadd.f32 %v727, %v965
    %v967 = vpop.f32.mrb[0].mxu0
    %v968 = vpop.f32.mrb[0].mxu0
    %v969 = vadd.f32 %v727, %v968
    %v970 = vpop.f32.mrb[0].mxu0
    %971 = vmatprep.mubr.bf16.mxu0 0
    %972 = vmatmul.mubr.bf16.gmra.mrb[0].mxu0 %v834
    %v973 = vpop.f32.mrb[0].mxu0
    %v974 = vadd.f32 %v727, %v973
    %v975 = vpop.f32.mrb[0].mxu0
    %v976 = vpop.f32.mrb[0].mxu0
    %v977 = vadd.f32 %v727, %v976
    %v978 = vpop.f32.mrb[0].mxu0
    %979 = vdwg.mxu0
    %v980 = vmax.f32 %v918, 0.0
    %v981 = vmax.f32 %v921, 0.0
    %v982 = vmax.f32 %v926, 0.0
    %v983 = vmax.f32 %v929, 0.0
    %v984 = vmax.f32 %v934, 0.0
    %v985 = vmax.f32 %v937, 0.0
    %v986 = vmax.f32 %v942, 0.0
    %v987 = vmax.f32 %v945, 0.0
    %v988 = vmax.f32 %v950, 0.0
    %v989 = vmax.f32 %v953, 0.0
    %v990 = vmax.f32 %v958, 0.0
    %v991 = vmax.f32 %v961, 0.0
    %v992 = vmax.f32 %v966, 0.0
    %v993 = vmax.f32 %v969, 0.0
    %v994 = vmax.f32 %v974, 0.0
    %v995 = vmax.f32 %v977, 0.0
    %v996 = vmul.f32 %v980, %v728
    %v997 = vmul.f32 %v981, %v728
    %v998 = vmul.f32 %v982, %v728
    %v999 = vmul.f32 %v983, %v728
    %v1000 = vmul.f32 %v984, %v728
    %v1001 = vmul.f32 %v985, %v728
    %v1002 = vmul.f32 %v986, %v728
    %v1003 = vmul.f32 %v987, %v728
    %v1004 = vmul.f32 %v988, %v728
    %v1005 = vmul.f32 %v989, %v728
    %v1006 = vmul.f32 %v990, %v728
    %v1007 = vmul.f32 %v991, %v728
    %v1008 = vmul.f32 %v992, %v728
    %v1009 = vmul.f32 %v993, %v728
    %v1010 = vmul.f32 %v994, %v728
    %v1011 = vmul.f32 %v995, %v728
    %v1012 = vadd.f32 %v996, %v729
    %v1013 = vadd.f32 %v997, %v729
    %v1014 = vadd.f32 %v998, %v729
    %v1015 = vadd.f32 %v999, %v729
    %v1016 = vadd.f32 %v1000, %v729
    %v1017 = vadd.f32 %v1001, %v729
    %v1018 = vadd.f32 %v1002, %v729
    %v1019 = vadd.f32 %v1003, %v729
    %v1020 = vadd.f32 %v1004, %v729
    %v1021 = vadd.f32 %v1005, %v729
    %v1022 = vadd.f32 %v1006, %v729
    %v1023 = vadd.f32 %v1007, %v729
    %v1024 = vadd.f32 %v1008, %v729
    %v1025 = vadd.f32 %v1009, %v729
    %v1026 = vadd.f32 %v1010, %v729
    %v1027 = vadd.f32 %v1011, %v729
    %v1028 = vpack.c.bf16 %v1013, %v1012
    %v1029 = vpack.c.bf16 %v1015, %v1014
    %v1030 = vpack.c.bf16 %v1017, %v1016
    %v1031 = vpack.c.bf16 %v1019, %v1018
    %v1032 = vpack.c.bf16 %v1021, %v1020
    %v1033 = vpack.c.bf16 %v1023, %v1022
    %v1034 = vpack.c.bf16 %v1025, %v1024
    %v1035 = vpack.c.bf16 %v1027, %v1026
    %v1036 = vld [vmem:[#allocation8 + $0x180] sm:$0xf]
    %v1037 = vld [vmem:[#allocation8 + $0x188] sm:$0xf]
    %v1038 = vld [vmem:[#allocation8 + $0x190] sm:$0xf]
    %v1039 = vld [vmem:[#allocation8 + $0x198] sm:$0xf]
    %v1040 = vld [vmem:[#allocation8 + $0x1a0] sm:$0xf]
    %v1041 = vld [vmem:[#allocation8 + $0x1a8] sm:$0xf]
    %v1042 = vld [vmem:[#allocation8 + $0x1b0] sm:$0xf]
    %v1043 = vld [vmem:[#allocation8 + $0x1b8] sm:$0xf]
    %v1044 = vld [vmem:[#allocation8 + $0x1c0] sm:$0xf]
    %v1045 = vld [vmem:[#allocation8 + $0x1c8] sm:$0xf]
    %v1046 = vld [vmem:[#allocation8 + $0x1d0] sm:$0xf]
    %v1047 = vld [vmem:[#allocation8 + $0x1d8] sm:$0xf]
    %v1048 = vld [vmem:[#allocation8 + $0x1e0] sm:$0xf]
    %v1049 = vld [vmem:[#allocation8 + $0x1e8] sm:$0xf]
    %v1050 = vld [vmem:[#allocation8 + $0x1f0] sm:$0xf]
    %v1051 = vld [vmem:[#allocation8 + $0x1f8] sm:$0xf]
    %v1052 = vld [vmem:[#allocation10 + $0x18] ss:$0 sm:$0xff]
    %v1053 = vld [vmem:[#allocation10 + $0x19] ss:$0 sm:$0xff]
    %v1054 = vld [vmem:[#allocation10 + $0x1a] ss:$0 sm:$0xff]
    %1055 = vmatprep.subr.bf16.mxu0 0
    %1056 = vmatpush1.bf16.msra.mxu0 %v1028
    %1057 = vmatprep.subr.bf16.mxu0 0
    %1058 = vmatpush1.bf16.msra.mxu0 %v1029
    %1059 = vmatprep.subr.bf16.mxu0 0
    %1060 = vmatpush1.bf16.msra.mxu0 %v1030
    %1061 = vmatprep.subr.bf16.mxu0 0
    %1062 = vmatpush1.bf16.msra.mxu0 %v1031
    %1063 = vmatprep.subr.bf16.mxu0 0
    %1064 = vmatpush1.bf16.msra.mxu0 %v1032
    %1065 = vmatprep.subr.bf16.mxu0 0
    %1066 = vmatpush1.bf16.msra.mxu0 %v1033
    %1067 = vmatprep.subr.bf16.mxu0 0
    %1068 = vmatpush1.bf16.msra.mxu0 %v1034
    %1069 = vmatprep.subr.bf16.mxu0 0
    %1070 = vmatpush1.bf16.msra.mxu0 %v1035
    %1071 = vmatprep.subr.bf16.mxu0 0
    %1072 = vmatpush1.bf16.msra.mxu0 0
    %1073 = vmatprep.subr.bf16.mxu0 0
    %1074 = vmatpush1.bf16.msra.mxu0 0
    %1075 = vmatprep.subr.bf16.mxu0 0
    %1076 = vmatpush1.bf16.msra.mxu0 0
    %1077 = vmatprep.subr.bf16.mxu0 0
    %1078 = vmatpush1.bf16.msra.mxu0 0
    %1079 = vmatprep.subr.bf16.mxu0 0
    %1080 = vmatpush1.bf16.msra.mxu0 0
    %1081 = vmatprep.subr.bf16.mxu0 0
    %1082 = vmatpush1.bf16.msra.mxu0 0
    %1083 = vmatprep.subr.bf16.mxu0 0
    %1084 = vmatpush1.bf16.msra.mxu0 0
    %1085 = vmatprep.subr.bf16.mxu0 0
    %1086 = vmatpush1.bf16.msra.mxu0 0
    %1087 = vmatprep.mubr.bf16.mxu0 0
    %1088 = vmatmul.mubr.bf16.gmra.mrb[0].mxu0 %v389
    %v1089 = vpop.f32.mrb[0].mxu0
    %v1090 = vadd.f32 0.0, %v1089
    %v1091 = vpop.f32.mrb[0].mxu0
    %v1092 = vpop.f32.mrb[0].mxu0
    %v1093 = vadd.f32 0.0, %v1092
    %v1094 = vpop.f32.mrb[0].mxu0
    %1095 = vmatprep.mubr.bf16.mxu0 0
    %1096 = vmatmul.mubr.bf16.gmra.mrb[0].mxu0 %v390
    %v1097 = vpop.f32.mrb[0].mxu0
    %v1098 = vadd.f32 0.0, %v1097
    %v1099 = vpop.f32.mrb[0].mxu0
    %v1100 = vpop.f32.mrb[0].mxu0
    %v1101 = vadd.f32 0.0, %v1100
    %v1102 = vpop.f32.mrb[0].mxu0
    %1103 = vmatprep.mubr.bf16.mxu0 0
    %1104 = vmatmul.mubr.bf16.gmra.mrb[0].mxu0 %v391
    %v1105 = vpop.f32.mrb[0].mxu0
    %v1106 = vadd.f32 0.0, %v1105
    %v1107 = vpop.f32.mrb[0].mxu0
    %v1108 = vpop.f32.mrb[0].mxu0
    %v1109 = vadd.f32 0.0, %v1108
    %v1110 = vpop.f32.mrb[0].mxu0
    %1111 = vmatprep.mubr.bf16.mxu0 0
    %1112 = vmatmul.mubr.bf16.gmra.mrb[0].mxu0 %v392
    %v1113 = vpop.f32.mrb[0].mxu0
    %v1114 = vadd.f32 0.0, %v1113
    %v1115 = vpop.f32.mrb[0].mxu0
    %v1116 = vpop.f32.mrb[0].mxu0
    %v1117 = vadd.f32 0.0, %v1116
    %v1118 = vpop.f32.mrb[0].mxu0
    %1119 = vmatprep.mubr.bf16.mxu0 0
    %1120 = vmatmul.mubr.bf16.gmra.mrb[0].mxu0 %v393
    %v1121 = vpop.f32.mrb[0].mxu0
    %v1122 = vadd.f32 0.0, %v1121
    %v1123 = vpop.f32.mrb[0].mxu0
    %v1124 = vpop.f32.mrb[0].mxu0
    %v1125 = vadd.f32 0.0, %v1124
    %v1126 = vpop.f32.mrb[0].mxu0
    %1127 = vmatprep.mubr.bf16.mxu0 0
    %1128 = vmatmul.mubr.bf16.gmra.mrb[0].mxu0 %v394
    %v1129 = vpop.f32.mrb[0].mxu0
    %v1130 = vadd.f32 0.0, %v1129
    %v1131 = vpop.f32.mrb[0].mxu0
    %v1132 = vpop.f32.mrb[0].mxu0
    %v1133 = vadd.f32 0.0, %v1132
    %v1134 = vpop.f32.mrb[0].mxu0
    %1135 = vmatprep.mubr.bf16.mxu0 0
    %1136 = vmatmul.mubr.bf16.gmra.mrb[0].mxu0 %v395
    %v1137 = vpop.f32.mrb[0].mxu0
    %v1138 = vadd.f32 0.0, %v1137
    %v1139 = vpop.f32.mrb[0].mxu0
    %v1140 = vpop.f32.mrb[0].mxu0
    %v1141 = vadd.f32 0.0, %v1140
    %v1142 = vpop.f32.mrb[0].mxu0
    %1143 = vmatprep.mubr.bf16.mxu0 0
    %1144 = vmatmul.mubr.bf16.gmra.mrb[0].mxu0 %v396
    %v1145 = vpop.f32.mrb[0].mxu0
    %v1146 = vadd.f32 0.0, %v1145
    %v1147 = vpop.f32.mrb[0].mxu0
    %v1148 = vpop.f32.mrb[0].mxu0
    %v1149 = vadd.f32 0.0, %v1148
    %v1150 = vpop.f32.mrb[0].mxu0
    %1151 = vdwg.mxu0
    %v1152 = vpack.c.bf16 %v1093, %v1090
    %v1153 = vpack.c.bf16 %v1101, %v1098
    %v1154 = vpack.c.bf16 %v1109, %v1106
    %v1155 = vpack.c.bf16 %v1117, %v1114
    %v1156 = vpack.c.bf16 %v1125, %v1122
    %v1157 = vpack.c.bf16 %v1133, %v1130
    %v1158 = vpack.c.bf16 %v1141, %v1138
    %v1159 = vpack.c.bf16 %v1149, %v1146
    %v1176 = vunpack.c.l.b16 %v1036
    %v1177 = vunpack.c.l.b16 %v1037
    %v1178 = vunpack.c.l.b16 %v1038
    %v1179 = vunpack.c.l.b16 %v1039
    %v1180 = vunpack.c.l.b16 %v1040
    %v1181 = vunpack.c.l.b16 %v1041
    %v1182 = vunpack.c.l.b16 %v1042
    %v1183 = vunpack.c.l.b16 %v1043
    %v1184 = vunpack.c.l.b16 %v1044
    %v1185 = vunpack.c.l.b16 %v1045
    %v1186 = vunpack.c.l.b16 %v1046
    %v1187 = vunpack.c.l.b16 %v1047
    %v1188 = vunpack.c.l.b16 %v1048
    %v1189 = vunpack.c.l.b16 %v1049
    %v1190 = vunpack.c.l.b16 %v1050
    %v1191 = vunpack.c.l.b16 %v1051
    %v1192 = vpack.c.b16 %v1177, %v1176
    %v1193 = vpack.c.b16 %v1179, %v1178
    %v1194 = vpack.c.b16 %v1181, %v1180
    %v1195 = vpack.c.b16 %v1183, %v1182
    %v1196 = vpack.c.b16 %v1185, %v1184
    %v1197 = vpack.c.b16 %v1187, %v1186
    %v1198 = vpack.c.b16 %v1189, %v1188
    %v1199 = vpack.c.b16 %v1191, %v1190
    %1208 = vmatprep.subr.bf16.mxu0 0
    %1209 = vmatpush1.bf16.msra.mxu0 %v1192
    %1210 = vmatprep.subr.bf16.mxu0 0
    %1211 = vmatpush1.bf16.msra.mxu0 %v1193
    %1212 = vmatprep.subr.bf16.mxu0 0
    %1213 = vmatpush1.bf16.msra.mxu0 %v1194
    %1214 = vmatprep.subr.bf16.mxu0 0
    %1215 = vmatpush1.bf16.msra.mxu0 %v1195
    %1216 = vmatprep.subr.bf16.mxu0 0
    %1217 = vmatpush1.bf16.msra.mxu0 %v1196
    %1218 = vmatprep.subr.bf16.mxu0 0
    %1219 = vmatpush1.bf16.msra.mxu0 %v1197
    %1220 = vmatprep.subr.bf16.mxu0 0
    %1221 = vmatpush1.bf16.msra.mxu0 %v1198
    %1222 = vmatprep.subr.bf16.mxu0 0
    %1223 = vmatpush1.bf16.msra.mxu0 %v1199
    %1224 = vmatprep.subr.bf16.mxu0 0
    %1225 = vmatpush1.bf16.msra.mxu0 0
    %1226 = vmatprep.subr.bf16.mxu0 0
    %1227 = vmatpush1.bf16.msra.mxu0 0
    %1228 = vmatprep.subr.bf16.mxu0 0
    %1229 = vmatpush1.bf16.msra.mxu0 0
    %1230 = vmatprep.subr.bf16.mxu0 0
    %1231 = vmatpush1.bf16.msra.mxu0 0
    %1232 = vmatprep.subr.bf16.mxu0 0
    %1233 = vmatpush1.bf16.msra.mxu0 0
    %1234 = vmatprep.subr.bf16.mxu0 0
    %1235 = vmatpush1.bf16.msra.mxu0 0
    %1236 = vmatprep.subr.bf16.mxu0 0
    %1237 = vmatpush1.bf16.msra.mxu0 0
    %1238 = vmatprep.subr.bf16.mxu0 0
    %1239 = vmatpush1.bf16.msra.mxu0 0
    %1240 = vmatprep.mubr.bf16.mxu0 0
    %1241 = vmatmul.mubr.bf16.gmra.mrb[0].mxu0 %v1152
    %v1242 = vpop.f32.mrb[0].mxu0
    %v1243 = vadd.f32 %v1052, %v1242
    %v1244 = vpop.f32.mrb[0].mxu0
    %v1245 = vpop.f32.mrb[0].mxu0
    %v1246 = vadd.f32 %v1052, %v1245
    %v1247 = vpop.f32.mrb[0].mxu0
    %1248 = vmatprep.mubr.bf16.mxu0 0
    %1249 = vmatmul.mubr.bf16.gmra.mrb[0].mxu0 %v1153
    %v1250 = vpop.f32.mrb[0].mxu0
    %v1251 = vadd.f32 %v1052, %v1250
    %v1252 = vpop.f32.mrb[0].mxu0
    %v1253 = vpop.f32.mrb[0].mxu0
    %v1254 = vadd.f32 %v1052, %v1253
    %v1255 = vpop.f32.mrb[0].mxu0
    %1256 = vmatprep.mubr.bf16.mxu0 0
    %1257 = vmatmul.mubr.bf16.gmra.mrb[0].mxu0 %v1154
    %v1258 = vpop.f32.mrb[0].mxu0
    %v1259 = vadd.f32 %v1052, %v1258
    %v1260 = vpop.f32.mrb[0].mxu0
    %v1261 = vpop.f32.mrb[0].mxu0
    %v1262 = vadd.f32 %v1052, %v1261
    %v1263 = vpop.f32.mrb[0].mxu0
    %1264 = vmatprep.mubr.bf16.mxu0 0
    %1265 = vmatmul.mubr.bf16.gmra.mrb[0].mxu0 %v1155
    %v1266 = vpop.f32.mrb[0].mxu0
    %v1267 = vadd.f32 %v1052, %v1266
    %v1268 = vpop.f32.mrb[0].mxu0
    %v1269 = vpop.f32.mrb[0].mxu0
    %v1270 = vadd.f32 %v1052, %v1269
    %v1271 = vpop.f32.mrb[0].mxu0
    %1272 = vmatprep.mubr.bf16.mxu0 0
    %1273 = vmatmul.mubr.bf16.gmra.mrb[0].mxu0 %v1156
    %v1274 = vpop.f32.mrb[0].mxu0
    %v1275 = vadd.f32 %v1052, %v1274
    %v1276 = vpop.f32.mrb[0].mxu0
    %v1277 = vpop.f32.mrb[0].mxu0
    %v1278 = vadd.f32 %v1052, %v1277
    %v1279 = vpop.f32.mrb[0].mxu0
    %1280 = vmatprep.mubr.bf16.mxu0 0
    %1281 = vmatmul.mubr.bf16.gmra.mrb[0].mxu0 %v1157
    %v1282 = vpop.f32.mrb[0].mxu0
    %v1283 = vadd.f32 %v1052, %v1282
    %v1284 = vpop.f32.mrb[0].mxu0
    %v1285 = vpop.f32.mrb[0].mxu0
    %v1286 = vadd.f32 %v1052, %v1285
    %v1287 = vpop.f32.mrb[0].mxu0
    %1288 = vmatprep.mubr.bf16.mxu0 0
    %1289 = vmatmul.mubr.bf16.gmra.mrb[0].mxu0 %v1158
    %v1290 = vpop.f32.mrb[0].mxu0
    %v1291 = vadd.f32 %v1052, %v1290
    %v1292 = vpop.f32.mrb[0].mxu0
    %v1293 = vpop.f32.mrb[0].mxu0
    %v1294 = vadd.f32 %v1052, %v1293
    %v1295 = vpop.f32.mrb[0].mxu0
    %1296 = vmatprep.mubr.bf16.mxu0 0
    %1297 = vmatmul.mubr.bf16.gmra.mrb[0].mxu0 %v1159
    %v1298 = vpop.f32.mrb[0].mxu0
    %v1299 = vadd.f32 %v1052, %v1298
    %v1300 = vpop.f32.mrb[0].mxu0
    %v1301 = vpop.f32.mrb[0].mxu0
    %v1302 = vadd.f32 %v1052, %v1301
    %v1303 = vpop.f32.mrb[0].mxu0
    %1304 = vdwg.mxu0
    %v1305 = vmax.f32 %v1243, 0.0
    %v1306 = vmax.f32 %v1246, 0.0
    %v1307 = vmax.f32 %v1251, 0.0
    %v1308 = vmax.f32 %v1254, 0.0
    %v1309 = vmax.f32 %v1259, 0.0
    %v1310 = vmax.f32 %v1262, 0.0
    %v1311 = vmax.f32 %v1267, 0.0
    %v1312 = vmax.f32 %v1270, 0.0
    %v1313 = vmax.f32 %v1275, 0.0
    %v1314 = vmax.f32 %v1278, 0.0
    %v1315 = vmax.f32 %v1283, 0.0
    %v1316 = vmax.f32 %v1286, 0.0
    %v1317 = vmax.f32 %v1291, 0.0
    %v1318 = vmax.f32 %v1294, 0.0
    %v1319 = vmax.f32 %v1299, 0.0
    %v1320 = vmax.f32 %v1302, 0.0
    %v1321 = vmul.f32 %v1305, %v1053
    %v1322 = vmul.f32 %v1306, %v1053
    %v1323 = vmul.f32 %v1307, %v1053
    %v1324 = vmul.f32 %v1308, %v1053
    %v1325 = vmul.f32 %v1309, %v1053
    %v1326 = vmul.f32 %v1310, %v1053
    %v1327 = vmul.f32 %v1311, %v1053
    %v1328 = vmul.f32 %v1312, %v1053
    %v1329 = vmul.f32 %v1313, %v1053
    %v1330 = vmul.f32 %v1314, %v1053
    %v1331 = vmul.f32 %v1315, %v1053
    %v1332 = vmul.f32 %v1316, %v1053
    %v1333 = vmul.f32 %v1317, %v1053
    %v1334 = vmul.f32 %v1318, %v1053
    %v1335 = vmul.f32 %v1319, %v1053
    %v1336 = vmul.f32 %v1320, %v1053
    %v1337 = vadd.f32 %v1321, %v1054
    %v1338 = vadd.f32 %v1322, %v1054
    %v1339 = vadd.f32 %v1323, %v1054
    %v1340 = vadd.f32 %v1324, %v1054
    %v1341 = vadd.f32 %v1325, %v1054
    %v1342 = vadd.f32 %v1326, %v1054
    %v1343 = vadd.f32 %v1327, %v1054
    %v1344 = vadd.f32 %v1328, %v1054
    %v1345 = vadd.f32 %v1329, %v1054
    %v1346 = vadd.f32 %v1330, %v1054
    %v1347 = vadd.f32 %v1331, %v1054
    %v1348 = vadd.f32 %v1332, %v1054
    %v1349 = vadd.f32 %v1333, %v1054
    %v1350 = vadd.f32 %v1334, %v1054
    %v1351 = vadd.f32 %v1335, %v1054
    %v1352 = vadd.f32 %v1336, %v1054
    %v1353 = vpack.c.bf16 %v1338, %v1337
    %v1354 = vpack.c.bf16 %v1340, %v1339
    %v1355 = vpack.c.bf16 %v1342, %v1341
    %v1356 = vpack.c.bf16 %v1344, %v1343
    %v1357 = vpack.c.bf16 %v1346, %v1345
    %v1358 = vpack.c.bf16 %v1348, %v1347
    %v1359 = vpack.c.bf16 %v1350, %v1349
    %v1360 = vpack.c.bf16 %v1352, %v1351
    %v1361 = vld [vmem:[#allocation8 + $0x200] sm:$0xff]
    %v1362 = vld [vmem:[#allocation8 + $0x208] sm:$0xff]
    %v1363 = vld [vmem:[#allocation8 + $0x210] sm:$0xff]
    %v1364 = vld [vmem:[#allocation8 + $0x218] sm:$0xff]
    %v1365 = vld [vmem:[#allocation8 + $0x220] sm:$0xff]
    %v1366 = vld [vmem:[#allocation8 + $0x228] sm:$0xff]
    %v1367 = vld [vmem:[#allocation8 + $0x230] sm:$0xff]
    %v1368 = vld [vmem:[#allocation8 + $0x238] sm:$0xff]
    %v1369 = vld [vmem:[#allocation8 + $0x240] sm:$0xff]
    %v1370 = vld [vmem:[#allocation8 + $0x248] sm:$0xff]
    %v1371 = vld [vmem:[#allocation8 + $0x250] sm:$0xff]
    %v1372 = vld [vmem:[#allocation8 + $0x258] sm:$0xff]
    %v1373 = vld [vmem:[#allocation8 + $0x260] sm:$0xff]
    %v1374 = vld [vmem:[#allocation8 + $0x268] sm:$0xff]
    %v1375 = vld [vmem:[#allocation8 + $0x270] sm:$0xff]
    %v1376 = vld [vmem:[#allocation8 + $0x278] sm:$0xff]
    %s1377 = scalar_lea.vmem [#allocation10], 32
    %v1378 = vld [vmem:[%s1377] ss:$8 sm:$0x3]
    %s1379 = scalar_lea.vmem [#allocation10], 33
    %v1380 = vld [vmem:[%s1379] ss:$8 sm:$0x3]
    %s1381 = scalar_lea.vmem [#allocation10], 34
    %v1382 = vld [vmem:[%s1381] ss:$8 sm:$0x3]
    %1383 = vmatprep.subr.bf16.mxu0 0
    %1384 = vmatpush1.bf16.msra.mxu0 %v1353
    %1385 = vmatprep.subr.bf16.mxu0 0
    %1386 = vmatpush1.bf16.msra.mxu0 %v1354
    %1387 = vmatprep.subr.bf16.mxu0 0
    %1388 = vmatpush1.bf16.msra.mxu0 %v1355
    %1389 = vmatprep.subr.bf16.mxu0 0
    %1390 = vmatpush1.bf16.msra.mxu0 %v1356
    %1391 = vmatprep.subr.bf16.mxu0 0
    %1392 = vmatpush1.bf16.msra.mxu0 %v1357
    %1393 = vmatprep.subr.bf16.mxu0 0
    %1394 = vmatpush1.bf16.msra.mxu0 %v1358
    %1395 = vmatprep.subr.bf16.mxu0 0
    %1396 = vmatpush1.bf16.msra.mxu0 %v1359
    %1397 = vmatprep.subr.bf16.mxu0 0
    %1398 = vmatpush1.bf16.msra.mxu0 %v1360
    %1399 = vmatprep.subr.bf16.mxu0 0
    %1400 = vmatpush1.bf16.msra.mxu0 0
    %1401 = vmatprep.subr.bf16.mxu0 0
    %1402 = vmatpush1.bf16.msra.mxu0 0
    %1403 = vmatprep.subr.bf16.mxu0 0
    %1404 = vmatpush1.bf16.msra.mxu0 0
    %1405 = vmatprep.subr.bf16.mxu0 0
    %1406 = vmatpush1.bf16.msra.mxu0 0
    %1407 = vmatprep.subr.bf16.mxu0 0
    %1408 = vmatpush1.bf16.msra.mxu0 0
    %1409 = vmatprep.subr.bf16.mxu0 0
    %1410 = vmatpush1.bf16.msra.mxu0 0
    %1411 = vmatprep.subr.bf16.mxu0 0
    %1412 = vmatpush1.bf16.msra.mxu0 0
    %1413 = vmatprep.subr.bf16.mxu0 0
    %1414 = vmatpush1.bf16.msra.mxu0 0
    %1415 = vmatprep.mubr.bf16.mxu0 0
    %1416 = vmatmul.mubr.bf16.gmra.mrb[0].mxu0 %v389
    %v1417 = vpop.f32.mrb[0].mxu0
    %v1418 = vadd.f32 0.0, %v1417
    %v1419 = vpop.f32.mrb[0].mxu0
    %v1420 = vpop.f32.mrb[0].mxu0
    %v1421 = vadd.f32 0.0, %v1420
    %v1422 = vpop.f32.mrb[0].mxu0
    %1423 = vmatprep.mubr.bf16.mxu0 0
    %1424 = vmatmul.mubr.bf16.gmra.mrb[0].mxu0 %v390
    %v1425 = vpop.f32.mrb[0].mxu0
    %v1426 = vadd.f32 0.0, %v1425
    %v1427 = vpop.f32.mrb[0].mxu0
    %v1428 = vpop.f32.mrb[0].mxu0
    %v1429 = vadd.f32 0.0, %v1428
    %v1430 = vpop.f32.mrb[0].mxu0
    %1431 = vmatprep.mubr.bf16.mxu0 0
    %1432 = vmatmul.mubr.bf16.gmra.mrb[0].mxu0 %v391
    %v1433 = vpop.f32.mrb[0].mxu0
    %v1434 = vadd.f32 0.0, %v1433
    %v1435 = vpop.f32.mrb[0].mxu0
    %v1436 = vpop.f32.mrb[0].mxu0
    %v1437 = vadd.f32 0.0, %v1436
    %v1438 = vpop.f32.mrb[0].mxu0
    %1439 = vmatprep.mubr.bf16.mxu0 0
    %1440 = vmatmul.mubr.bf16.gmra.mrb[0].mxu0 %v392
    %v1441 = vpop.f32.mrb[0].mxu0
    %v1442 = vadd.f32 0.0, %v1441
    %v1443 = vpop.f32.mrb[0].mxu0
    %v1444 = vpop.f32.mrb[0].mxu0
    %v1445 = vadd.f32 0.0, %v1444
    %v1446 = vpop.f32.mrb[0].mxu0
    %1447 = vmatprep.mubr.bf16.mxu0 0
    %1448 = vmatmul.mubr.bf16.gmra.mrb[0].mxu0 %v393
    %v1449 = vpop.f32.mrb[0].mxu0
    %v1450 = vadd.f32 0.0, %v1449
    %v1451 = vpop.f32.mrb[0].mxu0
    %v1452 = vpop.f32.mrb[0].mxu0
    %v1453 = vadd.f32 0.0, %v1452
    %v1454 = vpop.f32.mrb[0].mxu0
    %1455 = vmatprep.mubr.bf16.mxu0 0
    %1456 = vmatmul.mubr.bf16.gmra.mrb[0].mxu0 %v394
    %v1457 = vpop.f32.mrb[0].mxu0
    %v1458 = vadd.f32 0.0, %v1457
    %v1459 = vpop.f32.mrb[0].mxu0
    %v1460 = vpop.f32.mrb[0].mxu0
    %v1461 = vadd.f32 0.0, %v1460
    %v1462 = vpop.f32.mrb[0].mxu0
    %1463 = vmatprep.mubr.bf16.mxu0 0
    %1464 = vmatmul.mubr.bf16.gmra.mrb[0].mxu0 %v395
    %v1465 = vpop.f32.mrb[0].mxu0
    %v1466 = vadd.f32 0.0, %v1465
    %v1467 = vpop.f32.mrb[0].mxu0
    %v1468 = vpop.f32.mrb[0].mxu0
    %v1469 = vadd.f32 0.0, %v1468
    %v1470 = vpop.f32.mrb[0].mxu0
    %1471 = vmatprep.mubr.bf16.mxu0 0
    %1472 = vmatmul.mubr.bf16.gmra.mrb[0].mxu0 %v396
    %v1473 = vpop.f32.mrb[0].mxu0
    %v1474 = vadd.f32 0.0, %v1473
    %v1475 = vpop.f32.mrb[0].mxu0
    %v1476 = vpop.f32.mrb[0].mxu0
    %v1477 = vadd.f32 0.0, %v1476
    %v1478 = vpop.f32.mrb[0].mxu0
    %1479 = vdwg.mxu0
    %v1480 = vpack.c.bf16 %v1421, %v1418
    %v1481 = vpack.c.bf16 %v1429, %v1426
    %v1482 = vpack.c.bf16 %v1437, %v1434
    %v1483 = vpack.c.bf16 %v1445, %v1442
    %v1484 = vpack.c.bf16 %v1453, %v1450
    %v1485 = vpack.c.bf16 %v1461, %v1458
    %v1486 = vpack.c.bf16 %v1469, %v1466
    %v1487 = vpack.c.bf16 %v1477, %v1474
    %v1489 = vlaneseq
    %v1490 = vshrl.u32 %v1489, 7
    %v1491 = vsub.s32 0, %v1490
    %v1492 = vrot.slane %v1378, %v1491
    %v1493 = vlaneseq
    %v1494 = vshrl.u32 %v1493, 7
    %v1495 = vsub.s32 1, %v1494
    %v1496 = vrot.slane %v1378, %v1495
    %v1515 = vunpack.c.l.b16 %v1361
    %v1516 = vunpack.c.h.b16 %v1361
    %v1517 = vunpack.c.l.b16 %v1362
    %v1518 = vunpack.c.h.b16 %v1362
    %v1519 = vunpack.c.l.b16 %v1363
    %v1520 = vunpack.c.h.b16 %v1363
    %v1521 = vunpack.c.l.b16 %v1364
    %v1522 = vunpack.c.h.b16 %v1364
    %v1523 = vunpack.c.l.b16 %v1365
    %v1524 = vunpack.c.h.b16 %v1365
    %v1525 = vunpack.c.l.b16 %v1366
    %v1526 = vunpack.c.h.b16 %v1366
    %v1527 = vunpack.c.l.b16 %v1367
    %v1528 = vunpack.c.h.b16 %v1367
    %v1529 = vunpack.c.l.b16 %v1368
    %v1530 = vunpack.c.h.b16 %v1368
    %v1531 = vunpack.c.l.b16 %v1369
    %v1532 = vunpack.c.h.b16 %v1369
    %v1533 = vunpack.c.l.b16 %v1370
    %v1534 = vunpack.c.h.b16 %v1370
    %v1535 = vunpack.c.l.b16 %v1371
    %v1536 = vunpack.c.h.b16 %v1371
    %v1537 = vunpack.c.l.b16 %v1372
    %v1538 = vunpack.c.h.b16 %v1372
    %v1539 = vunpack.c.l.b16 %v1373
    %v1540 = vunpack.c.h.b16 %v1373
    %v1541 = vunpack.c.l.b16 %v1374
    %v1542 = vunpack.c.h.b16 %v1374
    %v1543 = vunpack.c.l.b16 %v1375
    %v1544 = vunpack.c.h.b16 %v1375
    %v1545 = vunpack.c.l.b16 %v1376
    %v1546 = vunpack.c.h.b16 %v1376
    %v1547 = vpack.c.b16 %v1517, %v1515
    %v1548 = vpack.c.b16 %v1518, %v1516
    %v1549 = vpack.c.b16 %v1521, %v1519
    %v1550 = vpack.c.b16 %v1522, %v1520
    %v1551 = vpack.c.b16 %v1525, %v1523
    %v1552 = vpack.c.b16 %v1526, %v1524
    %v1553 = vpack.c.b16 %v1529, %v1527
    %v1554 = vpack.c.b16 %v1530, %v1528
    %v1555 = vpack.c.b16 %v1533, %v1531
    %v1556 = vpack.c.b16 %v1534, %v1532
    %v1557 = vpack.c.b16 %v1537, %v1535
    %v1558 = vpack.c.b16 %v1538, %v1536
    %v1559 = vpack.c.b16 %v1541, %v1539
    %v1560 = vpack.c.b16 %v1542, %v1540
    %v1561 = vpack.c.b16 %v1545, %v1543
    %v1562 = vpack.c.b16 %v1546, %v1544
    %1579 = vmatprep.subr.bf16.mxu0 %v1548
    %1580 = vmatpush1.bf16.msra.mxu0 %v1547
    %1581 = vmatprep.subr.bf16.mxu0 %v1550
    %1582 = vmatpush1.bf16.msra.mxu0 %v1549
    %1583 = vmatprep.subr.bf16.mxu0 %v1552
    %1584 = vmatpush1.bf16.msra.mxu0 %v1551
    %1585 = vmatprep.subr.bf16.mxu0 %v1554
    %1586 = vmatpush1.bf16.msra.mxu0 %v1553
    %1587 = vmatprep.subr.bf16.mxu0 %v1556
    %1588 = vmatpush1.bf16.msra.mxu0 %v1555
    %1589 = vmatprep.subr.bf16.mxu0 %v1558
    %1590 = vmatpush1.bf16.msra.mxu0 %v1557
    %1591 = vmatprep.subr.bf16.mxu0 %v1560
    %1592 = vmatpush1.bf16.msra.mxu0 %v1559
    %1593 = vmatprep.subr.bf16.mxu0 %v1562
    %1594 = vmatpush1.bf16.msra.mxu0 %v1561
    %1595 = vmatprep.subr.bf16.mxu0 0
    %1596 = vmatpush1.bf16.msra.mxu0 0
    %1597 = vmatprep.subr.bf16.mxu0 0
    %1598 = vmatpush1.bf16.msra.mxu0 0
    %1599 = vmatprep.subr.bf16.mxu0 0
    %1600 = vmatpush1.bf16.msra.mxu0 0
    %1601 = vmatprep.subr.bf16.mxu0 0
    %1602 = vmatpush1.bf16.msra.mxu0 0
    %1603 = vmatprep.subr.bf16.mxu0 0
    %1604 = vmatpush1.bf16.msra.mxu0 0
    %1605 = vmatprep.subr.bf16.mxu0 0
    %1606 = vmatpush1.bf16.msra.mxu0 0
    %1607 = vmatprep.subr.bf16.mxu0 0
    %1608 = vmatpush1.bf16.msra.mxu0 0
    %1609 = vmatprep.subr.bf16.mxu0 0
    %1610 = vmatpush1.bf16.msra.mxu0 0
    %1611 = vmatprep.mubr.bf16.mxu0 0
    %1612 = vmatmul.mubr.bf16.gmra.mrb[0].mxu0 %v1480
    %v1613 = vpop.f32.mrb[0].mxu0
    %v1614 = vadd.f32 %v1492, %v1613
    %v1615 = vpop.f32.mrb[0].mxu0
    %v1616 = vadd.f32 %v1496, %v1615
    %v1617 = vpop.f32.mrb[0].mxu0
    %v1618 = vadd.f32 %v1492, %v1617
    %v1619 = vpop.f32.mrb[0].mxu0
    %v1620 = vadd.f32 %v1496, %v1619
    %1621 = vmatprep.mubr.bf16.mxu0 0
    %1622 = vmatmul.mubr.bf16.gmra.mrb[0].mxu0 %v1481
    %v1623 = vpop.f32.mrb[0].mxu0
    %v1624 = vadd.f32 %v1492, %v1623
    %v1625 = vpop.f32.mrb[0].mxu0
    %v1626 = vadd.f32 %v1496, %v1625
    %v1627 = vpop.f32.mrb[0].mxu0
    %v1628 = vadd.f32 %v1492, %v1627
    %v1629 = vpop.f32.mrb[0].mxu0
    %v1630 = vadd.f32 %v1496, %v1629
    %1631 = vmatprep.mubr.bf16.mxu0 0
    %1632 = vmatmul.mubr.bf16.gmra.mrb[0].mxu0 %v1482
    %v1633 = vpop.f32.mrb[0].mxu0
    %v1634 = vadd.f32 %v1492, %v1633
    %v1635 = vpop.f32.mrb[0].mxu0
    %v1636 = vadd.f32 %v1496, %v1635
    %v1637 = vpop.f32.mrb[0].mxu0
    %v1638 = vadd.f32 %v1492, %v1637
    %v1639 = vpop.f32.mrb[0].mxu0
    %v1640 = vadd.f32 %v1496, %v1639
    %1641 = vmatprep.mubr.bf16.mxu0 0
    %1642 = vmatmul.mubr.bf16.gmra.mrb[0].mxu0 %v1483
    %v1643 = vpop.f32.mrb[0].mxu0
    %v1644 = vadd.f32 %v1492, %v1643
    %v1645 = vpop.f32.mrb[0].mxu0
    %v1646 = vadd.f32 %v1496, %v1645
    %v1647 = vpop.f32.mrb[0].mxu0
    %v1648 = vadd.f32 %v1492, %v1647
    %v1649 = vpop.f32.mrb[0].mxu0
    %v1650 = vadd.f32 %v1496, %v1649
    %1651 = vmatprep.mubr.bf16.mxu0 0
    %1652 = vmatmul.mubr.bf16.gmra.mrb[0].mxu0 %v1484
    %v1653 = vpop.f32.mrb[0].mxu0
    %v1654 = vadd.f32 %v1492, %v1653
    %v1655 = vpop.f32.mrb[0].mxu0
    %v1656 = vadd.f32 %v1496, %v1655
    %v1657 = vpop.f32.mrb[0].mxu0
    %v1658 = vadd.f32 %v1492, %v1657
    %v1659 = vpop.f32.mrb[0].mxu0
    %v1660 = vadd.f32 %v1496, %v1659
    %1661 = vmatprep.mubr.bf16.mxu0 0
    %1662 = vmatmul.mubr.bf16.gmra.mrb[0].mxu0 %v1485
    %v1663 = vpop.f32.mrb[0].mxu0
    %v1664 = vadd.f32 %v1492, %v1663
    %v1665 = vpop.f32.mrb[0].mxu0
    %v1666 = vadd.f32 %v1496, %v1665
    %v1667 = vpop.f32.mrb[0].mxu0
    %v1668 = vadd.f32 %v1492, %v1667
    %v1669 = vpop.f32.mrb[0].mxu0
    %v1670 = vadd.f32 %v1496, %v1669
    %1671 = vmatprep.mubr.bf16.mxu0 0
    %1672 = vmatmul.mubr.bf16.gmra.mrb[0].mxu0 %v1486
    %v1673 = vpop.f32.mrb[0].mxu0
    %v1674 = vadd.f32 %v1492, %v1673
    %v1675 = vpop.f32.mrb[0].mxu0
    %v1676 = vadd.f32 %v1496, %v1675
    %v1677 = vpop.f32.mrb[0].mxu0
    %v1678 = vadd.f32 %v1492, %v1677
    %v1679 = vpop.f32.mrb[0].mxu0
    %v1680 = vadd.f32 %v1496, %v1679
    %1681 = vmatprep.mubr.bf16.mxu0 0
    %1682 = vmatmul.mubr.bf16.gmra.mrb[0].mxu0 %v1487
    %v1683 = vpop.f32.mrb[0].mxu0
    %v1684 = vadd.f32 %v1492, %v1683
    %v1685 = vpop.f32.mrb[0].mxu0
    %v1686 = vadd.f32 %v1496, %v1685
    %v1687 = vpop.f32.mrb[0].mxu0
    %v1688 = vadd.f32 %v1492, %v1687
    %v1689 = vpop.f32.mrb[0].mxu0
    %v1690 = vadd.f32 %v1496, %v1689
    %1691 = vdwg.mxu0
    %v1692 = vmax.f32 %v1614, 0.0
    %v1693 = vmax.f32 %v1616, 0.0
    %v1694 = vmax.f32 %v1618, 0.0
    %v1695 = vmax.f32 %v1620, 0.0
    %v1696 = vmax.f32 %v1624, 0.0
    %v1697 = vmax.f32 %v1626, 0.0
    %v1698 = vmax.f32 %v1628, 0.0
    %v1699 = vmax.f32 %v1630, 0.0
    %v1700 = vmax.f32 %v1634, 0.0
    %v1701 = vmax.f32 %v1636, 0.0
    %v1702 = vmax.f32 %v1638, 0.0
    %v1703 = vmax.f32 %v1640, 0.0
    %v1704 = vmax.f32 %v1644, 0.0
    %v1705 = vmax.f32 %v1646, 0.0
    %v1706 = vmax.f32 %v1648, 0.0
    %v1707 = vmax.f32 %v1650, 0.0
    %v1708 = vmax.f32 %v1654, 0.0
    %v1709 = vmax.f32 %v1656, 0.0
    %v1710 = vmax.f32 %v1658, 0.0
    %v1711 = vmax.f32 %v1660, 0.0
    %v1712 = vmax.f32 %v1664, 0.0
    %v1713 = vmax.f32 %v1666, 0.0
    %v1714 = vmax.f32 %v1668, 0.0
    %v1715 = vmax.f32 %v1670, 0.0
    %v1716 = vmax.f32 %v1674, 0.0
    %v1717 = vmax.f32 %v1676, 0.0
    %v1718 = vmax.f32 %v1678, 0.0
    %v1719 = vmax.f32 %v1680, 0.0
    %v1720 = vmax.f32 %v1684, 0.0
    %v1721 = vmax.f32 %v1686, 0.0
    %v1722 = vmax.f32 %v1688, 0.0
    %v1723 = vmax.f32 %v1690, 0.0
    %v1725 = vlaneseq
    %v1726 = vshrl.u32 %v1725, 7
    %v1727 = vsub.s32 0, %v1726
    %v1728 = vrot.slane %v1380, %v1727
    %v1729 = vlaneseq
    %v1730 = vshrl.u32 %v1729, 7
    %v1731 = vsub.s32 1, %v1730
    %v1732 = vrot.slane %v1380, %v1731
    %v1735 = vmul.f32 %v1692, %v1728
    %v1736 = vmul.f32 %v1693, %v1732
    %v1737 = vmul.f32 %v1694, %v1728
    %v1738 = vmul.f32 %v1695, %v1732
    %v1739 = vmul.f32 %v1696, %v1728
    %v1740 = vmul.f32 %v1697, %v1732
    %v1741 = vmul.f32 %v1698, %v1728
    %v1742 = vmul.f32 %v1699, %v1732
    %v1743 = vmul.f32 %v1700, %v1728
    %v1744 = vmul.f32 %v1701, %v1732
    %v1745 = vmul.f32 %v1702, %v1728
    %v1746 = vmul.f32 %v1703, %v1732
    %v1747 = vmul.f32 %v1704, %v1728
    %v1748 = vmul.f32 %v1705, %v1732
    %v1749 = vmul.f32 %v1706, %v1728
    %v1750 = vmul.f32 %v1707, %v1732
    %v1751 = vmul.f32 %v1708, %v1728
    %v1752 = vmul.f32 %v1709, %v1732
    %v1753 = vmul.f32 %v1710, %v1728
    %v1754 = vmul.f32 %v1711, %v1732
    %v1755 = vmul.f32 %v1712, %v1728
    %v1756 = vmul.f32 %v1713, %v1732
    %v1757 = vmul.f32 %v1714, %v1728
    %v1758 = vmul.f32 %v1715, %v1732
    %v1759 = vmul.f32 %v1716, %v1728
    %v1760 = vmul.f32 %v1717, %v1732
    %v1761 = vmul.f32 %v1718, %v1728
    %v1762 = vmul.f32 %v1719, %v1732
    %v1763 = vmul.f32 %v1720, %v1728
    %v1764 = vmul.f32 %v1721, %v1732
    %v1765 = vmul.f32 %v1722, %v1728
    %v1766 = vmul.f32 %v1723, %v1732
    %v1768 = vlaneseq
    %v1769 = vshrl.u32 %v1768, 7
    %v1770 = vsub.s32 0, %v1769
    %v1771 = vrot.slane %v1382, %v1770
    %v1772 = vlaneseq
    %v1773 = vshrl.u32 %v1772, 7
    %v1774 = vsub.s32 1, %v1773
    %v1775 = vrot.slane %v1382, %v1774
    %v1778 = vadd.f32 %v1735, %v1771
    %v1779 = vadd.f32 %v1736, %v1775
    %v1780 = vadd.f32 %v1737, %v1771
    %v1781 = vadd.f32 %v1738, %v1775
    %v1782 = vadd.f32 %v1739, %v1771
    %v1783 = vadd.f32 %v1740, %v1775
    %v1784 = vadd.f32 %v1741, %v1771
    %v1785 = vadd.f32 %v1742, %v1775
    %v1786 = vadd.f32 %v1743, %v1771
    %v1787 = vadd.f32 %v1744, %v1775
    %v1788 = vadd.f32 %v1745, %v1771
    %v1789 = vadd.f32 %v1746, %v1775
    %v1790 = vadd.f32 %v1747, %v1771
    %v1791 = vadd.f32 %v1748, %v1775
    %v1792 = vadd.f32 %v1749, %v1771
    %v1793 = vadd.f32 %v1750, %v1775
    %v1794 = vadd.f32 %v1751, %v1771
    %v1795 = vadd.f32 %v1752, %v1775
    %v1796 = vadd.f32 %v1753, %v1771
    %v1797 = vadd.f32 %v1754, %v1775
    %v1798 = vadd.f32 %v1755, %v1771
    %v1799 = vadd.f32 %v1756, %v1775
    %v1800 = vadd.f32 %v1757, %v1771
    %v1801 = vadd.f32 %v1758, %v1775
    %v1802 = vadd.f32 %v1759, %v1771
    %v1803 = vadd.f32 %v1760, %v1775
    %v1804 = vadd.f32 %v1761, %v1771
    %v1805 = vadd.f32 %v1762, %v1775
    %v1806 = vadd.f32 %v1763, %v1771
    %v1807 = vadd.f32 %v1764, %v1775
    %v1808 = vadd.f32 %v1765, %v1771
    %v1809 = vadd.f32 %v1766, %v1775
    %v1810 = vpack.c.bf16 %v1780, %v1778
    %v1811 = vpack.c.bf16 %v1781, %v1779
    %v1812 = vpack.c.bf16 %v1784, %v1782
    %v1813 = vpack.c.bf16 %v1785, %v1783
    %v1814 = vpack.c.bf16 %v1788, %v1786
    %v1815 = vpack.c.bf16 %v1789, %v1787
    %v1816 = vpack.c.bf16 %v1792, %v1790
    %v1817 = vpack.c.bf16 %v1793, %v1791
    %v1818 = vpack.c.bf16 %v1796, %v1794
    %v1819 = vpack.c.bf16 %v1797, %v1795
    %v1820 = vpack.c.bf16 %v1800, %v1798
    %v1821 = vpack.c.bf16 %v1801, %v1799
    %v1822 = vpack.c.bf16 %v1804, %v1802
    %v1823 = vpack.c.bf16 %v1805, %v1803
    %v1824 = vpack.c.bf16 %v1808, %v1806
    %v1825 = vpack.c.bf16 %v1809, %v1807
    %v1826 = vld [vmem:[#allocation8 + $0x280] sm:$0xf]
    %v1827 = vld [vmem:[#allocation8 + $0x288] sm:$0xf]
    %v1828 = vld [vmem:[#allocation8 + $0x290] sm:$0xf]
    %v1829 = vld [vmem:[#allocation8 + $0x298] sm:$0xf]
    %v1830 = vld [vmem:[#allocation8 + $0x2a0] sm:$0xf]
    %v1831 = vld [vmem:[#allocation8 + $0x2a8] sm:$0xf]
    %v1832 = vld [vmem:[#allocation8 + $0x2b0] sm:$0xf]
    %v1833 = vld [vmem:[#allocation8 + $0x2b8] sm:$0xf]
    %v1834 = vld [vmem:[#allocation8 + $0x2c0] sm:$0xf]
    %v1835 = vld [vmem:[#allocation8 + $0x2c8] sm:$0xf]
    %v1836 = vld [vmem:[#allocation8 + $0x2d0] sm:$0xf]
    %v1837 = vld [vmem:[#allocation8 + $0x2d8] sm:$0xf]
    %v1838 = vld [vmem:[#allocation8 + $0x2e0] sm:$0xf]
    %v1839 = vld [vmem:[#allocation8 + $0x2e8] sm:$0xf]
    %v1840 = vld [vmem:[#allocation8 + $0x2f0] sm:$0xf]
    %v1841 = vld [vmem:[#allocation8 + $0x2f8] sm:$0xf]
    %v1842 = vld [vmem:[#allocation8 + $0x300] sm:$0xf]
    %v1843 = vld [vmem:[#allocation8 + $0x308] sm:$0xf]
    %v1844 = vld [vmem:[#allocation8 + $0x310] sm:$0xf]
    %v1845 = vld [vmem:[#allocation8 + $0x318] sm:$0xf]
    %v1846 = vld [vmem:[#allocation8 + $0x320] sm:$0xf]
    %v1847 = vld [vmem:[#allocation8 + $0x328] sm:$0xf]
    %v1848 = vld [vmem:[#allocation8 + $0x330] sm:$0xf]
    %v1849 = vld [vmem:[#allocation8 + $0x338] sm:$0xf]
    %v1850 = vld [vmem:[#allocation8 + $0x340] sm:$0xf]
    %v1851 = vld [vmem:[#allocation8 + $0x348] sm:$0xf]
    %v1852 = vld [vmem:[#allocation8 + $0x350] sm:$0xf]
    %v1853 = vld [vmem:[#allocation8 + $0x358] sm:$0xf]
    %v1854 = vld [vmem:[#allocation8 + $0x360] sm:$0xf]
    %v1855 = vld [vmem:[#allocation8 + $0x368] sm:$0xf]
    %v1856 = vld [vmem:[#allocation8 + $0x370] sm:$0xf]
    %v1857 = vld [vmem:[#allocation8 + $0x378] sm:$0xf]
    %v1858 = vld [vmem:[#allocation10 + $0x30] ss:$0 sm:$0xff]
    %v1859 = vld [vmem:[#allocation10 + $0x31] ss:$0 sm:$0xff]
    %v1860 = vld [vmem:[#allocation10 + $0x32] ss:$0 sm:$0xff]
    %v1893 = vunpack.c.l.b16 %v1826
    %v1894 = vunpack.c.l.b16 %v1827
    %v1895 = vunpack.c.l.b16 %v1828
    %v1896 = vunpack.c.l.b16 %v1829
    %v1897 = vunpack.c.l.b16 %v1830
    %v1898 = vunpack.c.l.b16 %v1831
    %v1899 = vunpack.c.l.b16 %v1832
    %v1900 = vunpack.c.l.b16 %v1833
    %v1901 = vunpack.c.l.b16 %v1834
    %v1902 = vunpack.c.l.b16 %v1835
    %v1903 = vunpack.c.l.b16 %v1836
    %v1904 = vunpack.c.l.b16 %v1837
    %v1905 = vunpack.c.l.b16 %v1838
    %v1906 = vunpack.c.l.b16 %v1839
    %v1907 = vunpack.c.l.b16 %v1840
    %v1908 = vunpack.c.l.b16 %v1841
    %v1909 = vunpack.c.l.b16 %v1842
    %v1910 = vunpack.c.l.b16 %v1843
    %v1911 = vunpack.c.l.b16 %v1844
    %v1912 = vunpack.c.l.b16 %v1845
    %v1913 = vunpack.c.l.b16 %v1846
    %v1914 = vunpack.c.l.b16 %v1847
    %v1915 = vunpack.c.l.b16 %v1848
    %v1916 = vunpack.c.l.b16 %v1849
    %v1917 = vunpack.c.l.b16 %v1850
    %v1918 = vunpack.c.l.b16 %v1851
    %v1919 = vunpack.c.l.b16 %v1852
    %v1920 = vunpack.c.l.b16 %v1853
    %v1921 = vunpack.c.l.b16 %v1854
    %v1922 = vunpack.c.l.b16 %v1855
    %v1923 = vunpack.c.l.b16 %v1856
    %v1924 = vunpack.c.l.b16 %v1857
    %v1925 = vpack.c.b16 %v1894, %v1893
    %v1926 = vpack.c.b16 %v1896, %v1895
    %v1927 = vpack.c.b16 %v1898, %v1897
    %v1928 = vpack.c.b16 %v1900, %v1899
    %v1929 = vpack.c.b16 %v1902, %v1901
    %v1930 = vpack.c.b16 %v1904, %v1903
    %v1931 = vpack.c.b16 %v1906, %v1905
    %v1932 = vpack.c.b16 %v1908, %v1907
    %v1933 = vpack.c.b16 %v1910, %v1909
    %v1934 = vpack.c.b16 %v1912, %v1911
    %v1935 = vpack.c.b16 %v1914, %v1913
    %v1936 = vpack.c.b16 %v1916, %v1915
    %v1937 = vpack.c.b16 %v1918, %v1917
    %v1938 = vpack.c.b16 %v1920, %v1919
    %v1939 = vpack.c.b16 %v1922, %v1921
    %v1940 = vpack.c.b16 %v1924, %v1923
    %1957 = vmatprep.subr.bf16.mxu0 0
    %1958 = vmatpush1.bf16.msra.mxu0 %v1925
    %1959 = vmatprep.subr.bf16.mxu0 0
    %1960 = vmatpush1.bf16.msra.mxu0 %v1926
    %1961 = vmatprep.subr.bf16.mxu0 0
    %1962 = vmatpush1.bf16.msra.mxu0 %v1927
    %1963 = vmatprep.subr.bf16.mxu0 0
    %1964 = vmatpush1.bf16.msra.mxu0 %v1928
    %1965 = vmatprep.subr.bf16.mxu0 0
    %1966 = vmatpush1.bf16.msra.mxu0 %v1929
    %1967 = vmatprep.subr.bf16.mxu0 0
    %1968 = vmatpush1.bf16.msra.mxu0 %v1930
    %1969 = vmatprep.subr.bf16.mxu0 0
    %1970 = vmatpush1.bf16.msra.mxu0 %v1931
    %1971 = vmatprep.subr.bf16.mxu0 0
    %1972 = vmatpush1.bf16.msra.mxu0 %v1932
    %1973 = vmatprep.subr.bf16.mxu0 0
    %1974 = vmatpush1.bf16.msra.mxu0 %v1933
    %1975 = vmatprep.subr.bf16.mxu0 0
    %1976 = vmatpush1.bf16.msra.mxu0 %v1934
    %1977 = vmatprep.subr.bf16.mxu0 0
    %1978 = vmatpush1.bf16.msra.mxu0 %v1935
    %1979 = vmatprep.subr.bf16.mxu0 0
    %1980 = vmatpush1.bf16.msra.mxu0 %v1936
    %1981 = vmatprep.subr.bf16.mxu0 0
    %1982 = vmatpush1.bf16.msra.mxu0 %v1937
    %1983 = vmatprep.subr.bf16.mxu0 0
    %1984 = vmatpush1.bf16.msra.mxu0 %v1938
    %1985 = vmatprep.subr.bf16.mxu0 0
    %1986 = vmatpush1.bf16.msra.mxu0 %v1939
    %1987 = vmatprep.subr.bf16.mxu0 0
    %1988 = vmatpush1.bf16.msra.mxu0 %v1940
    %1989 = vmatprep.mubr.bf16.mxu0 %v1811
    %1990 = vmatmul.mubr.bf16.gmra.mrb[0].mxu0 %v1810
    %v1991 = vpop.f32.mrb[0].mxu0
    %v1992 = vadd.f32 0.0, %v1991
    %v1993 = vpop.f32.mrb[0].mxu0
    %v1994 = vpop.f32.mrb[0].mxu0
    %v1995 = vadd.f32 0.0, %v1994
    %v1996 = vpop.f32.mrb[0].mxu0
    %1997 = vmatprep.mubr.bf16.mxu0 %v1813
    %1998 = vmatmul.mubr.bf16.gmra.mrb[0].mxu0 %v1812
    %v1999 = vpop.f32.mrb[0].mxu0
    %v2000 = vadd.f32 0.0, %v1999
    %v2001 = vpop.f32.mrb[0].mxu0
    %v2002 = vpop.f32.mrb[0].mxu0
    %v2003 = vadd.f32 0.0, %v2002
    %v2004 = vpop.f32.mrb[0].mxu0
    %2005 = vmatprep.mubr.bf16.mxu0 %v1815
    %2006 = vmatmul.mubr.bf16.gmra.mrb[0].mxu0 %v1814
    %v2007 = vpop.f32.mrb[0].mxu0
    %v2008 = vadd.f32 0.0, %v2007
    %v2009 = vpop.f32.mrb[0].mxu0
    %v2010 = vpop.f32.mrb[0].mxu0
    %v2011 = vadd.f32 0.0, %v2010
    %v2012 = vpop.f32.mrb[0].mxu0
    %2013 = vmatprep.mubr.bf16.mxu0 %v1817
    %2014 = vmatmul.mubr.bf16.gmra.mrb[0].mxu0 %v1816
    %v2015 = vpop.f32.mrb[0].mxu0
    %v2016 = vadd.f32 0.0, %v2015
    %v2017 = vpop.f32.mrb[0].mxu0
    %v2018 = vpop.f32.mrb[0].mxu0
    %v2019 = vadd.f32 0.0, %v2018
    %v2020 = vpop.f32.mrb[0].mxu0
    %2021 = vmatprep.mubr.bf16.mxu0 %v1819
    %2022 = vmatmul.mubr.bf16.gmra.mrb[0].mxu0 %v1818
    %v2023 = vpop.f32.mrb[0].mxu0
    %v2024 = vadd.f32 0.0, %v2023
    %v2025 = vpop.f32.mrb[0].mxu0
    %v2026 = vpop.f32.mrb[0].mxu0
    %v2027 = vadd.f32 0.0, %v2026
    %v2028 = vpop.f32.mrb[0].mxu0
    %2029 = vmatprep.mubr.bf16.mxu0 %v1821
    %2030 = vmatmul.mubr.bf16.gmra.mrb[0].mxu0 %v1820
    %v2031 = vpop.f32.mrb[0].mxu0
    %v2032 = vadd.f32 0.0, %v2031
    %v2033 = vpop.f32.mrb[0].mxu0
    %v2034 = vpop.f32.mrb[0].mxu0
    %v2035 = vadd.f32 0.0, %v2034
    %v2036 = vpop.f32.mrb[0].mxu0
    %2037 = vmatprep.mubr.bf16.mxu0 %v1823
    %2038 = vmatmul.mubr.bf16.gmra.mrb[0].mxu0 %v1822
    %v2039 = vpop.f32.mrb[0].mxu0
    %v2040 = vadd.f32 0.0, %v2039
    %v2041 = vpop.f32.mrb[0].mxu0
    %v2042 = vpop.f32.mrb[0].mxu0
    %v2043 = vadd.f32 0.0, %v2042
    %v2044 = vpop.f32.mrb[0].mxu0
    %2045 = vmatprep.mubr.bf16.mxu0 %v1825
    %2046 = vmatmul.mubr.bf16.gmra.mrb[0].mxu0 %v1824
    %v2047 = vpop.f32.mrb[0].mxu0
    %v2048 = vadd.f32 0.0, %v2047
    %v2049 = vpop.f32.mrb[0].mxu0
    %v2050 = vpop.f32.mrb[0].mxu0
    %v2051 = vadd.f32 0.0, %v2050
    %v2052 = vpop.f32.mrb[0].mxu0
    %2053 = vdwg.mxu0
    %v2054 = vpack.c.bf16 %v1995, %v1992
    %v2055 = vpack.c.bf16 %v2003, %v2000
    %v2056 = vpack.c.bf16 %v2011, %v2008
    %v2057 = vpack.c.bf16 %v2019, %v2016
    %v2058 = vpack.c.bf16 %v2027, %v2024
    %v2059 = vpack.c.bf16 %v2035, %v2032
    %v2060 = vpack.c.bf16 %v2043, %v2040
    %v2061 = vpack.c.bf16 %v2051, %v2048
    %2062 = vmatprep.subr.bf16.mxu0 0
    %2063 = vmatpush1.bf16.msra.mxu0 %v2054
    %2064 = vmatprep.subr.bf16.mxu0 0
    %2065 = vmatpush1.bf16.msra.mxu0 %v2055
    %2066 = vmatprep.subr.bf16.mxu0 0
    %2067 = vmatpush1.bf16.msra.mxu0 %v2056
    %2068 = vmatprep.subr.bf16.mxu0 0
    %2069 = vmatpush1.bf16.msra.mxu0 %v2057
    %2070 = vmatprep.subr.bf16.mxu0 0
    %2071 = vmatpush1.bf16.msra.mxu0 %v2058
    %2072 = vmatprep.subr.bf16.mxu0 0
    %2073 = vmatpush1.bf16.msra.mxu0 %v2059
    %2074 = vmatprep.subr.bf16.mxu0 0
    %2075 = vmatpush1.bf16.msra.mxu0 %v2060
    %2076 = vmatprep.subr.bf16.mxu0 0
    %2077 = vmatpush1.bf16.msra.mxu0 %v2061
    %2078 = vmatprep.subr.bf16.mxu0 0
    %2079 = vmatpush1.bf16.msra.mxu0 0
    %2080 = vmatprep.subr.bf16.mxu0 0
    %2081 = vmatpush1.bf16.msra.mxu0 0
    %2082 = vmatprep.subr.bf16.mxu0 0
    %2083 = vmatpush1.bf16.msra.mxu0 0
    %2084 = vmatprep.subr.bf16.mxu0 0
    %2085 = vmatpush1.bf16.msra.mxu0 0
    %2086 = vmatprep.subr.bf16.mxu0 0
    %2087 = vmatpush1.bf16.msra.mxu0 0
    %2088 = vmatprep.subr.bf16.mxu0 0
    %2089 = vmatpush1.bf16.msra.mxu0 0
    %2090 = vmatprep.subr.bf16.mxu0 0
    %2091 = vmatpush1.bf16.msra.mxu0 0
    %2092 = vmatprep.subr.bf16.mxu0 0
    %2093 = vmatpush1.bf16.msra.mxu0 0
    %2094 = vmatprep.mubr.bf16.mxu0 0
    %2095 = vmatmul.mubr.bf16.gmra.mrb[0].mxu0 %v389
    %v2096 = vpop.f32.mrb[0].mxu0
    %v2097 = vadd.f32 %v1858, %v2096
    %v2098 = vpop.f32.mrb[0].mxu0
    %v2099 = vpop.f32.mrb[0].mxu0
    %v2100 = vadd.f32 %v1858, %v2099
    %v2101 = vpop.f32.mrb[0].mxu0
    %2102 = vmatprep.mubr.bf16.mxu0 0
    %2103 = vmatmul.mubr.bf16.gmra.mrb[0].mxu0 %v390
    %v2104 = vpop.f32.mrb[0].mxu0
    %v2105 = vadd.f32 %v1858, %v2104
    %v2106 = vpop.f32.mrb[0].mxu0
    %v2107 = vpop.f32.mrb[0].mxu0
    %v2108 = vadd.f32 %v1858, %v2107
    %v2109 = vpop.f32.mrb[0].mxu0
    %2110 = vmatprep.mubr.bf16.mxu0 0
    %2111 = vmatmul.mubr.bf16.gmra.mrb[0].mxu0 %v391
    %v2112 = vpop.f32.mrb[0].mxu0
    %v2113 = vadd.f32 %v1858, %v2112
    %v2114 = vpop.f32.mrb[0].mxu0
    %v2115 = vpop.f32.mrb[0].mxu0
    %v2116 = vadd.f32 %v1858, %v2115
    %v2117 = vpop.f32.mrb[0].mxu0
    %2118 = vmatprep.mubr.bf16.mxu0 0
    %2119 = vmatmul.mubr.bf16.gmra.mrb[0].mxu0 %v392
    %v2120 = vpop.f32.mrb[0].mxu0
    %v2121 = vadd.f32 %v1858, %v2120
    %v2122 = vpop.f32.mrb[0].mxu0
    %v2123 = vpop.f32.mrb[0].mxu0
    %v2124 = vadd.f32 %v1858, %v2123
    %v2125 = vpop.f32.mrb[0].mxu0
    %2126 = vmatprep.mubr.bf16.mxu0 0
    %2127 = vmatmul.mubr.bf16.gmra.mrb[0].mxu0 %v393
    %v2128 = vpop.f32.mrb[0].mxu0
    %v2129 = vadd.f32 %v1858, %v2128
    %v2130 = vpop.f32.mrb[0].mxu0
    %v2131 = vpop.f32.mrb[0].mxu0
    %v2132 = vadd.f32 %v1858, %v2131
    %v2133 = vpop.f32.mrb[0].mxu0
    %2134 = vmatprep.mubr.bf16.mxu0 0
    %2135 = vmatmul.mubr.bf16.gmra.mrb[0].mxu0 %v394
    %v2136 = vpop.f32.mrb[0].mxu0
    %v2137 = vadd.f32 %v1858, %v2136
    %v2138 = vpop.f32.mrb[0].mxu0
    %v2139 = vpop.f32.mrb[0].mxu0
    %v2140 = vadd.f32 %v1858, %v2139
    %v2141 = vpop.f32.mrb[0].mxu0
    %2142 = vmatprep.mubr.bf16.mxu0 0
    %2143 = vmatmul.mubr.bf16.gmra.mrb[0].mxu0 %v395
    %v2144 = vpop.f32.mrb[0].mxu0
    %v2145 = vadd.f32 %v1858, %v2144
    %v2146 = vpop.f32.mrb[0].mxu0
    %v2147 = vpop.f32.mrb[0].mxu0
    %v2148 = vadd.f32 %v1858, %v2147
    %v2149 = vpop.f32.mrb[0].mxu0
    %2150 = vmatprep.mubr.bf16.mxu0 0
    %2151 = vmatmul.mubr.bf16.gmra.mrb[0].mxu0 %v396
    %v2152 = vpop.f32.mrb[0].mxu0
    %v2153 = vadd.f32 %v1858, %v2152
    %v2154 = vpop.f32.mrb[0].mxu0
    %v2155 = vpop.f32.mrb[0].mxu0
    %v2156 = vadd.f32 %v1858, %v2155
    %v2157 = vpop.f32.mrb[0].mxu0
    %2158 = vdwg.mxu0
    %v2159 = vmax.f32 %v2097, 0.0
    %v2160 = vmax.f32 %v2100, 0.0
    %v2161 = vmax.f32 %v2105, 0.0
    %v2162 = vmax.f32 %v2108, 0.0
    %v2163 = vmax.f32 %v2113, 0.0
    %v2164 = vmax.f32 %v2116, 0.0
    %v2165 = vmax.f32 %v2121, 0.0
    %v2166 = vmax.f32 %v2124, 0.0
    %v2167 = vmax.f32 %v2129, 0.0
    %v2168 = vmax.f32 %v2132, 0.0
    %v2169 = vmax.f32 %v2137, 0.0
    %v2170 = vmax.f32 %v2140, 0.0
    %v2171 = vmax.f32 %v2145, 0.0
    %v2172 = vmax.f32 %v2148, 0.0
    %v2173 = vmax.f32 %v2153, 0.0
    %v2174 = vmax.f32 %v2156, 0.0
    %v2175 = vmul.f32 %v2159, %v1859
    %v2176 = vmul.f32 %v2160, %v1859
    %v2177 = vmul.f32 %v2161, %v1859
    %v2178 = vmul.f32 %v2162, %v1859
    %v2179 = vmul.f32 %v2163, %v1859
    %v2180 = vmul.f32 %v2164, %v1859
    %v2181 = vmul.f32 %v2165, %v1859
    %v2182 = vmul.f32 %v2166, %v1859
    %v2183 = vmul.f32 %v2167, %v1859
    %v2184 = vmul.f32 %v2168, %v1859
    %v2185 = vmul.f32 %v2169, %v1859
    %v2186 = vmul.f32 %v2170, %v1859
    %v2187 = vmul.f32 %v2171, %v1859
    %v2188 = vmul.f32 %v2172, %v1859
    %v2189 = vmul.f32 %v2173, %v1859
    %v2190 = vmul.f32 %v2174, %v1859
    %v2191 = vadd.f32 %v2175, %v1860
    %v2192 = vadd.f32 %v2176, %v1860
    %v2193 = vadd.f32 %v2177, %v1860
    %v2194 = vadd.f32 %v2178, %v1860
    %v2195 = vadd.f32 %v2179, %v1860
    %v2196 = vadd.f32 %v2180, %v1860
    %v2197 = vadd.f32 %v2181, %v1860
    %v2198 = vadd.f32 %v2182, %v1860
    %v2199 = vadd.f32 %v2183, %v1860
    %v2200 = vadd.f32 %v2184, %v1860
    %v2201 = vadd.f32 %v2185, %v1860
    %v2202 = vadd.f32 %v2186, %v1860
    %v2203 = vadd.f32 %v2187, %v1860
    %v2204 = vadd.f32 %v2188, %v1860
    %v2205 = vadd.f32 %v2189, %v1860
    %v2206 = vadd.f32 %v2190, %v1860
    %v2207 = vpack.c.bf16 %v2192, %v2191
    %v2208 = vpack.c.bf16 %v2194, %v2193
    %v2209 = vpack.c.bf16 %v2196, %v2195
    %v2210 = vpack.c.bf16 %v2198, %v2197
    %v2211 = vpack.c.bf16 %v2200, %v2199
    %v2212 = vpack.c.bf16 %v2202, %v2201
    %v2213 = vpack.c.bf16 %v2204, %v2203
    %v2214 = vpack.c.bf16 %v2206, %v2205
    %v2215 = vld [vmem:[#allocation8 + $0x380] sm:$0xf]
    %v2216 = vld [vmem:[#allocation8 + $0x388] sm:$0xf]
    %v2217 = vld [vmem:[#allocation8 + $0x390] sm:$0xf]
    %v2218 = vld [vmem:[#allocation8 + $0x398] sm:$0xf]
    %v2219 = vld [vmem:[#allocation8 + $0x3a0] sm:$0xf]
    %v2220 = vld [vmem:[#allocation8 + $0x3a8] sm:$0xf]
    %v2221 = vld [vmem:[#allocation8 + $0x3b0] sm:$0xf]
    %v2222 = vld [vmem:[#allocation8 + $0x3b8] sm:$0xf]
    %v2223 = vld [vmem:[#allocation8 + $0x3c0] sm:$0xf]
    %v2224 = vld [vmem:[#allocation8 + $0x3c8] sm:$0xf]
    %v2225 = vld [vmem:[#allocation8 + $0x3d0] sm:$0xf]
    %v2226 = vld [vmem:[#allocation8 + $0x3d8] sm:$0xf]
    %v2227 = vld [vmem:[#allocation8 + $0x3e0] sm:$0xf]
    %v2228 = vld [vmem:[#allocation8 + $0x3e8] sm:$0xf]
    %v2229 = vld [vmem:[#allocation8 + $0x3f0] sm:$0xf]
    %v2230 = vld [vmem:[#allocation8 + $0x3f8] sm:$0xf]
    %v2231 = vld [vmem:[#allocation10 + $0x38] ss:$0 sm:$0xff]
    %v2248 = vunpack.c.l.b16 %v2215
    %v2249 = vunpack.c.l.b16 %v2216
    %v2250 = vunpack.c.l.b16 %v2217
    %v2251 = vunpack.c.l.b16 %v2218
    %v2252 = vunpack.c.l.b16 %v2219
    %v2253 = vunpack.c.l.b16 %v2220
    %v2254 = vunpack.c.l.b16 %v2221
    %v2255 = vunpack.c.l.b16 %v2222
    %v2256 = vunpack.c.l.b16 %v2223
    %v2257 = vunpack.c.l.b16 %v2224
    %v2258 = vunpack.c.l.b16 %v2225
    %v2259 = vunpack.c.l.b16 %v2226
    %v2260 = vunpack.c.l.b16 %v2227
    %v2261 = vunpack.c.l.b16 %v2228
    %v2262 = vunpack.c.l.b16 %v2229
    %v2263 = vunpack.c.l.b16 %v2230
    %v2264 = vpack.c.b16 %v2249, %v2248
    %v2265 = vpack.c.b16 %v2251, %v2250
    %v2266 = vpack.c.b16 %v2253, %v2252
    %v2267 = vpack.c.b16 %v2255, %v2254
    %v2268 = vpack.c.b16 %v2257, %v2256
    %v2269 = vpack.c.b16 %v2259, %v2258
    %v2270 = vpack.c.b16 %v2261, %v2260
    %v2271 = vpack.c.b16 %v2263, %v2262
    %2280 = vmatprep.subr.bf16.mxu0 0
    %2281 = vmatpush1.bf16.msra.mxu0 %v2264
    %2282 = vmatprep.subr.bf16.mxu0 0
    %2283 = vmatpush1.bf16.msra.mxu0 %v2265
    %2284 = vmatprep.subr.bf16.mxu0 0
    %2285 = vmatpush1.bf16.msra.mxu0 %v2266
    %2286 = vmatprep.subr.bf16.mxu0 0
    %2287 = vmatpush1.bf16.msra.mxu0 %v2267
    %2288 = vmatprep.subr.bf16.mxu0 0
    %2289 = vmatpush1.bf16.msra.mxu0 %v2268
    %2290 = vmatprep.subr.bf16.mxu0 0
    %2291 = vmatpush1.bf16.msra.mxu0 %v2269
    %2292 = vmatprep.subr.bf16.mxu0 0
    %2293 = vmatpush1.bf16.msra.mxu0 %v2270
    %2294 = vmatprep.subr.bf16.mxu0 0
    %2295 = vmatpush1.bf16.msra.mxu0 %v2271
    %2296 = vmatprep.subr.bf16.mxu0 0
    %2297 = vmatpush1.bf16.msra.mxu0 0
    %2298 = vmatprep.subr.bf16.mxu0 0
    %2299 = vmatpush1.bf16.msra.mxu0 0
    %2300 = vmatprep.subr.bf16.mxu0 0
    %2301 = vmatpush1.bf16.msra.mxu0 0
    %2302 = vmatprep.subr.bf16.mxu0 0
    %2303 = vmatpush1.bf16.msra.mxu0 0
    %2304 = vmatprep.subr.bf16.mxu0 0
    %2305 = vmatpush1.bf16.msra.mxu0 0
    %2306 = vmatprep.subr.bf16.mxu0 0
    %2307 = vmatpush1.bf16.msra.mxu0 0
    %2308 = vmatprep.subr.bf16.mxu0 0
    %2309 = vmatpush1.bf16.msra.mxu0 0
    %2310 = vmatprep.subr.bf16.mxu0 0
    %2311 = vmatpush1.bf16.msra.mxu0 0
    %2312 = vmatprep.mubr.bf16.mxu0 0
    %2313 = vmatmul.mubr.bf16.gmra.mrb[0].mxu0 %v2207
    %v2314 = vpop.f32.mrb[0].mxu0
    %v2315 = vadd.f32 %v2231, %v2314
    %v2316 = vpop.f32.mrb[0].mxu0
    %v2317 = vpop.f32.mrb[0].mxu0
    %v2318 = vadd.f32 %v2231, %v2317
    %v2319 = vpop.f32.mrb[0].mxu0
    %2320 = vmatprep.mubr.bf16.mxu0 0
    %2321 = vmatmul.mubr.bf16.gmra.mrb[0].mxu0 %v2208
    %v2322 = vpop.f32.mrb[0].mxu0
    %v2323 = vadd.f32 %v2231, %v2322
    %v2324 = vpop.f32.mrb[0].mxu0
    %v2325 = vpop.f32.mrb[0].mxu0
    %v2326 = vadd.f32 %v2231, %v2325
    %v2327 = vpop.f32.mrb[0].mxu0
    %2328 = vmatprep.mubr.bf16.mxu0 0
    %2329 = vmatmul.mubr.bf16.gmra.mrb[0].mxu0 %v2209
    %v2330 = vpop.f32.mrb[0].mxu0
    %v2331 = vadd.f32 %v2231, %v2330
    %v2332 = vpop.f32.mrb[0].mxu0
    %v2333 = vpop.f32.mrb[0].mxu0
    %v2334 = vadd.f32 %v2231, %v2333
    %v2335 = vpop.f32.mrb[0].mxu0
    %2336 = vmatprep.mubr.bf16.mxu0 0
    %2337 = vmatmul.mubr.bf16.gmra.mrb[0].mxu0 %v2210
    %v2338 = vpop.f32.mrb[0].mxu0
    %v2339 = vadd.f32 %v2231, %v2338
    %v2340 = vpop.f32.mrb[0].mxu0
    %v2341 = vpop.f32.mrb[0].mxu0
    %v2342 = vadd.f32 %v2231, %v2341
    %v2343 = vpop.f32.mrb[0].mxu0
    %2344 = vmatprep.mubr.bf16.mxu0 0
    %2345 = vmatmul.mubr.bf16.gmra.mrb[0].mxu0 %v2211
    %v2346 = vpop.f32.mrb[0].mxu0
    %v2347 = vadd.f32 %v2231, %v2346
    %v2348 = vpop.f32.mrb[0].mxu0
    %v2349 = vpop.f32.mrb[0].mxu0
    %v2350 = vadd.f32 %v2231, %v2349
    %v2351 = vpop.f32.mrb[0].mxu0
    %2352 = vmatprep.mubr.bf16.mxu0 0
    %2353 = vmatmul.mubr.bf16.gmra.mrb[0].mxu0 %v2212
    %v2354 = vpop.f32.mrb[0].mxu0
    %v2355 = vadd.f32 %v2231, %v2354
    %v2356 = vpop.f32.mrb[0].mxu0
    %v2357 = vpop.f32.mrb[0].mxu0
    %v2358 = vadd.f32 %v2231, %v2357
    %v2359 = vpop.f32.mrb[0].mxu0
    %2360 = vmatprep.mubr.bf16.mxu0 0
    %2361 = vmatmul.mubr.bf16.gmra.mrb[0].mxu0 %v2213
    %v2362 = vpop.f32.mrb[0].mxu0
    %v2363 = vadd.f32 %v2231, %v2362
    %v2364 = vpop.f32.mrb[0].mxu0
    %v2365 = vpop.f32.mrb[0].mxu0
    %v2366 = vadd.f32 %v2231, %v2365
    %v2367 = vpop.f32.mrb[0].mxu0
    %2368 = vmatprep.mubr.bf16.mxu0 0
    %2369 = vmatmul.mubr.bf16.gmra.mrb[0].mxu0 %v2214
    %v2370 = vpop.f32.mrb[0].mxu0
    %v2371 = vadd.f32 %v2231, %v2370
    %v2372 = vpop.f32.mrb[0].mxu0
    %v2373 = vpop.f32.mrb[0].mxu0
    %v2374 = vadd.f32 %v2231, %v2373
    %v2375 = vpop.f32.mrb[0].mxu0
    %2376 = vdwg.mxu0
    %v2377 = vlaneseq
    %v2378 = vand.u32 %v2377, 127
    %vm2379 = vcmp.lt.s32.totalorder %v2378, 100
    %v2380 = vsel %vm2379, %v2315, -1e+30
    %v2381 = vsel %vm2379, %v2318, -1e+30
    %v2382 = vsel %vm2379, %v2323, -1e+30
    %v2383 = vsel %vm2379, %v2326, -1e+30
    %v2384 = vsel %vm2379, %v2331, -1e+30
    %v2385 = vsel %vm2379, %v2334, -1e+30
    %v2386 = vsel %vm2379, %v2339, -1e+30
    %v2387 = vsel %vm2379, %v2342, -1e+30
    %v2388 = vsel %vm2379, %v2347, -1e+30
    %v2389 = vsel %vm2379, %v2350, -1e+30
    %v2390 = vsel %vm2379, %v2355, -1e+30
    %v2391 = vsel %vm2379, %v2358, -1e+30
    %v2392 = vsel %vm2379, %v2363, -1e+30
    %v2393 = vsel %vm2379, %v2366, -1e+30
    %v2394 = vsel %vm2379, %v2371, -1e+30
    %v2395 = vsel %vm2379, %v2374, -1e+30
    %2396 = vmax.xlane.f32.xlu0 %v2380
    %v2397 = vpop.xlane.xlu0 %2396
    %2398 = vmax.xlane.f32.xlu0 %v2381
    %v2399 = vpop.xlane.xlu0 %2398
    %2400 = vmax.xlane.f32.xlu0 %v2382
    %v2401 = vpop.xlane.xlu0 %2400
    %2402 = vmax.xlane.f32.xlu0 %v2383
    %v2403 = vpop.xlane.xlu0 %2402
    %2404 = vmax.xlane.f32.xlu0 %v2384
    %v2405 = vpop.xlane.xlu0 %2404
    %2406 = vmax.xlane.f32.xlu0 %v2385
    %v2407 = vpop.xlane.xlu0 %2406
    %2408 = vmax.xlane.f32.xlu0 %v2386
    %v2409 = vpop.xlane.xlu0 %2408
    %2410 = vmax.xlane.f32.xlu0 %v2387
    %v2411 = vpop.xlane.xlu0 %2410
    %2412 = vmax.xlane.f32.xlu0 %v2388
    %v2413 = vpop.xlane.xlu0 %2412
    %2414 = vmax.xlane.f32.xlu0 %v2389
    %v2415 = vpop.xlane.xlu0 %2414
    %2416 = vmax.xlane.f32.xlu0 %v2390
    %v2417 = vpop.xlane.xlu0 %2416
    %2418 = vmax.xlane.f32.xlu0 %v2391
    %v2419 = vpop.xlane.xlu0 %2418
    %2420 = vmax.xlane.f32.xlu0 %v2392
    %v2421 = vpop.xlane.xlu0 %2420
    %2422 = vmax.xlane.f32.xlu0 %v2393
    %v2423 = vpop.xlane.xlu0 %2422
    %2424 = vmax.xlane.f32.xlu0 %v2394
    %v2425 = vpop.xlane.xlu0 %2424
    %2426 = vmax.xlane.f32.xlu0 %v2395
    %v2427 = vpop.xlane.xlu0 %2426
    %v2428 = vsub.f32 %v2380, %v2397
    %v2429 = vsub.f32 %v2381, %v2399
    %v2430 = vsub.f32 %v2382, %v2401
    %v2431 = vsub.f32 %v2383, %v2403
    %v2432 = vsub.f32 %v2384, %v2405
    %v2433 = vsub.f32 %v2385, %v2407
    %v2434 = vsub.f32 %v2386, %v2409
    %v2435 = vsub.f32 %v2387, %v2411
    %v2436 = vsub.f32 %v2388, %v2413
    %v2437 = vsub.f32 %v2389, %v2415
    %v2438 = vsub.f32 %v2390, %v2417
    %v2439 = vsub.f32 %v2391, %v2419
    %v2440 = vsub.f32 %v2392, %v2421
    %v2441 = vsub.f32 %v2393, %v2423
    %v2442 = vsub.f32 %v2394, %v2425
    %v2443 = vsub.f32 %v2395, %v2427
    %v2444 = vmul.f32 %v2428, 1.442695
    %v2445 = vpow.pop %v2444
    %v2446 = vmul.f32 %v2429, 1.442695
    %v2447 = vpow.pop %v2446
    %v2448 = vmul.f32 %v2430, 1.442695
    %v2449 = vpow.pop %v2448
    %v2450 = vmul.f32 %v2431, 1.442695
    %v2451 = vpow.pop %v2450
    %v2452 = vmul.f32 %v2432, 1.442695
    %v2453 = vpow.pop %v2452
    %v2454 = vmul.f32 %v2433, 1.442695
    %v2455 = vpow.pop %v2454
    %v2456 = vmul.f32 %v2434, 1.442695
    %v2457 = vpow.pop %v2456
    %v2458 = vmul.f32 %v2435, 1.442695
    %v2459 = vpow.pop %v2458
    %v2460 = vmul.f32 %v2436, 1.442695
    %v2461 = vpow.pop %v2460
    %v2462 = vmul.f32 %v2437, 1.442695
    %v2463 = vpow.pop %v2462
    %v2464 = vmul.f32 %v2438, 1.442695
    %v2465 = vpow.pop %v2464
    %v2466 = vmul.f32 %v2439, 1.442695
    %v2467 = vpow.pop %v2466
    %v2468 = vmul.f32 %v2440, 1.442695
    %v2469 = vpow.pop %v2468
    %v2470 = vmul.f32 %v2441, 1.442695
    %v2471 = vpow.pop %v2470
    %v2472 = vmul.f32 %v2442, 1.442695
    %v2473 = vpow.pop %v2472
    %v2474 = vmul.f32 %v2443, 1.442695
    %v2475 = vpow.pop %v2474
    %2476 = vadd.xlane.f32.xlu0 %v2445
    %v2477 = vpop.xlane.xlu0 %2476
    %2478 = vadd.xlane.f32.xlu0 %v2447
    %v2479 = vpop.xlane.xlu0 %2478
    %2480 = vadd.xlane.f32.xlu0 %v2449
    %v2481 = vpop.xlane.xlu0 %2480
    %2482 = vadd.xlane.f32.xlu0 %v2451
    %v2483 = vpop.xlane.xlu0 %2482
    %2484 = vadd.xlane.f32.xlu0 %v2453
    %v2485 = vpop.xlane.xlu0 %2484
    %2486 = vadd.xlane.f32.xlu0 %v2455
    %v2487 = vpop.xlane.xlu0 %2486
    %2488 = vadd.xlane.f32.xlu0 %v2457
    %v2489 = vpop.xlane.xlu0 %2488
    %2490 = vadd.xlane.f32.xlu0 %v2459
    %v2491 = vpop.xlane.xlu0 %2490
    %2492 = vadd.xlane.f32.xlu0 %v2461
    %v2493 = vpop.xlane.xlu0 %2492
    %2494 = vadd.xlane.f32.xlu0 %v2463
    %v2495 = vpop.xlane.xlu0 %2494
    %2496 = vadd.xlane.f32.xlu0 %v2465
    %v2497 = vpop.xlane.xlu0 %2496
    %2498 = vadd.xlane.f32.xlu0 %v2467
    %v2499 = vpop.xlane.xlu0 %2498
    %2500 = vadd.xlane.f32.xlu0 %v2469
    %v2501 = vpop.xlane.xlu0 %2500
    %2502 = vadd.xlane.f32.xlu0 %v2471
    %v2503 = vpop.xlane.xlu0 %2502
    %2504 = vadd.xlane.f32.xlu0 %v2473
    %v2505 = vpop.xlane.xlu0 %2504
    %2506 = vadd.xlane.f32.xlu0 %v2475
    %v2507 = vpop.xlane.xlu0 %2506
    %v2508 = vrcp.pop %v2477
    %v2509 = vrcp.pop %v2479
    %v2510 = vrcp.pop %v2481
    %v2511 = vrcp.pop %v2483
    %v2512 = vrcp.pop %v2485
    %v2513 = vrcp.pop %v2487
    %v2514 = vrcp.pop %v2489
    %v2515 = vrcp.pop %v2491
    %v2516 = vrcp.pop %v2493
    %v2517 = vrcp.pop %v2495
    %v2518 = vrcp.pop %v2497
    %v2519 = vrcp.pop %v2499
    %v2520 = vrcp.pop %v2501
    %v2521 = vrcp.pop %v2503
    %v2522 = vrcp.pop %v2505
    %v2523 = vrcp.pop %v2507
    %v2524 = vmul.f32 %v2445, %v2508
    %v2525 = vmul.f32 %v2447, %v2509
    %v2526 = vmul.f32 %v2449, %v2510
    %v2527 = vmul.f32 %v2451, %v2511
    %v2528 = vmul.f32 %v2453, %v2512
    %v2529 = vmul.f32 %v2455, %v2513
    %v2530 = vmul.f32 %v2457, %v2514
    %v2531 = vmul.f32 %v2459, %v2515
    %v2532 = vmul.f32 %v2461, %v2516
    %v2533 = vmul.f32 %v2463, %v2517
    %v2534 = vmul.f32 %v2465, %v2518
    %v2535 = vmul.f32 %v2467, %v2519
    %v2536 = vmul.f32 %v2469, %v2520
    %v2537 = vmul.f32 %v2471, %v2521
    %v2538 = vmul.f32 %v2473, %v2522
    %v2539 = vmul.f32 %v2475, %v2523
    %v2540 = vld [vmem:[#allocation7] sm:$0xff]
    %v2541 = vld [vmem:[#allocation7 + $0x8] sm:$0xff]
    %2542 = vmatprep.subr.mxu0 0.0
    %2543 = vmatpush1.msra.mxu0 %v2524
    %2544 = vmatprep.subr.mxu0 0.0
    %2545 = vmatpush1.msra.mxu0 %v2525
    %2546 = vmatprep.subr.mxu0 0.0
    %2547 = vmatpush1.msra.mxu0 %v2526
    %2548 = vmatprep.subr.mxu0 0.0
    %2549 = vmatpush1.msra.mxu0 %v2527
    %2550 = vmatprep.subr.mxu0 0.0
    %2551 = vmatpush1.msra.mxu0 %v2528
    %2552 = vmatprep.subr.mxu0 0.0
    %2553 = vmatpush1.msra.mxu0 %v2529
    %2554 = vmatprep.subr.mxu0 0.0
    %2555 = vmatpush1.msra.mxu0 %v2530
    %2556 = vmatprep.subr.mxu0 0.0
    %2557 = vmatpush1.msra.mxu0 %v2531
    %2558 = vmatprep.subr.mxu0 0.0
    %2559 = vmatpush1.msra.mxu0 %v2532
    %2560 = vmatprep.subr.mxu0 0.0
    %2561 = vmatpush1.msra.mxu0 %v2533
    %2562 = vmatprep.subr.mxu0 0.0
    %2563 = vmatpush1.msra.mxu0 %v2534
    %2564 = vmatprep.subr.mxu0 0.0
    %2565 = vmatpush1.msra.mxu0 %v2535
    %2566 = vmatprep.subr.mxu0 0.0
    %2567 = vmatpush1.msra.mxu0 %v2536
    %2568 = vmatprep.subr.mxu0 0.0
    %2569 = vmatpush1.msra.mxu0 %v2537
    %2570 = vmatprep.subr.mxu0 0.0
    %2571 = vmatpush1.msra.mxu0 %v2538
    %2572 = vmatprep.subr.mxu0 0.0
    %2573 = vmatpush1.msra.mxu0 %v2539
    %2574 = vmatprep.subr.mxu0 0.0
    %2575 = vmatpush1.msra.mxu0 0.0
    %2576 = vmatprep.subr.mxu0 0.0
    %2577 = vmatpush1.msra.mxu0 0.0
    %2578 = vmatprep.subr.mxu0 0.0
    %2579 = vmatpush1.msra.mxu0 0.0
    %2580 = vmatprep.subr.mxu0 0.0
    %2581 = vmatpush1.msra.mxu0 0.0
    %2582 = vmatprep.subr.mxu0 0.0
    %2583 = vmatpush1.msra.mxu0 0.0
    %2584 = vmatprep.subr.mxu0 0.0
    %2585 = vmatpush1.msra.mxu0 0.0
    %2586 = vmatprep.subr.mxu0 0.0
    %2587 = vmatpush1.msra.mxu0 0.0
    %2588 = vmatprep.subr.mxu0 0.0
    %2589 = vmatpush1.msra.mxu0 0.0
    %2590 = vmatprep.subr.mxu0 0.0
    %2591 = vmatpush1.msra.mxu0 0.0
    %2592 = vmatprep.subr.mxu0 0.0
    %2593 = vmatpush1.msra.mxu0 0.0
    %2594 = vmatprep.subr.mxu0 0.0
    %2595 = vmatpush1.msra.mxu0 0.0
    %2596 = vmatprep.subr.mxu0 0.0
    %2597 = vmatpush1.msra.mxu0 0.0
    %2598 = vmatprep.subr.mxu0 0.0
    %2599 = vmatpush1.msra.mxu0 0.0
    %2600 = vmatprep.subr.mxu0 0.0
    %2601 = vmatpush1.msra.mxu0 0.0
    %2602 = vmatprep.subr.mxu0 0.0
    %2603 = vmatpush1.msra.mxu0 0.0
    %2604 = vmatprep.subr.mxu0 0.0
    %2605 = vmatpush1.msra.mxu0 0.0
    %2606 = vmatprep.mubr.f32.mxu0 0.0
    %2607 = vmatmul.mubr.f32.gmra.mrb[0].mxu0 %v2540
    %v2608 = vpop.f32.mrb[0].mxu0
    %v2609 = vadd.f32 0.0, %v2608
    %v2610 = vpop.f32.mrb[0].mxu0
    %2611 = vmatprep.mubr.f32.mxu0 0.0
    %2612 = vmatmul.mubr.f32.gmra.mrb[0].mxu0 %v2541
    %v2613 = vpop.f32.mrb[0].mxu0
    %v2614 = vadd.f32 0.0, %v2613
    %v2615 = vpop.f32.mrb[0].mxu0
    %2616 = vdwg.mxu0
    %v2617 = vld [vmem:[#allocation8 + $0x400] sm:$0xf]
    %v2618 = vld [vmem:[#allocation8 + $0x408] sm:$0xf]
    %v2619 = vld [vmem:[#allocation8 + $0x410] sm:$0xf]
    %v2620 = vld [vmem:[#allocation8 + $0x418] sm:$0xf]
    %v2621 = vld [vmem:[#allocation8 + $0x420] sm:$0xf]
    %v2622 = vld [vmem:[#allocation8 + $0x428] sm:$0xf]
    %v2623 = vld [vmem:[#allocation8 + $0x430] sm:$0xf]
    %v2624 = vld [vmem:[#allocation8 + $0x438] sm:$0xf]
    %v2625 = vld [vmem:[#allocation8 + $0x440] sm:$0xf]
    %v2626 = vld [vmem:[#allocation8 + $0x448] sm:$0xf]
    %v2627 = vld [vmem:[#allocation8 + $0x450] sm:$0xf]
    %v2628 = vld [vmem:[#allocation8 + $0x458] sm:$0xf]
    %v2629 = vld [vmem:[#allocation8 + $0x460] sm:$0xf]
    %v2630 = vld [vmem:[#allocation8 + $0x468] sm:$0xf]
    %v2631 = vld [vmem:[#allocation8 + $0x470] sm:$0xf]
    %v2632 = vld [vmem:[#allocation8 + $0x478] sm:$0xf]
    %v2633 = vld [vmem:[#allocation10 + $0x40] ss:$0 sm:$0xff]
    %v2634 = vld [vmem:[#allocation10 + $0x41] ss:$0 sm:$0xff]
    %v2635 = vld [vmem:[#allocation10 + $0x42] ss:$0 sm:$0xff]
    %v2636 = vpack.c.bf16 %v2614, %v2609
    %v2653 = vunpack.c.l.b16 %v2617
    %v2654 = vunpack.c.l.b16 %v2618
    %v2655 = vunpack.c.l.b16 %v2619
    %v2656 = vunpack.c.l.b16 %v2620
    %v2657 = vunpack.c.l.b16 %v2621
    %v2658 = vunpack.c.l.b16 %v2622
    %v2659 = vunpack.c.l.b16 %v2623
    %v2660 = vunpack.c.l.b16 %v2624
    %v2661 = vunpack.c.l.b16 %v2625
    %v2662 = vunpack.c.l.b16 %v2626
    %v2663 = vunpack.c.l.b16 %v2627
    %v2664 = vunpack.c.l.b16 %v2628
    %v2665 = vunpack.c.l.b16 %v2629
    %v2666 = vunpack.c.l.b16 %v2630
    %v2667 = vunpack.c.l.b16 %v2631
    %v2668 = vunpack.c.l.b16 %v2632
    %v2669 = vpack.c.b16 %v2654, %v2653
    %v2670 = vpack.c.b16 %v2656, %v2655
    %v2671 = vpack.c.b16 %v2658, %v2657
    %v2672 = vpack.c.b16 %v2660, %v2659
    %v2673 = vpack.c.b16 %v2662, %v2661
    %v2674 = vpack.c.b16 %v2664, %v2663
    %v2675 = vpack.c.b16 %v2666, %v2665
    %v2676 = vpack.c.b16 %v2668, %v2667
    %2685 = vmatprep.subr.bf16.mxu0 0
    %2686 = vmatpush1.bf16.msra.mxu0 %v2669
    %2687 = vmatprep.subr.bf16.mxu0 0
    %2688 = vmatpush1.bf16.msra.mxu0 %v2670
    %2689 = vmatprep.subr.bf16.mxu0 0
    %2690 = vmatpush1.bf16.msra.mxu0 %v2671
    %2691 = vmatprep.subr.bf16.mxu0 0
    %2692 = vmatpush1.bf16.msra.mxu0 %v2672
    %2693 = vmatprep.subr.bf16.mxu0 0
    %2694 = vmatpush1.bf16.msra.mxu0 %v2673
    %2695 = vmatprep.subr.bf16.mxu0 0
    %2696 = vmatpush1.bf16.msra.mxu0 %v2674
    %2697 = vmatprep.subr.bf16.mxu0 0
    %2698 = vmatpush1.bf16.msra.mxu0 %v2675
    %2699 = vmatprep.subr.bf16.mxu0 0
    %2700 = vmatpush1.bf16.msra.mxu0 %v2676
    %2701 = vmatprep.subr.bf16.mxu0 0
    %2702 = vmatpush1.bf16.msra.mxu0 0
    %2703 = vmatprep.subr.bf16.mxu0 0
    %2704 = vmatpush1.bf16.msra.mxu0 0
    %2705 = vmatprep.subr.bf16.mxu0 0
    %2706 = vmatpush1.bf16.msra.mxu0 0
    %2707 = vmatprep.subr.bf16.mxu0 0
    %2708 = vmatpush1.bf16.msra.mxu0 0
    %2709 = vmatprep.subr.bf16.mxu0 0
    %2710 = vmatpush1.bf16.msra.mxu0 0
    %2711 = vmatprep.subr.bf16.mxu0 0
    %2712 = vmatpush1.bf16.msra.mxu0 0
    %2713 = vmatprep.subr.bf16.mxu0 0
    %2714 = vmatpush1.bf16.msra.mxu0 0
    %2715 = vmatprep.subr.bf16.mxu0 0
    %2716 = vmatpush1.bf16.msra.mxu0 0
    %2717 = vmatprep.mubr.bf16.mxu0 0
    %2718 = vmatmul.mubr.bf16.gmra.mrb[0].mxu0 %v2636
    %v2719 = vpop.f32.mrb[0].mxu0
    %v2720 = vadd.f32 %v2633, %v2719
    %v2721 = vpop.f32.mrb[0].mxu0
    %v2722 = vpop.f32.mrb[0].mxu0
    %v2723 = vadd.f32 %v2633, %v2722
    %v2724 = vpop.f32.mrb[0].mxu0
    %2725 = vdwg.mxu0
    %v2726 = vmax.f32 %v2720, 0.0
    %v2727 = vmax.f32 %v2723, 0.0
    %v2728 = vmul.f32 %v2726, %v2634
    %v2729 = vmul.f32 %v2727, %v2634
    %v2730 = vadd.f32 %v2728, %v2635
    %v2731 = vadd.f32 %v2729, %v2635
    %v2732 = vld [vmem:[#allocation8 + $0x480] sm:$0xf]
    %v2733 = vld [vmem:[#allocation8 + $0x488] sm:$0xf]
    %v2734 = vld [vmem:[#allocation8 + $0x490] sm:$0xf]
    %v2735 = vld [vmem:[#allocation8 + $0x498] sm:$0xf]
    %v2736 = vld [vmem:[#allocation8 + $0x4a0] sm:$0xf]
    %v2737 = vld [vmem:[#allocation8 + $0x4a8] sm:$0xf]
    %v2738 = vld [vmem:[#allocation8 + $0x4b0] sm:$0xf]
    %v2739 = vld [vmem:[#allocation8 + $0x4b8] sm:$0xf]
    %v2740 = vld [vmem:[#allocation8 + $0x4c0] sm:$0xf]
    %v2741 = vld [vmem:[#allocation8 + $0x4c8] sm:$0xf]
    %v2742 = vld [vmem:[#allocation8 + $0x4d0] sm:$0xf]
    %v2743 = vld [vmem:[#allocation8 + $0x4d8] sm:$0xf]
    %v2744 = vld [vmem:[#allocation8 + $0x4e0] sm:$0xf]
    %v2745 = vld [vmem:[#allocation8 + $0x4e8] sm:$0xf]
    %v2746 = vld [vmem:[#allocation8 + $0x4f0] sm:$0xf]
    %v2747 = vld [vmem:[#allocation8 + $0x4f8] sm:$0xf]
    %v2748 = vld [vmem:[#allocation10 + $0x48] ss:$0 sm:$0xff]
    %v2749 = vld [vmem:[#allocation10 + $0x49] ss:$0 sm:$0xff]
    %v2750 = vld [vmem:[#allocation10 + $0x4a] ss:$0 sm:$0xff]
    %v2751 = vpack.c.bf16 %v2731, %v2730
    %v2768 = vunpack.c.l.b16 %v2732
    %v2769 = vunpack.c.l.b16 %v2733
    %v2770 = vunpack.c.l.b16 %v2734
    %v2771 = vunpack.c.l.b16 %v2735
    %v2772 = vunpack.c.l.b16 %v2736
    %v2773 = vunpack.c.l.b16 %v2737
    %v2774 = vunpack.c.l.b16 %v2738
    %v2775 = vunpack.c.l.b16 %v2739
    %v2776 = vunpack.c.l.b16 %v2740
    %v2777 = vunpack.c.l.b16 %v2741
    %v2778 = vunpack.c.l.b16 %v2742
    %v2779 = vunpack.c.l.b16 %v2743
    %v2780 = vunpack.c.l.b16 %v2744
    %v2781 = vunpack.c.l.b16 %v2745
    %v2782 = vunpack.c.l.b16 %v2746
    %v2783 = vunpack.c.l.b16 %v2747
    %v2784 = vpack.c.b16 %v2769, %v2768
    %v2785 = vpack.c.b16 %v2771, %v2770
    %v2786 = vpack.c.b16 %v2773, %v2772
    %v2787 = vpack.c.b16 %v2775, %v2774
    %v2788 = vpack.c.b16 %v2777, %v2776
    %v2789 = vpack.c.b16 %v2779, %v2778
    %v2790 = vpack.c.b16 %v2781, %v2780
    %v2791 = vpack.c.b16 %v2783, %v2782
    %2800 = vmatprep.subr.bf16.mxu0 0
    %2801 = vmatpush1.bf16.msra.mxu0 %v2784
    %2802 = vmatprep.subr.bf16.mxu0 0
    %2803 = vmatpush1.bf16.msra.mxu0 %v2785
    %2804 = vmatprep.subr.bf16.mxu0 0
    %2805 = vmatpush1.bf16.msra.mxu0 %v2786
    %2806 = vmatprep.subr.bf16.mxu0 0
    %2807 = vmatpush1.bf16.msra.mxu0 %v2787
    %2808 = vmatprep.subr.bf16.mxu0 0
    %2809 = vmatpush1.bf16.msra.mxu0 %v2788
    %2810 = vmatprep.subr.bf16.mxu0 0
    %2811 = vmatpush1.bf16.msra.mxu0 %v2789
    %2812 = vmatprep.subr.bf16.mxu0 0
    %2813 = vmatpush1.bf16.msra.mxu0 %v2790
    %2814 = vmatprep.subr.bf16.mxu0 0
    %2815 = vmatpush1.bf16.msra.mxu0 %v2791
    %2816 = vmatprep.subr.bf16.mxu0 0
    %2817 = vmatpush1.bf16.msra.mxu0 0
    %2818 = vmatprep.subr.bf16.mxu0 0
    %2819 = vmatpush1.bf16.msra.mxu0 0
    %2820 = vmatprep.subr.bf16.mxu0 0
    %2821 = vmatpush1.bf16.msra.mxu0 0
    %2822 = vmatprep.subr.bf16.mxu0 0
    %2823 = vmatpush1.bf16.msra.mxu0 0
    %2824 = vmatprep.subr.bf16.mxu0 0
    %2825 = vmatpush1.bf16.msra.mxu0 0
    %2826 = vmatprep.subr.bf16.mxu0 0
    %2827 = vmatpush1.bf16.msra.mxu0 0
    %2828 = vmatprep.subr.bf16.mxu0 0
    %2829 = vmatpush1.bf16.msra.mxu0 0
    %2830 = vmatprep.subr.bf16.mxu0 0
    %2831 = vmatpush1.bf16.msra.mxu0 0
    %2832 = vmatprep.mubr.bf16.mxu0 0
    %2833 = vmatmul.mubr.bf16.gmra.mrb[0].mxu0 %v2751
    %v2834 = vpop.f32.mrb[0].mxu0
    %v2835 = vadd.f32 %v2748, %v2834
    %v2836 = vpop.f32.mrb[0].mxu0
    %v2837 = vpop.f32.mrb[0].mxu0
    %v2838 = vadd.f32 %v2748, %v2837
    %v2839 = vpop.f32.mrb[0].mxu0
    %2840 = vdwg.mxu0
    %v2841 = vmax.f32 %v2835, 0.0
    %v2842 = vmax.f32 %v2838, 0.0
    %v2843 = vmul.f32 %v2841, %v2749
    %v2844 = vmul.f32 %v2842, %v2749
    %v2845 = vadd.f32 %v2843, %v2750
    %v2846 = vadd.f32 %v2844, %v2750
    %v2847 = vld [vmem:[#allocation8 + $0x500] sm:$0xf]
    %v2848 = vld [vmem:[#allocation8 + $0x508] sm:$0xf]
    %v2849 = vld [vmem:[#allocation8 + $0x510] sm:$0xf]
    %v2850 = vld [vmem:[#allocation8 + $0x518] sm:$0xf]
    %v2851 = vld [vmem:[#allocation8 + $0x520] sm:$0xf]
    %v2852 = vld [vmem:[#allocation8 + $0x528] sm:$0xf]
    %v2853 = vld [vmem:[#allocation8 + $0x530] sm:$0xf]
    %v2854 = vld [vmem:[#allocation8 + $0x538] sm:$0xf]
    %v2855 = vld [vmem:[#allocation8 + $0x540] sm:$0xf]
    %v2856 = vld [vmem:[#allocation8 + $0x548] sm:$0xf]
    %v2857 = vld [vmem:[#allocation8 + $0x550] sm:$0xf]
    %v2858 = vld [vmem:[#allocation8 + $0x558] sm:$0xf]
    %v2859 = vld [vmem:[#allocation8 + $0x560] sm:$0xf]
    %v2860 = vld [vmem:[#allocation8 + $0x568] sm:$0xf]
    %v2861 = vld [vmem:[#allocation8 + $0x570] sm:$0xf]
    %v2862 = vld [vmem:[#allocation8 + $0x578] sm:$0xf]
    %v2863 = vld [vmem:[#allocation10 + $0x50] ss:$0 sm:$0xff]
    %v2864 = vpack.c.bf16 %v2846, %v2845
    %v2881 = vunpack.c.l.b16 %v2847
    %v2882 = vunpack.c.l.b16 %v2848
    %v2883 = vunpack.c.l.b16 %v2849
    %v2884 = vunpack.c.l.b16 %v2850
    %v2885 = vunpack.c.l.b16 %v2851
    %v2886 = vunpack.c.l.b16 %v2852
    %v2887 = vunpack.c.l.b16 %v2853
    %v2888 = vunpack.c.l.b16 %v2854
    %v2889 = vunpack.c.l.b16 %v2855
    %v2890 = vunpack.c.l.b16 %v2856
    %v2891 = vunpack.c.l.b16 %v2857
    %v2892 = vunpack.c.l.b16 %v2858
    %v2893 = vunpack.c.l.b16 %v2859
    %v2894 = vunpack.c.l.b16 %v2860
    %v2895 = vunpack.c.l.b16 %v2861
    %v2896 = vunpack.c.l.b16 %v2862
    %v2897 = vpack.c.b16 %v2882, %v2881
    %v2898 = vpack.c.b16 %v2884, %v2883
    %v2899 = vpack.c.b16 %v2886, %v2885
    %v2900 = vpack.c.b16 %v2888, %v2887
    %v2901 = vpack.c.b16 %v2890, %v2889
    %v2902 = vpack.c.b16 %v2892, %v2891
    %v2903 = vpack.c.b16 %v2894, %v2893
    %v2904 = vpack.c.b16 %v2896, %v2895
    %2913 = vmatprep.subr.bf16.mxu0 0
    %2914 = vmatpush1.bf16.msra.mxu0 %v2897
    %2915 = vmatprep.subr.bf16.mxu0 0
    %2916 = vmatpush1.bf16.msra.mxu0 %v2898
    %2917 = vmatprep.subr.bf16.mxu0 0
    %2918 = vmatpush1.bf16.msra.mxu0 %v2899
    %2919 = vmatprep.subr.bf16.mxu0 0
    %2920 = vmatpush1.bf16.msra.mxu0 %v2900
    %2921 = vmatprep.subr.bf16.mxu0 0
    %2922 = vmatpush1.bf16.msra.mxu0 %v2901
    %2923 = vmatprep.subr.bf16.mxu0 0
    %2924 = vmatpush1.bf16.msra.mxu0 %v2902
    %2925 = vmatprep.subr.bf16.mxu0 0
    %2926 = vmatpush1.bf16.msra.mxu0 %v2903
    %2927 = vmatprep.subr.bf16.mxu0 0
    %2928 = vmatpush1.bf16.msra.mxu0 %v2904
    %2929 = vmatprep.subr.bf16.mxu0 0
    %2930 = vmatpush1.bf16.msra.mxu0 0
    %2931 = vmatprep.subr.bf16.mxu0 0
    %2932 = vmatpush1.bf16.msra.mxu0 0
    %2933 = vmatprep.subr.bf16.mxu0 0
    %2934 = vmatpush1.bf16.msra.mxu0 0
    %2935 = vmatprep.subr.bf16.mxu0 0
    %2936 = vmatpush1.bf16.msra.mxu0 0
    %2937 = vmatprep.subr.bf16.mxu0 0
    %2938 = vmatpush1.bf16.msra.mxu0 0
    %2939 = vmatprep.subr.bf16.mxu0 0
    %2940 = vmatpush1.bf16.msra.mxu0 0
    %2941 = vmatprep.subr.bf16.mxu0 0
    %2942 = vmatpush1.bf16.msra.mxu0 0
    %2943 = vmatprep.subr.bf16.mxu0 0
    %2944 = vmatpush1.bf16.msra.mxu0 0
    %2945 = vmatprep.mubr.bf16.mxu0 0
    %2946 = vmatmul.mubr.bf16.gmra.mrb[0].mxu0 %v2864
    %v2947 = vpop.f32.mrb[0].mxu0
    %v2948 = vadd.f32 %v2863, %v2947
    %v2949 = vpop.f32.mrb[0].mxu0
    %v2950 = vpop.f32.mrb[0].mxu0
    %v2951 = vadd.f32 %v2863, %v2950
    %v2952 = vpop.f32.mrb[0].mxu0
    %2953 = vdwg.mxu0
    %2954 = vst [vmem:[#allocation11] sm:$0xff] %v2948
    %2955 = vst [vmem:[#allocation11 + $0x8] sm:$0xff] %v2951
    // Predicated region
    $region42: #{molan_gcn_forward.1} parent=1 // pred_check
      _
    $region43: #{molan_gcn_forward.1} parent=1 // pred_check_branch
      %2957 = sbr.rel (0) target = $region45
    $region44: #{molan_gcn_forward.1} parent=1 // pred_region
      %s2959 = ssub.s32 256, 256
      %2960 = vsyncadd [#allocation4], %s2959
      %s2961 = sshll.u32 [#allocation11], 4
      %s2962 = int_to_ptr.vmem [resolvable:$true] %s2961
      %2967 = dma.vmem_to_hbm [thread:$0]  %s2962, 256, %s5, [#allocation4], 128, 128, 8
    $region45: #{molan_gcn_forward.1} parent=1 // pred_fallthru
      _
    // Predicated region
    $region46: #{molan_gcn_forward.1} parent=1 // pred_check
      _
    $region47: #{molan_gcn_forward.1} parent=1 // pred_check_branch
      %2969 = sbr.rel (0) target = $region49
    $region48: #{molan_gcn_forward.1} parent=1 // pred_region
      %2970 = dma.done [#allocation4], 256
    $region49: #{molan_gcn_forward.1} parent=1 // pred_fallthru
      _
    %2971 = vsyncpa [#allocation3], 1
    %2972 = vsyncpa [#allocation6], 1
    %2973 = vsyncpa [#allocation9], 1
    %2974 = vsyncpa [#allocation4], 1

</llo_original>
